<compile_context>
chip_gen: v5e
topology: v5e:2x2
jax: 0.10.0
libtpu: 0.0.40
codegen_flags: <defaults>
</compile_context>

<pallas_src>
import functools

import jax
import jax.numpy as jnp
from jax.experimental import pallas as pl
from jax.experimental.pallas import tpu as pltpu


# ----------------------------------------------------------------------------
# Fused forward kernel (single invocation, everything resident in VMEM).
# ----------------------------------------------------------------------------
def soweli_kernel(tok_ref, emb_enc_ref, emb_dec_ref,
                  wi_f_ref, wh_f_ref, bi_f_ref, bhn_f_ref,
                  wi_b_ref, wh_b_ref, bi_b_ref, bhn_b_ref,
                  wp_f_ref, wp_b_ref, bp_ref,
                  wi_d_ref, wh_d_ref, bi_d_ref, bhn_d_ref,
                  wo_ref, bo_ref,
                  logits_ref,
                  xgf_ref, xgb_ref, xgd_ref, dech_ref,
                  *, seq_len, batch):
    S, B = seq_len, batch
    SB = S * B
    V = emb_enc_ref.shape[0]
    H = wh_f_ref.shape[0]
    f32 = jnp.float32

    # ---- embedding lookups as one-hot matmuls (no gather) -------------------
    tok = tok_ref[...]                                            # (SB, 1) int32
    iota = jax.lax.broadcasted_iota(jnp.int32, (SB, V), 1)
    onehot = jnp.where(tok == iota, f32(1.0), f32(0.0))           # (SB, V)
    enc_emb = jnp.dot(onehot, emb_enc_ref[...], preferred_element_type=f32)  # (SB, E)
    dec_emb = jnp.dot(onehot, emb_dec_ref[...], preferred_element_type=f32)  # (SB, E)

    # ---- hoisted, gate-packed input projections (off the serial chain) ------
    # layout of the 3H axis: [r | z | n]; r/z columns already include b_hr/b_hz.
    xgf_ref[...] = jnp.dot(enc_emb, wi_f_ref[...], preferred_element_type=f32) + bi_f_ref[...]
    xgb_ref[...] = jnp.dot(enc_emb, wi_b_ref[...], preferred_element_type=f32) + bi_b_ref[...]
    xgd_ref[...] = jnp.dot(dec_emb, wi_d_ref[...], preferred_element_type=f32) + bi_d_ref[...]

    def gru_cell(xg, h, wh_ref, bhn_ref):
        hg = jnp.dot(h, wh_ref[...], preferred_element_type=f32)   # (B, 3H)
        r = jax.nn.sigmoid(xg[:, 0:H] + hg[:, 0:H])
        z = jax.nn.sigmoid(xg[:, H:2 * H] + hg[:, H:2 * H])
        n = jnp.tanh(xg[:, 2 * H:] + r * (hg[:, 2 * H:] + bhn_ref[...]))
        return (1.0 - z) * n + z * h

    h0 = jnp.zeros((B, H), f32)

    # ---- bidirectional encoder: fwd & bwd interleaved, fully unrolled -------
    hf = h0
    hb = h0
    for t in range(S):                      # static trip count -> static slices
        xf = xgf_ref[pl.ds(t * B, B), :]
        xb = xgb_ref[pl.ds((S - 1 - t) * B, B), :]
        hf = gru_cell(xf, hf, wh_f_ref, bhn_f_ref)
        hb = gru_cell(xb, hb, wh_b_ref, bhn_b_ref)

    # ---- proj: concat([hf, hb], -1) @ Wp == hf @ Wp[:H] + hb @ Wp[H:] -------
    h_enc = (jnp.dot(hf, wp_f_ref[...], preferred_element_type=f32)
             + jnp.dot(hb, wp_b_ref[...], preferred_element_type=f32)
             + bp_ref[...])                                        # (B, H)

    # TODO(synk): decoder dropout(p=0.1) is identity in eval mode; not applied.

    # ---- decoder GRU (hiddens accumulated in VMEM scratch) -------------------
    hd = h_enc
    for t in range(S):
        xd = xgd_ref[pl.ds(t * B, B), :]
        hd = gru_cell(xd, hd, wh_d_ref, bhn_d_ref)
        dech_ref[pl.ds(t * B, B), :] = hd

    # ---- vocab head: one matmul over all timesteps, single writeback --------
    logits_ref[...] = (jnp.dot(dech_ref[...], wo_ref[...], preferred_element_type=f32)
                       + bo_ref[...])                              # (SB, V)


# ----------------------------------------------------------------------------
# Parameter handling
# ----------------------------------------------------------------------------
def init_params(key, vocab, embed, hidden):
    """PyTorch-convention parameters (as nn.GRU / nn.Linear store them)."""
    def u(k, shape):
        return jax.random.uniform(k, shape, jnp.float32, -0.1, 0.1)

    ks = jax.random.split(key, 18)
    H3 = 3 * hidden
    return dict(
        # encoder (bidirectional GRU, 1 layer)
        emb_enc=u(ks[0], (vocab, embed)),
        enc_f_w_ih=u(ks[1], (H3, embed)), enc_f_w_hh=u(ks[2], (H3, hidden)),
        enc_f_b_ih=u(ks[3], (H3,)), enc_f_b_hh=u(ks[4], (H3,)),
        enc_b_w_ih=u(ks[5], (H3, embed)), enc_b_w_hh=u(ks[6], (H3, hidden)),
        enc_b_b_ih=u(ks[7], (H3,)), enc_b_b_hh=u(ks[8], (H3,)),
        # proj: Linear(hidden * num_layers * 2 -> hidden)
        proj_w=u(ks[9], (hidden, 2 * hidden)), proj_b=u(ks[10], (hidden,)),
        # decoder
        emb_dec=u(ks[11], (vocab, embed)),
        dec_w_ih=u(ks[12], (H3, embed)), dec_w_hh=u(ks[13], (H3, hidden)),
        dec_b_ih=u(ks[14], (H3,)), dec_b_hh=u(ks[15], (H3,)),
        out_w=u(ks[16], (vocab, hidden)), out_b=u(ks[17], (vocab,)),
    )


def prepare_params(p):
    """One-time conversion of PyTorch-format params into matmul-ready packed form."""
    H = p["proj_b"].shape[0]

    def pack_gru(w_ih, w_hh, b_ih, b_hh):
        wi = w_ih.T                                   # (in, 3H), columns [r|z|n]
        wh = w_hh.T                                   # (H, 3H)
        b_r = b_ih[0:H] + b_hh[0:H]                   # fold hidden bias for r, z
        b_z = b_ih[H:2 * H] + b_hh[H:2 * H]
        b_n = b_ih[2 * H:3 * H]                       # b_in stays on the x path
        bi = jnp.concatenate([b_r, b_z, b_n]).reshape(1, 3 * H)
        bhn = b_hh[2 * H:3 * H].reshape(1, H)         # b_hn stays inside r*(...)
        return wi, wh, bi, bhn

    wi_f, wh_f, bi_f, bhn_f = pack_gru(p["enc_f_w_ih"], p["enc_f_w_hh"],
                                       p["enc_f_b_ih"], p["enc_f_b_hh"])
    wi_b, wh_b, bi_b, bhn_b = pack_gru(p["enc_b_w_ih"], p["enc_b_w_hh"],
                                       p["enc_b_b_ih"], p["enc_b_b_hh"])
    wi_d, wh_d, bi_d, bhn_d = pack_gru(p["dec_w_ih"], p["dec_w_hh"],
                                       p["dec_b_ih"], p["dec_b_hh"])
    wp = p["proj_w"].T                                # (2H, H)
    return dict(
        emb_enc=p["emb_enc"], emb_dec=p["emb_dec"],
        wi_f=wi_f, wh_f=wh_f, bi_f=bi_f, bhn_f=bhn_f,
        wi_b=wi_b, wh_b=wh_b, bi_b=bi_b, bhn_b=bhn_b,
        wp_f=wp[:H], wp_b=wp[H:], bp=p["proj_b"].reshape(1, H),
        wi_d=wi_d, wh_d=wh_d, bi_d=bi_d, bhn_d=bhn_d,
        wo=p["out_w"].T, bo=p["out_b"].reshape(1, -1),
    )


# ----------------------------------------------------------------------------
# Forward
# ----------------------------------------------------------------------------
@jax.jit
def soweli_forward(pp, tokens):
    """tokens: (S, B) int32. Returns decoder logits (S, B, vocab)."""
    S, B = tokens.shape
    SB = S * B
    V, _ = pp["emb_enc"].shape
    H = pp["bhn_d"].shape[-1]
    H3 = 3 * H

    tok2d = tokens.reshape(SB, 1).astype(jnp.int32)   # row t*B+b <-> (time t, batch b)

    kernel = functools.partial(soweli_kernel, seq_len=S, batch=B)
    vmem = pl.BlockSpec(memory_space=pltpu.MemorySpace.VMEM)

    args = (tok2d,
            pp["emb_enc"], pp["emb_dec"],
            pp["wi_f"], pp["wh_f"], pp["bi_f"], pp["bhn_f"],
            pp["wi_b"], pp["wh_b"], pp["bi_b"], pp["bhn_b"],
            pp["wp_f"], pp["wp_b"], pp["bp"],
            pp["wi_d"], pp["wh_d"], pp["bi_d"], pp["bhn_d"],
            pp["wo"], pp["bo"])

    logits2d = pl.pallas_call(
        kernel,
        out_shape=jax.ShapeDtypeStruct((SB, V), jnp.float32),
        in_specs=[vmem] * len(args),
        out_specs=vmem,
        scratch_shapes=[
            pltpu.VMEM((SB, H3), jnp.float32),   # encoder-fwd hoisted input gates
            pltpu.VMEM((SB, H3), jnp.float32),   # encoder-bwd hoisted input gates
            pltpu.VMEM((SB, H3), jnp.float32),   # decoder hoisted input gates
            pltpu.VMEM((SB, H), jnp.float32),    # decoder hidden states (all steps)
        ],
    )(*args)

    return logits2d.reshape(S, B, V)


if __name__ == "__main__":
    vocab_size, embed_size, hidden_size = 16, 32, 32
    seq_len, batch = 8, 2

    key = jax.random.PRNGKey(0)
    pkey, tkey = jax.random.split(key)

    params = init_params(pkey, vocab_size, embed_size, hidden_size)
    prepped = prepare_params(params)          # one-time weight packing (not per call)
    tokens = jax.random.randint(tkey, (seq_len, batch), 0, vocab_size, dtype=jnp.int32)

    out = soweli_forward(prepped, tokens)
    jax.block_until_ready(out)

    assert out.shape == (seq_len, batch, vocab_size), out.shape
    assert bool(jnp.all(jnp.isfinite(out)))
    print("KERNEL_OK")
</pallas_src>

<mosaic_0001>
module attributes {stable_mosaic.version = 11 : i64} {
  func.func @soweli_kernel(%arg0: memref<16x1xi32, #tpu.memory_space<vmem>>, %arg1: memref<16x32xf32, #tpu.memory_space<vmem>>, %arg2: memref<16x32xf32, #tpu.memory_space<vmem>>, %arg3: memref<32x96xf32, #tpu.memory_space<vmem>>, %arg4: memref<32x96xf32, #tpu.memory_space<vmem>>, %arg5: memref<1x96xf32, #tpu.memory_space<vmem>>, %arg6: memref<1x32xf32, #tpu.memory_space<vmem>>, %arg7: memref<32x96xf32, #tpu.memory_space<vmem>>, %arg8: memref<32x96xf32, #tpu.memory_space<vmem>>, %arg9: memref<1x96xf32, #tpu.memory_space<vmem>>, %arg10: memref<1x32xf32, #tpu.memory_space<vmem>>, %arg11: memref<32x32xf32, #tpu.memory_space<vmem>>, %arg12: memref<32x32xf32, #tpu.memory_space<vmem>>, %arg13: memref<1x32xf32, #tpu.memory_space<vmem>>, %arg14: memref<32x96xf32, #tpu.memory_space<vmem>>, %arg15: memref<32x96xf32, #tpu.memory_space<vmem>>, %arg16: memref<1x96xf32, #tpu.memory_space<vmem>>, %arg17: memref<1x32xf32, #tpu.memory_space<vmem>>, %arg18: memref<32x16xf32, #tpu.memory_space<vmem>>, %arg19: memref<1x16xf32, #tpu.memory_space<vmem>>, %arg20: memref<16x16xf32, #tpu.memory_space<vmem>>, %arg21: memref<16x96xf32, #tpu.memory_space<vmem>>, %arg22: memref<16x96xf32, #tpu.memory_space<vmem>>, %arg23: memref<16x96xf32, #tpu.memory_space<vmem>>, %arg24: memref<16x32xf32, #tpu.memory_space<vmem>>) attributes {dimension_semantics = [], scalar_prefetch = 0 : i64, scratch_operands = 4 : i64, tpu.core_type = #tpu.core_type<tc>} {
    %c0 = arith.constant 0 : index
    %c0_0 = arith.constant 0 : index
    %0 = vector.load %arg0[%c0, %c0_0] : memref<16x1xi32, #tpu.memory_space<vmem>>, vector<16x1xi32>
    %1 = tpu.iota {dimensions = array<i32: 1>} : vector<16x16xi32>
    %2 = vector.broadcast %0 : vector<16x1xi32> to vector<16x16xi32>
    %3 = arith.cmpi eq, %2, %1 : vector<16x16xi32>
    %cst = arith.constant 1.000000e+00 : f32
    %cst_1 = arith.constant 0.000000e+00 : f32
    %4 = vector.broadcast %cst : f32 to vector<16x16xf32>
    %5 = vector.broadcast %cst_1 : f32 to vector<16x16xf32>
    %6 = arith.select %3, %4, %5 : vector<16x16xi1>, vector<16x16xf32>
    %c0_2 = arith.constant 0 : index
    %c0_3 = arith.constant 0 : index
    %7 = vector.load %arg1[%c0_2, %c0_3] : memref<16x32xf32, #tpu.memory_space<vmem>>, vector<16x32xf32>
    %cst_4 = arith.constant dense<0.000000e+00> : vector<16x32xf32>
    %8 = tpu.matmul %6, %7, %cst_4 {dimension_numbers = #tpu.dot_dimension_numbers<[1], [0], [0], [1], [0, 0, 1, 1], [], []>} : vector<16x16xf32>, vector<16x32xf32>, vector<16x32xf32> -> vector<16x32xf32>
    %c0_5 = arith.constant 0 : index
    %c0_6 = arith.constant 0 : index
    %9 = vector.load %arg2[%c0_5, %c0_6] : memref<16x32xf32, #tpu.memory_space<vmem>>, vector<16x32xf32>
    %cst_7 = arith.constant dense<0.000000e+00> : vector<16x32xf32>
    %10 = tpu.matmul %6, %9, %cst_7 {dimension_numbers = #tpu.dot_dimension_numbers<[1], [0], [0], [1], [0, 0, 1, 1], [], []>} : vector<16x16xf32>, vector<16x32xf32>, vector<16x32xf32> -> vector<16x32xf32>
    %c0_8 = arith.constant 0 : index
    %c0_9 = arith.constant 0 : index
    %11 = vector.load %arg3[%c0_8, %c0_9] : memref<32x96xf32, #tpu.memory_space<vmem>>, vector<32x96xf32>
    %cst_10 = arith.constant dense<0.000000e+00> : vector<16x96xf32>
    %12 = tpu.matmul %8, %11, %cst_10 {dimension_numbers = #tpu.dot_dimension_numbers<[1], [0], [0], [1], [0, 0, 1, 1], [], []>} : vector<16x32xf32>, vector<32x96xf32>, vector<16x96xf32> -> vector<16x96xf32>
    %c0_11 = arith.constant 0 : index
    %c0_12 = arith.constant 0 : index
    %13 = vector.load %arg5[%c0_11, %c0_12] : memref<1x96xf32, #tpu.memory_space<vmem>>, vector<1x96xf32>
    %14 = vector.broadcast %13 : vector<1x96xf32> to vector<16x96xf32>
    %15 = arith.addf %12, %14 : vector<16x96xf32>
    %c0_13 = arith.constant 0 : index
    %c0_14 = arith.constant 0 : index
    %16 = vector.load %arg21[%c0_13, %c0_14] : memref<16x96xf32, #tpu.memory_space<vmem>>, vector<16x96xf32>
    tpu.vector_store %arg21[%c0_13, %c0_14], %15 {strides = array<i32>} : memref<16x96xf32, #tpu.memory_space<vmem>>, vector<16x96xf32>,
    %c0_15 = arith.constant 0 : index
    %c0_16 = arith.constant 0 : index
    %17 = vector.load %arg7[%c0_15, %c0_16] : memref<32x96xf32, #tpu.memory_space<vmem>>, vector<32x96xf32>
    %cst_17 = arith.constant dense<0.000000e+00> : vector<16x96xf32>
    %18 = tpu.matmul %8, %17, %cst_17 {dimension_numbers = #tpu.dot_dimension_numbers<[1], [0], [0], [1], [0, 0, 1, 1], [], []>} : vector<16x32xf32>, vector<32x96xf32>, vector<16x96xf32> -> vector<16x96xf32>
    %c0_18 = arith.constant 0 : index
    %c0_19 = arith.constant 0 : index
    %19 = vector.load %arg9[%c0_18, %c0_19] : memref<1x96xf32, #tpu.memory_space<vmem>>, vector<1x96xf32>
    %20 = vector.broadcast %19 : vector<1x96xf32> to vector<16x96xf32>
    %21 = arith.addf %18, %20 : vector<16x96xf32>
    %c0_20 = arith.constant 0 : index
    %c0_21 = arith.constant 0 : index
    %22 = vector.load %arg22[%c0_20, %c0_21] : memref<16x96xf32, #tpu.memory_space<vmem>>, vector<16x96xf32>
    tpu.vector_store %arg22[%c0_20, %c0_21], %21 {strides = array<i32>} : memref<16x96xf32, #tpu.memory_space<vmem>>, vector<16x96xf32>,
    %c0_22 = arith.constant 0 : index
    %c0_23 = arith.constant 0 : index
    %23 = vector.load %arg14[%c0_22, %c0_23] : memref<32x96xf32, #tpu.memory_space<vmem>>, vector<32x96xf32>
    %cst_24 = arith.constant dense<0.000000e+00> : vector<16x96xf32>
    %24 = tpu.matmul %10, %23, %cst_24 {dimension_numbers = #tpu.dot_dimension_numbers<[1], [0], [0], [1], [0, 0, 1, 1], [], []>} : vector<16x32xf32>, vector<32x96xf32>, vector<16x96xf32> -> vector<16x96xf32>
    %c0_25 = arith.constant 0 : index
    %c0_26 = arith.constant 0 : index
    %25 = vector.load %arg16[%c0_25, %c0_26] : memref<1x96xf32, #tpu.memory_space<vmem>>, vector<1x96xf32>
    %26 = vector.broadcast %25 : vector<1x96xf32> to vector<16x96xf32>
    %27 = arith.addf %24, %26 : vector<16x96xf32>
    %c0_27 = arith.constant 0 : index
    %c0_28 = arith.constant 0 : index
    %28 = vector.load %arg23[%c0_27, %c0_28] : memref<16x96xf32, #tpu.memory_space<vmem>>, vector<16x96xf32>
    tpu.vector_store %arg23[%c0_27, %c0_28], %27 {strides = array<i32>} : memref<16x96xf32, #tpu.memory_space<vmem>>, vector<16x96xf32>,
    %cst_29 = arith.constant 0.000000e+00 : f32
    %29 = vector.broadcast %cst_29 : f32 to vector<2x32xf32>
    %c0_30 = arith.constant 0 : index
    %c0_31 = arith.constant 0 : index
    %30 = vector.load %arg21[%c0_30, %c0_31] : memref<16x96xf32, #tpu.memory_space<vmem>>, vector<2x96xf32>
    %c14 = arith.constant 14 : index
    %c0_32 = arith.constant 0 : index
    %31 = vector.load %arg22[%c14, %c0_32] : memref<16x96xf32, #tpu.memory_space<vmem>>, vector<2x96xf32>
    %c0_33 = arith.constant 0 : index
    %c0_34 = arith.constant 0 : index
    %32 = vector.load %arg4[%c0_33, %c0_34] : memref<32x96xf32, #tpu.memory_space<vmem>>, vector<32x96xf32>
    %cst_35 = arith.constant dense<0.000000e+00> : vector<2x96xf32>
    %33 = tpu.matmul %29, %32, %cst_35 {dimension_numbers = #tpu.dot_dimension_numbers<[1], [0], [0], [1], [0, 0, 1, 1], [], []>} : vector<2x32xf32>, vector<32x96xf32>, vector<2x96xf32> -> vector<2x96xf32>
    %34 = vector.extract_strided_slice %30 {offsets = [0, 0], sizes = [2, 32], strides = [1, 1]} : vector<2x96xf32> to vector<2x32xf32>
    %35 = vector.extract_strided_slice %33 {offsets = [0, 0], sizes = [2, 32], strides = [1, 1]} : vector<2x96xf32> to vector<2x32xf32>
    %36 = arith.addf %34, %35 : vector<2x32xf32>
    %37 = arith.negf %36 : vector<2x32xf32>
    %38 = math.exp %37 : vector<2x32xf32>
    %cst_36 = arith.constant 1.000000e+00 : f32
    %39 = vector.broadcast %cst_36 : f32 to vector<2x32xf32>
    %40 = arith.addf %39, %38 : vector<2x32xf32>
    %41 = arith.divf %39, %40 : vector<2x32xf32>
    %42 = vector.extract_strided_slice %30 {offsets = [0, 32], sizes = [2, 32], strides = [1, 1]} : vector<2x96xf32> to vector<2x32xf32>
    %43 = vector.extract_strided_slice %33 {offsets = [0, 32], sizes = [2, 32], strides = [1, 1]} : vector<2x96xf32> to vector<2x32xf32>
    %44 = arith.addf %42, %43 : vector<2x32xf32>
    %45 = arith.negf %44 : vector<2x32xf32>
    %46 = math.exp %45 : vector<2x32xf32>
    %cst_37 = arith.constant 1.000000e+00 : f32
    %47 = vector.broadcast %cst_37 : f32 to vector<2x32xf32>
    %48 = arith.addf %47, %46 : vector<2x32xf32>
    %49 = arith.divf %47, %48 : vector<2x32xf32>
    %50 = vector.extract_strided_slice %30 {offsets = [0, 64], sizes = [2, 32], strides = [1, 1]} : vector<2x96xf32> to vector<2x32xf32>
    %51 = vector.extract_strided_slice %33 {offsets = [0, 64], sizes = [2, 32], strides = [1, 1]} : vector<2x96xf32> to vector<2x32xf32>
    %c0_38 = arith.constant 0 : index
    %c0_39 = arith.constant 0 : index
    %52 = vector.load %arg6[%c0_38, %c0_39] : memref<1x32xf32, #tpu.memory_space<vmem>>, vector<1x32xf32>
    %53 = vector.broadcast %52 : vector<1x32xf32> to vector<2x32xf32>
    %54 = arith.addf %51, %53 : vector<2x32xf32>
    %55 = arith.mulf %41, %54 : vector<2x32xf32>
    %56 = arith.addf %50, %55 : vector<2x32xf32>
    %57 = math.tanh %56 : vector<2x32xf32>
    %cst_40 = arith.constant 1.000000e+00 : f32
    %58 = vector.broadcast %cst_40 : f32 to vector<2x32xf32>
    %59 = arith.subf %58, %49 : vector<2x32xf32>
    %60 = arith.mulf %59, %57 : vector<2x32xf32>
    %61 = arith.mulf %49, %29 : vector<2x32xf32>
    %62 = arith.addf %60, %61 : vector<2x32xf32>
    %c0_41 = arith.constant 0 : index
    %c0_42 = arith.constant 0 : index
    %63 = vector.load %arg8[%c0_41, %c0_42] : memref<32x96xf32, #tpu.memory_space<vmem>>, vector<32x96xf32>
    %cst_43 = arith.constant dense<0.000000e+00> : vector<2x96xf32>
    %64 = tpu.matmul %29, %63, %cst_43 {dimension_numbers = #tpu.dot_dimension_numbers<[1], [0], [0], [1], [0, 0, 1, 1], [], []>} : vector<2x32xf32>, vector<32x96xf32>, vector<2x96xf32> -> vector<2x96xf32>
    %65 = vector.extract_strided_slice %31 {offsets = [0, 0], sizes = [2, 32], strides = [1, 1]} : vector<2x96xf32> to vector<2x32xf32>
    %66 = vector.extract_strided_slice %64 {offsets = [0, 0], sizes = [2, 32], strides = [1, 1]} : vector<2x96xf32> to vector<2x32xf32>
    %67 = arith.addf %65, %66 : vector<2x32xf32>
    %68 = arith.negf %67 : vector<2x32xf32>
    %69 = math.exp %68 : vector<2x32xf32>
    %cst_44 = arith.constant 1.000000e+00 : f32
    %70 = vector.broadcast %cst_44 : f32 to vector<2x32xf32>
    %71 = arith.addf %70, %69 : vector<2x32xf32>
    %72 = arith.divf %70, %71 : vector<2x32xf32>
    %73 = vector.extract_strided_slice %31 {offsets = [0, 32], sizes = [2, 32], strides = [1, 1]} : vector<2x96xf32> to vector<2x32xf32>
    %74 = vector.extract_strided_slice %64 {offsets = [0, 32], sizes = [2, 32], strides = [1, 1]} : vector<2x96xf32> to vector<2x32xf32>
    %75 = arith.addf %73, %74 : vector<2x32xf32>
    %76 = arith.negf %75 : vector<2x32xf32>
    %77 = math.exp %76 : vector<2x32xf32>
    %cst_45 = arith.constant 1.000000e+00 : f32
    %78 = vector.broadcast %cst_45 : f32 to vector<2x32xf32>
    %79 = arith.addf %78, %77 : vector<2x32xf32>
    %80 = arith.divf %78, %79 : vector<2x32xf32>
    %81 = vector.extract_strided_slice %31 {offsets = [0, 64], sizes = [2, 32], strides = [1, 1]} : vector<2x96xf32> to vector<2x32xf32>
    %82 = vector.extract_strided_slice %64 {offsets = [0, 64], sizes = [2, 32], strides = [1, 1]} : vector<2x96xf32> to vector<2x32xf32>
    %c0_46 = arith.constant 0 : index
    %c0_47 = arith.constant 0 : index
    %83 = vector.load %arg10[%c0_46, %c0_47] : memref<1x32xf32, #tpu.memory_space<vmem>>, vector<1x32xf32>
    %84 = vector.broadcast %83 : vector<1x32xf32> to vector<2x32xf32>
    %85 = arith.addf %82, %84 : vector<2x32xf32>
    %86 = arith.mulf %72, %85 : vector<2x32xf32>
    %87 = arith.addf %81, %86 : vector<2x32xf32>
    %88 = math.tanh %87 : vector<2x32xf32>
    %cst_48 = arith.constant 1.000000e+00 : f32
    %89 = vector.broadcast %cst_48 : f32 to vector<2x32xf32>
    %90 = arith.subf %89, %80 : vector<2x32xf32>
    %91 = arith.mulf %90, %88 : vector<2x32xf32>
    %92 = arith.mulf %80, %29 : vector<2x32xf32>
    %93 = arith.addf %91, %92 : vector<2x32xf32>
    %c2 = arith.constant 2 : index
    %c0_49 = arith.constant 0 : index
    %94 = vector.load %arg21[%c2, %c0_49] : memref<16x96xf32, #tpu.memory_space<vmem>>, vector<2x96xf32>
    %c12 = arith.constant 12 : index
    %c0_50 = arith.constant 0 : index
    %95 = vector.load %arg22[%c12, %c0_50] : memref<16x96xf32, #tpu.memory_space<vmem>>, vector<2x96xf32>
    %c0_51 = arith.constant 0 : index
    %c0_52 = arith.constant 0 : index
    %96 = vector.load %arg4[%c0_51, %c0_52] : memref<32x96xf32, #tpu.memory_space<vmem>>, vector<32x96xf32>
    %cst_53 = arith.constant dense<0.000000e+00> : vector<2x96xf32>
    %97 = tpu.matmul %62, %96, %cst_53 {dimension_numbers = #tpu.dot_dimension_numbers<[1], [0], [0], [1], [0, 0, 1, 1], [], []>} : vector<2x32xf32>, vector<32x96xf32>, vector<2x96xf32> -> vector<2x96xf32>
    %98 = vector.extract_strided_slice %94 {offsets = [0, 0], sizes = [2, 32], strides = [1, 1]} : vector<2x96xf32> to vector<2x32xf32>
    %99 = vector.extract_strided_slice %97 {offsets = [0, 0], sizes = [2, 32], strides = [1, 1]} : vector<2x96xf32> to vector<2x32xf32>
    %100 = arith.addf %98, %99 : vector<2x32xf32>
    %101 = arith.negf %100 : vector<2x32xf32>
    %102 = math.exp %101 : vector<2x32xf32>
    %cst_54 = arith.constant 1.000000e+00 : f32
    %103 = vector.broadcast %cst_54 : f32 to vector<2x32xf32>
    %104 = arith.addf %103, %102 : vector<2x32xf32>
    %105 = arith.divf %103, %104 : vector<2x32xf32>
    %106 = vector.extract_strided_slice %94 {offsets = [0, 32], sizes = [2, 32], strides = [1, 1]} : vector<2x96xf32> to vector<2x32xf32>
    %107 = vector.extract_strided_slice %97 {offsets = [0, 32], sizes = [2, 32], strides = [1, 1]} : vector<2x96xf32> to vector<2x32xf32>
    %108 = arith.addf %106, %107 : vector<2x32xf32>
    %109 = arith.negf %108 : vector<2x32xf32>
    %110 = math.exp %109 : vector<2x32xf32>
    %cst_55 = arith.constant 1.000000e+00 : f32
    %111 = vector.broadcast %cst_55 : f32 to vector<2x32xf32>
    %112 = arith.addf %111, %110 : vector<2x32xf32>
    %113 = arith.divf %111, %112 : vector<2x32xf32>
    %114 = vector.extract_strided_slice %94 {offsets = [0, 64], sizes = [2, 32], strides = [1, 1]} : vector<2x96xf32> to vector<2x32xf32>
    %115 = vector.extract_strided_slice %97 {offsets = [0, 64], sizes = [2, 32], strides = [1, 1]} : vector<2x96xf32> to vector<2x32xf32>
    %c0_56 = arith.constant 0 : index
    %c0_57 = arith.constant 0 : index
    %116 = vector.load %arg6[%c0_56, %c0_57] : memref<1x32xf32, #tpu.memory_space<vmem>>, vector<1x32xf32>
    %117 = vector.broadcast %116 : vector<1x32xf32> to vector<2x32xf32>
    %118 = arith.addf %115, %117 : vector<2x32xf32>
    %119 = arith.mulf %105, %118 : vector<2x32xf32>
    %120 = arith.addf %114, %119 : vector<2x32xf32>
    %121 = math.tanh %120 : vector<2x32xf32>
    %cst_58 = arith.constant 1.000000e+00 : f32
    %122 = vector.broadcast %cst_58 : f32 to vector<2x32xf32>
    %123 = arith.subf %122, %113 : vector<2x32xf32>
    %124 = arith.mulf %123, %121 : vector<2x32xf32>
    %125 = arith.mulf %113, %62 : vector<2x32xf32>
    %126 = arith.addf %124, %125 : vector<2x32xf32>
    %c0_59 = arith.constant 0 : index
    %c0_60 = arith.constant 0 : index
    %127 = vector.load %arg8[%c0_59, %c0_60] : memref<32x96xf32, #tpu.memory_space<vmem>>, vector<32x96xf32>
    %cst_61 = arith.constant dense<0.000000e+00> : vector<2x96xf32>
    %128 = tpu.matmul %93, %127, %cst_61 {dimension_numbers = #tpu.dot_dimension_numbers<[1], [0], [0], [1], [0, 0, 1, 1], [], []>} : vector<2x32xf32>, vector<32x96xf32>, vector<2x96xf32> -> vector<2x96xf32>
    %129 = vector.extract_strided_slice %95 {offsets = [0, 0], sizes = [2, 32], strides = [1, 1]} : vector<2x96xf32> to vector<2x32xf32>
    %130 = vector.extract_strided_slice %128 {offsets = [0, 0], sizes = [2, 32], strides = [1, 1]} : vector<2x96xf32> to vector<2x32xf32>
    %131 = arith.addf %129, %130 : vector<2x32xf32>
    %132 = arith.negf %131 : vector<2x32xf32>
    %133 = math.exp %132 : vector<2x32xf32>
    %cst_62 = arith.constant 1.000000e+00 : f32
    %134 = vector.broadcast %cst_62 : f32 to vector<2x32xf32>
    %135 = arith.addf %134, %133 : vector<2x32xf32>
    %136 = arith.divf %134, %135 : vector<2x32xf32>
    %137 = vector.extract_strided_slice %95 {offsets = [0, 32], sizes = [2, 32], strides = [1, 1]} : vector<2x96xf32> to vector<2x32xf32>
    %138 = vector.extract_strided_slice %128 {offsets = [0, 32], sizes = [2, 32], strides = [1, 1]} : vector<2x96xf32> to vector<2x32xf32>
    %139 = arith.addf %137, %138 : vector<2x32xf32>
    %140 = arith.negf %139 : vector<2x32xf32>
    %141 = math.exp %140 : vector<2x32xf32>
    %cst_63 = arith.constant 1.000000e+00 : f32
    %142 = vector.broadcast %cst_63 : f32 to vector<2x32xf32>
    %143 = arith.addf %142, %141 : vector<2x32xf32>
    %144 = arith.divf %142, %143 : vector<2x32xf32>
    %145 = vector.extract_strided_slice %95 {offsets = [0, 64], sizes = [2, 32], strides = [1, 1]} : vector<2x96xf32> to vector<2x32xf32>
    %146 = vector.extract_strided_slice %128 {offsets = [0, 64], sizes = [2, 32], strides = [1, 1]} : vector<2x96xf32> to vector<2x32xf32>
    %c0_64 = arith.constant 0 : index
    %c0_65 = arith.constant 0 : index
    %147 = vector.load %arg10[%c0_64, %c0_65] : memref<1x32xf32, #tpu.memory_space<vmem>>, vector<1x32xf32>
    %148 = vector.broadcast %147 : vector<1x32xf32> to vector<2x32xf32>
    %149 = arith.addf %146, %148 : vector<2x32xf32>
    %150 = arith.mulf %136, %149 : vector<2x32xf32>
    %151 = arith.addf %145, %150 : vector<2x32xf32>
    %152 = math.tanh %151 : vector<2x32xf32>
    %cst_66 = arith.constant 1.000000e+00 : f32
    %153 = vector.broadcast %cst_66 : f32 to vector<2x32xf32>
    %154 = arith.subf %153, %144 : vector<2x32xf32>
    %155 = arith.mulf %154, %152 : vector<2x32xf32>
    %156 = arith.mulf %144, %93 : vector<2x32xf32>
    %157 = arith.addf %155, %156 : vector<2x32xf32>
    %c4 = arith.constant 4 : index
    %c0_67 = arith.constant 0 : index
    %158 = vector.load %arg21[%c4, %c0_67] : memref<16x96xf32, #tpu.memory_space<vmem>>, vector<2x96xf32>
    %c10 = arith.constant 10 : index
    %c0_68 = arith.constant 0 : index
    %159 = vector.load %arg22[%c10, %c0_68] : memref<16x96xf32, #tpu.memory_space<vmem>>, vector<2x96xf32>
    %c0_69 = arith.constant 0 : index
    %c0_70 = arith.constant 0 : index
    %160 = vector.load %arg4[%c0_69, %c0_70] : memref<32x96xf32, #tpu.memory_space<vmem>>, vector<32x96xf32>
    %cst_71 = arith.constant dense<0.000000e+00> : vector<2x96xf32>
    %161 = tpu.matmul %126, %160, %cst_71 {dimension_numbers = #tpu.dot_dimension_numbers<[1], [0], [0], [1], [0, 0, 1, 1], [], []>} : vector<2x32xf32>, vector<32x96xf32>, vector<2x96xf32> -> vector<2x96xf32>
    %162 = vector.extract_strided_slice %158 {offsets = [0, 0], sizes = [2, 32], strides = [1, 1]} : vector<2x96xf32> to vector<2x32xf32>
    %163 = vector.extract_strided_slice %161 {offsets = [0, 0], sizes = [2, 32], strides = [1, 1]} : vector<2x96xf32> to vector<2x32xf32>
    %164 = arith.addf %162, %163 : vector<2x32xf32>
    %165 = arith.negf %164 : vector<2x32xf32>
    %166 = math.exp %165 : vector<2x32xf32>
    %cst_72 = arith.constant 1.000000e+00 : f32
    %167 = vector.broadcast %cst_72 : f32 to vector<2x32xf32>
    %168 = arith.addf %167, %166 : vector<2x32xf32>
    %169 = arith.divf %167, %168 : vector<2x32xf32>
    %170 = vector.extract_strided_slice %158 {offsets = [0, 32], sizes = [2, 32], strides = [1, 1]} : vector<2x96xf32> to vector<2x32xf32>
    %171 = vector.extract_strided_slice %161 {offsets = [0, 32], sizes = [2, 32], strides = [1, 1]} : vector<2x96xf32> to vector<2x32xf32>
    %172 = arith.addf %170, %171 : vector<2x32xf32>
    %173 = arith.negf %172 : vector<2x32xf32>
    %174 = math.exp %173 : vector<2x32xf32>
    %cst_73 = arith.constant 1.000000e+00 : f32
    %175 = vector.broadcast %cst_73 : f32 to vector<2x32xf32>
    %176 = arith.addf %175, %174 : vector<2x32xf32>
    %177 = arith.divf %175, %176 : vector<2x32xf32>
    %178 = vector.extract_strided_slice %158 {offsets = [0, 64], sizes = [2, 32], strides = [1, 1]} : vector<2x96xf32> to vector<2x32xf32>
    %179 = vector.extract_strided_slice %161 {offsets = [0, 64], sizes = [2, 32], strides = [1, 1]} : vector<2x96xf32> to vector<2x32xf32>
    %c0_74 = arith.constant 0 : index
    %c0_75 = arith.constant 0 : index
    %180 = vector.load %arg6[%c0_74, %c0_75] : memref<1x32xf32, #tpu.memory_space<vmem>>, vector<1x32xf32>
    %181 = vector.broadcast %180 : vector<1x32xf32> to vector<2x32xf32>
    %182 = arith.addf %179, %181 : vector<2x32xf32>
    %183 = arith.mulf %169, %182 : vector<2x32xf32>
    %184 = arith.addf %178, %183 : vector<2x32xf32>
    %185 = math.tanh %184 : vector<2x32xf32>
    %cst_76 = arith.constant 1.000000e+00 : f32
    %186 = vector.broadcast %cst_76 : f32 to vector<2x32xf32>
    %187 = arith.subf %186, %177 : vector<2x32xf32>
    %188 = arith.mulf %187, %185 : vector<2x32xf32>
    %189 = arith.mulf %177, %126 : vector<2x32xf32>
    %190 = arith.addf %188, %189 : vector<2x32xf32>
    %c0_77 = arith.constant 0 : index
    %c0_78 = arith.constant 0 : index
    %191 = vector.load %arg8[%c0_77, %c0_78] : memref<32x96xf32, #tpu.memory_space<vmem>>, vector<32x96xf32>
    %cst_79 = arith.constant dense<0.000000e+00> : vector<2x96xf32>
    %192 = tpu.matmul %157, %191, %cst_79 {dimension_numbers = #tpu.dot_dimension_numbers<[1], [0], [0], [1], [0, 0, 1, 1], [], []>} : vector<2x32xf32>, vector<32x96xf32>, vector<2x96xf32> -> vector<2x96xf32>
    %193 = vector.extract_strided_slice %159 {offsets = [0, 0], sizes = [2, 32], strides = [1, 1]} : vector<2x96xf32> to vector<2x32xf32>
    %194 = vector.extract_strided_slice %192 {offsets = [0, 0], sizes = [2, 32], strides = [1, 1]} : vector<2x96xf32> to vector<2x32xf32>
    %195 = arith.addf %193, %194 : vector<2x32xf32>
    %196 = arith.negf %195 : vector<2x32xf32>
    %197 = math.exp %196 : vector<2x32xf32>
    %cst_80 = arith.constant 1.000000e+00 : f32
    %198 = vector.broadcast %cst_80 : f32 to vector<2x32xf32>
    %199 = arith.addf %198, %197 : vector<2x32xf32>
    %200 = arith.divf %198, %199 : vector<2x32xf32>
    %201 = vector.extract_strided_slice %159 {offsets = [0, 32], sizes = [2, 32], strides = [1, 1]} : vector<2x96xf32> to vector<2x32xf32>
    %202 = vector.extract_strided_slice %192 {offsets = [0, 32], sizes = [2, 32], strides = [1, 1]} : vector<2x96xf32> to vector<2x32xf32>
    %203 = arith.addf %201, %202 : vector<2x32xf32>
    %204 = arith.negf %203 : vector<2x32xf32>
    %205 = math.exp %204 : vector<2x32xf32>
    %cst_81 = arith.constant 1.000000e+00 : f32
    %206 = vector.broadcast %cst_81 : f32 to vector<2x32xf32>
    %207 = arith.addf %206, %205 : vector<2x32xf32>
    %208 = arith.divf %206, %207 : vector<2x32xf32>
    %209 = vector.extract_strided_slice %159 {offsets = [0, 64], sizes = [2, 32], strides = [1, 1]} : vector<2x96xf32> to vector<2x32xf32>
    %210 = vector.extract_strided_slice %192 {offsets = [0, 64], sizes = [2, 32], strides = [1, 1]} : vector<2x96xf32> to vector<2x32xf32>
    %c0_82 = arith.constant 0 : index
    %c0_83 = arith.constant 0 : index
    %211 = vector.load %arg10[%c0_82, %c0_83] : memref<1x32xf32, #tpu.memory_space<vmem>>, vector<1x32xf32>
    %212 = vector.broadcast %211 : vector<1x32xf32> to vector<2x32xf32>
    %213 = arith.addf %210, %212 : vector<2x32xf32>
    %214 = arith.mulf %200, %213 : vector<2x32xf32>
    %215 = arith.addf %209, %214 : vector<2x32xf32>
    %216 = math.tanh %215 : vector<2x32xf32>
    %cst_84 = arith.constant 1.000000e+00 : f32
    %217 = vector.broadcast %cst_84 : f32 to vector<2x32xf32>
    %218 = arith.subf %217, %208 : vector<2x32xf32>
    %219 = arith.mulf %218, %216 : vector<2x32xf32>
    %220 = arith.mulf %208, %157 : vector<2x32xf32>
    %221 = arith.addf %219, %220 : vector<2x32xf32>
    %c6 = arith.constant 6 : index
    %c0_85 = arith.constant 0 : index
    %222 = vector.load %arg21[%c6, %c0_85] : memref<16x96xf32, #tpu.memory_space<vmem>>, vector<2x96xf32>
    %c8 = arith.constant 8 : index
    %c0_86 = arith.constant 0 : index
    %223 = vector.load %arg22[%c8, %c0_86] : memref<16x96xf32, #tpu.memory_space<vmem>>, vector<2x96xf32>
    %c0_87 = arith.constant 0 : index
    %c0_88 = arith.constant 0 : index
    %224 = vector.load %arg4[%c0_87, %c0_88] : memref<32x96xf32, #tpu.memory_space<vmem>>, vector<32x96xf32>
    %cst_89 = arith.constant dense<0.000000e+00> : vector<2x96xf32>
    %225 = tpu.matmul %190, %224, %cst_89 {dimension_numbers = #tpu.dot_dimension_numbers<[1], [0], [0], [1], [0, 0, 1, 1], [], []>} : vector<2x32xf32>, vector<32x96xf32>, vector<2x96xf32> -> vector<2x96xf32>
    %226 = vector.extract_strided_slice %222 {offsets = [0, 0], sizes = [2, 32], strides = [1, 1]} : vector<2x96xf32> to vector<2x32xf32>
    %227 = vector.extract_strided_slice %225 {offsets = [0, 0], sizes = [2, 32], strides = [1, 1]} : vector<2x96xf32> to vector<2x32xf32>
    %228 = arith.addf %226, %227 : vector<2x32xf32>
    %229 = arith.negf %228 : vector<2x32xf32>
    %230 = math.exp %229 : vector<2x32xf32>
    %cst_90 = arith.constant 1.000000e+00 : f32
    %231 = vector.broadcast %cst_90 : f32 to vector<2x32xf32>
    %232 = arith.addf %231, %230 : vector<2x32xf32>
    %233 = arith.divf %231, %232 : vector<2x32xf32>
    %234 = vector.extract_strided_slice %222 {offsets = [0, 32], sizes = [2, 32], strides = [1, 1]} : vector<2x96xf32> to vector<2x32xf32>
    %235 = vector.extract_strided_slice %225 {offsets = [0, 32], sizes = [2, 32], strides = [1, 1]} : vector<2x96xf32> to vector<2x32xf32>
    %236 = arith.addf %234, %235 : vector<2x32xf32>
    %237 = arith.negf %236 : vector<2x32xf32>
    %238 = math.exp %237 : vector<2x32xf32>
    %cst_91 = arith.constant 1.000000e+00 : f32
    %239 = vector.broadcast %cst_91 : f32 to vector<2x32xf32>
    %240 = arith.addf %239, %238 : vector<2x32xf32>
    %241 = arith.divf %239, %240 : vector<2x32xf32>
    %242 = vector.extract_strided_slice %222 {offsets = [0, 64], sizes = [2, 32], strides = [1, 1]} : vector<2x96xf32> to vector<2x32xf32>
    %243 = vector.extract_strided_slice %225 {offsets = [0, 64], sizes = [2, 32], strides = [1, 1]} : vector<2x96xf32> to vector<2x32xf32>
    %c0_92 = arith.constant 0 : index
    %c0_93 = arith.constant 0 : index
    %244 = vector.load %arg6[%c0_92, %c0_93] : memref<1x32xf32, #tpu.memory_space<vmem>>, vector<1x32xf32>
    %245 = vector.broadcast %244 : vector<1x32xf32> to vector<2x32xf32>
    %246 = arith.addf %243, %245 : vector<2x32xf32>
    %247 = arith.mulf %233, %246 : vector<2x32xf32>
    %248 = arith.addf %242, %247 : vector<2x32xf32>
    %249 = math.tanh %248 : vector<2x32xf32>
    %cst_94 = arith.constant 1.000000e+00 : f32
    %250 = vector.broadcast %cst_94 : f32 to vector<2x32xf32>
    %251 = arith.subf %250, %241 : vector<2x32xf32>
    %252 = arith.mulf %251, %249 : vector<2x32xf32>
    %253 = arith.mulf %241, %190 : vector<2x32xf32>
    %254 = arith.addf %252, %253 : vector<2x32xf32>
    %c0_95 = arith.constant 0 : index
    %c0_96 = arith.constant 0 : index
    %255 = vector.load %arg8[%c0_95, %c0_96] : memref<32x96xf32, #tpu.memory_space<vmem>>, vector<32x96xf32>
    %cst_97 = arith.constant dense<0.000000e+00> : vector<2x96xf32>
    %256 = tpu.matmul %221, %255, %cst_97 {dimension_numbers = #tpu.dot_dimension_numbers<[1], [0], [0], [1], [0, 0, 1, 1], [], []>} : vector<2x32xf32>, vector<32x96xf32>, vector<2x96xf32> -> vector<2x96xf32>
    %257 = vector.extract_strided_slice %223 {offsets = [0, 0], sizes = [2, 32], strides = [1, 1]} : vector<2x96xf32> to vector<2x32xf32>
    %258 = vector.extract_strided_slice %256 {offsets = [0, 0], sizes = [2, 32], strides = [1, 1]} : vector<2x96xf32> to vector<2x32xf32>
    %259 = arith.addf %257, %258 : vector<2x32xf32>
    %260 = arith.negf %259 : vector<2x32xf32>
    %261 = math.exp %260 : vector<2x32xf32>
    %cst_98 = arith.constant 1.000000e+00 : f32
    %262 = vector.broadcast %cst_98 : f32 to vector<2x32xf32>
    %263 = arith.addf %262, %261 : vector<2x32xf32>
    %264 = arith.divf %262, %263 : vector<2x32xf32>
    %265 = vector.extract_strided_slice %223 {offsets = [0, 32], sizes = [2, 32], strides = [1, 1]} : vector<2x96xf32> to vector<2x32xf32>
    %266 = vector.extract_strided_slice %256 {offsets = [0, 32], sizes = [2, 32], strides = [1, 1]} : vector<2x96xf32> to vector<2x32xf32>
    %267 = arith.addf %265, %266 : vector<2x32xf32>
    %268 = arith.negf %267 : vector<2x32xf32>
    %269 = math.exp %268 : vector<2x32xf32>
    %cst_99 = arith.constant 1.000000e+00 : f32
    %270 = vector.broadcast %cst_99 : f32 to vector<2x32xf32>
    %271 = arith.addf %270, %269 : vector<2x32xf32>
    %272 = arith.divf %270, %271 : vector<2x32xf32>
    %273 = vector.extract_strided_slice %223 {offsets = [0, 64], sizes = [2, 32], strides = [1, 1]} : vector<2x96xf32> to vector<2x32xf32>
    %274 = vector.extract_strided_slice %256 {offsets = [0, 64], sizes = [2, 32], strides = [1, 1]} : vector<2x96xf32> to vector<2x32xf32>
    %c0_100 = arith.constant 0 : index
    %c0_101 = arith.constant 0 : index
    %275 = vector.load %arg10[%c0_100, %c0_101] : memref<1x32xf32, #tpu.memory_space<vmem>>, vector<1x32xf32>
    %276 = vector.broadcast %275 : vector<1x32xf32> to vector<2x32xf32>
    %277 = arith.addf %274, %276 : vector<2x32xf32>
    %278 = arith.mulf %264, %277 : vector<2x32xf32>
    %279 = arith.addf %273, %278 : vector<2x32xf32>
    %280 = math.tanh %279 : vector<2x32xf32>
    %cst_102 = arith.constant 1.000000e+00 : f32
    %281 = vector.broadcast %cst_102 : f32 to vector<2x32xf32>
    %282 = arith.subf %281, %272 : vector<2x32xf32>
    %283 = arith.mulf %282, %280 : vector<2x32xf32>
    %284 = arith.mulf %272, %221 : vector<2x32xf32>
    %285 = arith.addf %283, %284 : vector<2x32xf32>
    %c8_103 = arith.constant 8 : index
    %c0_104 = arith.constant 0 : index
    %286 = vector.load %arg21[%c8_103, %c0_104] : memref<16x96xf32, #tpu.memory_space<vmem>>, vector<2x96xf32>
    %c6_105 = arith.constant 6 : index
    %c0_106 = arith.constant 0 : index
    %287 = vector.load %arg22[%c6_105, %c0_106] : memref<16x96xf32, #tpu.memory_space<vmem>>, vector<2x96xf32>
    %c0_107 = arith.constant 0 : index
    %c0_108 = arith.constant 0 : index
    %288 = vector.load %arg4[%c0_107, %c0_108] : memref<32x96xf32, #tpu.memory_space<vmem>>, vector<32x96xf32>
    %cst_109 = arith.constant dense<0.000000e+00> : vector<2x96xf32>
    %289 = tpu.matmul %254, %288, %cst_109 {dimension_numbers = #tpu.dot_dimension_numbers<[1], [0], [0], [1], [0, 0, 1, 1], [], []>} : vector<2x32xf32>, vector<32x96xf32>, vector<2x96xf32> -> vector<2x96xf32>
    %290 = vector.extract_strided_slice %286 {offsets = [0, 0], sizes = [2, 32], strides = [1, 1]} : vector<2x96xf32> to vector<2x32xf32>
    %291 = vector.extract_strided_slice %289 {offsets = [0, 0], sizes = [2, 32], strides = [1, 1]} : vector<2x96xf32> to vector<2x32xf32>
    %292 = arith.addf %290, %291 : vector<2x32xf32>
    %293 = arith.negf %292 : vector<2x32xf32>
    %294 = math.exp %293 : vector<2x32xf32>
    %cst_110 = arith.constant 1.000000e+00 : f32
    %295 = vector.broadcast %cst_110 : f32 to vector<2x32xf32>
    %296 = arith.addf %295, %294 : vector<2x32xf32>
    %297 = arith.divf %295, %296 : vector<2x32xf32>
    %298 = vector.extract_strided_slice %286 {offsets = [0, 32], sizes = [2, 32], strides = [1, 1]} : vector<2x96xf32> to vector<2x32xf32>
    %299 = vector.extract_strided_slice %289 {offsets = [0, 32], sizes = [2, 32], strides = [1, 1]} : vector<2x96xf32> to vector<2x32xf32>
    %300 = arith.addf %298, %299 : vector<2x32xf32>
    %301 = arith.negf %300 : vector<2x32xf32>
    %302 = math.exp %301 : vector<2x32xf32>
    %cst_111 = arith.constant 1.000000e+00 : f32
    %303 = vector.broadcast %cst_111 : f32 to vector<2x32xf32>
    %304 = arith.addf %303, %302 : vector<2x32xf32>
    %305 = arith.divf %303, %304 : vector<2x32xf32>
    %306 = vector.extract_strided_slice %286 {offsets = [0, 64], sizes = [2, 32], strides = [1, 1]} : vector<2x96xf32> to vector<2x32xf32>
    %307 = vector.extract_strided_slice %289 {offsets = [0, 64], sizes = [2, 32], strides = [1, 1]} : vector<2x96xf32> to vector<2x32xf32>
    %c0_112 = arith.constant 0 : index
    %c0_113 = arith.constant 0 : index
    %308 = vector.load %arg6[%c0_112, %c0_113] : memref<1x32xf32, #tpu.memory_space<vmem>>, vector<1x32xf32>
    %309 = vector.broadcast %308 : vector<1x32xf32> to vector<2x32xf32>
    %310 = arith.addf %307, %309 : vector<2x32xf32>
    %311 = arith.mulf %297, %310 : vector<2x32xf32>
    %312 = arith.addf %306, %311 : vector<2x32xf32>
    %313 = math.tanh %312 : vector<2x32xf32>
    %cst_114 = arith.constant 1.000000e+00 : f32
    %314 = vector.broadcast %cst_114 : f32 to vector<2x32xf32>
    %315 = arith.subf %314, %305 : vector<2x32xf32>
    %316 = arith.mulf %315, %313 : vector<2x32xf32>
    %317 = arith.mulf %305, %254 : vector<2x32xf32>
    %318 = arith.addf %316, %317 : vector<2x32xf32>
    %c0_115 = arith.constant 0 : index
    %c0_116 = arith.constant 0 : index
    %319 = vector.load %arg8[%c0_115, %c0_116] : memref<32x96xf32, #tpu.memory_space<vmem>>, vector<32x96xf32>
    %cst_117 = arith.constant dense<0.000000e+00> : vector<2x96xf32>
    %320 = tpu.matmul %285, %319, %cst_117 {dimension_numbers = #tpu.dot_dimension_numbers<[1], [0], [0], [1], [0, 0, 1, 1], [], []>} : vector<2x32xf32>, vector<32x96xf32>, vector<2x96xf32> -> vector<2x96xf32>
    %321 = vector.extract_strided_slice %287 {offsets = [0, 0], sizes = [2, 32], strides = [1, 1]} : vector<2x96xf32> to vector<2x32xf32>
    %322 = vector.extract_strided_slice %320 {offsets = [0, 0], sizes = [2, 32], strides = [1, 1]} : vector<2x96xf32> to vector<2x32xf32>
    %323 = arith.addf %321, %322 : vector<2x32xf32>
    %324 = arith.negf %323 : vector<2x32xf32>
    %325 = math.exp %324 : vector<2x32xf32>
    %cst_118 = arith.constant 1.000000e+00 : f32
    %326 = vector.broadcast %cst_118 : f32 to vector<2x32xf32>
    %327 = arith.addf %326, %325 : vector<2x32xf32>
    %328 = arith.divf %326, %327 : vector<2x32xf32>
    %329 = vector.extract_strided_slice %287 {offsets = [0, 32], sizes = [2, 32], strides = [1, 1]} : vector<2x96xf32> to vector<2x32xf32>
    %330 = vector.extract_strided_slice %320 {offsets = [0, 32], sizes = [2, 32], strides = [1, 1]} : vector<2x96xf32> to vector<2x32xf32>
    %331 = arith.addf %329, %330 : vector<2x32xf32>
    %332 = arith.negf %331 : vector<2x32xf32>
    %333 = math.exp %332 : vector<2x32xf32>
    %cst_119 = arith.constant 1.000000e+00 : f32
    %334 = vector.broadcast %cst_119 : f32 to vector<2x32xf32>
    %335 = arith.addf %334, %333 : vector<2x32xf32>
    %336 = arith.divf %334, %335 : vector<2x32xf32>
    %337 = vector.extract_strided_slice %287 {offsets = [0, 64], sizes = [2, 32], strides = [1, 1]} : vector<2x96xf32> to vector<2x32xf32>
    %338 = vector.extract_strided_slice %320 {offsets = [0, 64], sizes = [2, 32], strides = [1, 1]} : vector<2x96xf32> to vector<2x32xf32>
    %c0_120 = arith.constant 0 : index
    %c0_121 = arith.constant 0 : index
    %339 = vector.load %arg10[%c0_120, %c0_121] : memref<1x32xf32, #tpu.memory_space<vmem>>, vector<1x32xf32>
    %340 = vector.broadcast %339 : vector<1x32xf32> to vector<2x32xf32>
    %341 = arith.addf %338, %340 : vector<2x32xf32>
    %342 = arith.mulf %328, %341 : vector<2x32xf32>
    %343 = arith.addf %337, %342 : vector<2x32xf32>
    %344 = math.tanh %343 : vector<2x32xf32>
    %cst_122 = arith.constant 1.000000e+00 : f32
    %345 = vector.broadcast %cst_122 : f32 to vector<2x32xf32>
    %346 = arith.subf %345, %336 : vector<2x32xf32>
    %347 = arith.mulf %346, %344 : vector<2x32xf32>
    %348 = arith.mulf %336, %285 : vector<2x32xf32>
    %349 = arith.addf %347, %348 : vector<2x32xf32>
    %c10_123 = arith.constant 10 : index
    %c0_124 = arith.constant 0 : index
    %350 = vector.load %arg21[%c10_123, %c0_124] : memref<16x96xf32, #tpu.memory_space<vmem>>, vector<2x96xf32>
    %c4_125 = arith.constant 4 : index
    %c0_126 = arith.constant 0 : index
    %351 = vector.load %arg22[%c4_125, %c0_126] : memref<16x96xf32, #tpu.memory_space<vmem>>, vector<2x96xf32>
    %c0_127 = arith.constant 0 : index
    %c0_128 = arith.constant 0 : index
    %352 = vector.load %arg4[%c0_127, %c0_128] : memref<32x96xf32, #tpu.memory_space<vmem>>, vector<32x96xf32>
    %cst_129 = arith.constant dense<0.000000e+00> : vector<2x96xf32>
    %353 = tpu.matmul %318, %352, %cst_129 {dimension_numbers = #tpu.dot_dimension_numbers<[1], [0], [0], [1], [0, 0, 1, 1], [], []>} : vector<2x32xf32>, vector<32x96xf32>, vector<2x96xf32> -> vector<2x96xf32>
    %354 = vector.extract_strided_slice %350 {offsets = [0, 0], sizes = [2, 32], strides = [1, 1]} : vector<2x96xf32> to vector<2x32xf32>
    %355 = vector.extract_strided_slice %353 {offsets = [0, 0], sizes = [2, 32], strides = [1, 1]} : vector<2x96xf32> to vector<2x32xf32>
    %356 = arith.addf %354, %355 : vector<2x32xf32>
    %357 = arith.negf %356 : vector<2x32xf32>
    %358 = math.exp %357 : vector<2x32xf32>
    %cst_130 = arith.constant 1.000000e+00 : f32
    %359 = vector.broadcast %cst_130 : f32 to vector<2x32xf32>
    %360 = arith.addf %359, %358 : vector<2x32xf32>
    %361 = arith.divf %359, %360 : vector<2x32xf32>
    %362 = vector.extract_strided_slice %350 {offsets = [0, 32], sizes = [2, 32], strides = [1, 1]} : vector<2x96xf32> to vector<2x32xf32>
    %363 = vector.extract_strided_slice %353 {offsets = [0, 32], sizes = [2, 32], strides = [1, 1]} : vector<2x96xf32> to vector<2x32xf32>
    %364 = arith.addf %362, %363 : vector<2x32xf32>
    %365 = arith.negf %364 : vector<2x32xf32>
    %366 = math.exp %365 : vector<2x32xf32>
    %cst_131 = arith.constant 1.000000e+00 : f32
    %367 = vector.broadcast %cst_131 : f32 to vector<2x32xf32>
    %368 = arith.addf %367, %366 : vector<2x32xf32>
    %369 = arith.divf %367, %368 : vector<2x32xf32>
    %370 = vector.extract_strided_slice %350 {offsets = [0, 64], sizes = [2, 32], strides = [1, 1]} : vector<2x96xf32> to vector<2x32xf32>
    %371 = vector.extract_strided_slice %353 {offsets = [0, 64], sizes = [2, 32], strides = [1, 1]} : vector<2x96xf32> to vector<2x32xf32>
    %c0_132 = arith.constant 0 : index
    %c0_133 = arith.constant 0 : index
    %372 = vector.load %arg6[%c0_132, %c0_133] : memref<1x32xf32, #tpu.memory_space<vmem>>, vector<1x32xf32>
    %373 = vector.broadcast %372 : vector<1x32xf32> to vector<2x32xf32>
    %374 = arith.addf %371, %373 : vector<2x32xf32>
    %375 = arith.mulf %361, %374 : vector<2x32xf32>
    %376 = arith.addf %370, %375 : vector<2x32xf32>
    %377 = math.tanh %376 : vector<2x32xf32>
    %cst_134 = arith.constant 1.000000e+00 : f32
    %378 = vector.broadcast %cst_134 : f32 to vector<2x32xf32>
    %379 = arith.subf %378, %369 : vector<2x32xf32>
    %380 = arith.mulf %379, %377 : vector<2x32xf32>
    %381 = arith.mulf %369, %318 : vector<2x32xf32>
    %382 = arith.addf %380, %381 : vector<2x32xf32>
    %c0_135 = arith.constant 0 : index
    %c0_136 = arith.constant 0 : index
    %383 = vector.load %arg8[%c0_135, %c0_136] : memref<32x96xf32, #tpu.memory_space<vmem>>, vector<32x96xf32>
    %cst_137 = arith.constant dense<0.000000e+00> : vector<2x96xf32>
    %384 = tpu.matmul %349, %383, %cst_137 {dimension_numbers = #tpu.dot_dimension_numbers<[1], [0], [0], [1], [0, 0, 1, 1], [], []>} : vector<2x32xf32>, vector<32x96xf32>, vector<2x96xf32> -> vector<2x96xf32>
    %385 = vector.extract_strided_slice %351 {offsets = [0, 0], sizes = [2, 32], strides = [1, 1]} : vector<2x96xf32> to vector<2x32xf32>
    %386 = vector.extract_strided_slice %384 {offsets = [0, 0], sizes = [2, 32], strides = [1, 1]} : vector<2x96xf32> to vector<2x32xf32>
    %387 = arith.addf %385, %386 : vector<2x32xf32>
    %388 = arith.negf %387 : vector<2x32xf32>
    %389 = math.exp %388 : vector<2x32xf32>
    %cst_138 = arith.constant 1.000000e+00 : f32
    %390 = vector.broadcast %cst_138 : f32 to vector<2x32xf32>
    %391 = arith.addf %390, %389 : vector<2x32xf32>
    %392 = arith.divf %390, %391 : vector<2x32xf32>
    %393 = vector.extract_strided_slice %351 {offsets = [0, 32], sizes = [2, 32], strides = [1, 1]} : vector<2x96xf32> to vector<2x32xf32>
    %394 = vector.extract_strided_slice %384 {offsets = [0, 32], sizes = [2, 32], strides = [1, 1]} : vector<2x96xf32> to vector<2x32xf32>
    %395 = arith.addf %393, %394 : vector<2x32xf32>
    %396 = arith.negf %395 : vector<2x32xf32>
    %397 = math.exp %396 : vector<2x32xf32>
    %cst_139 = arith.constant 1.000000e+00 : f32
    %398 = vector.broadcast %cst_139 : f32 to vector<2x32xf32>
    %399 = arith.addf %398, %397 : vector<2x32xf32>
    %400 = arith.divf %398, %399 : vector<2x32xf32>
    %401 = vector.extract_strided_slice %351 {offsets = [0, 64], sizes = [2, 32], strides = [1, 1]} : vector<2x96xf32> to vector<2x32xf32>
    %402 = vector.extract_strided_slice %384 {offsets = [0, 64], sizes = [2, 32], strides = [1, 1]} : vector<2x96xf32> to vector<2x32xf32>
    %c0_140 = arith.constant 0 : index
    %c0_141 = arith.constant 0 : index
    %403 = vector.load %arg10[%c0_140, %c0_141] : memref<1x32xf32, #tpu.memory_space<vmem>>, vector<1x32xf32>
    %404 = vector.broadcast %403 : vector<1x32xf32> to vector<2x32xf32>
    %405 = arith.addf %402, %404 : vector<2x32xf32>
    %406 = arith.mulf %392, %405 : vector<2x32xf32>
    %407 = arith.addf %401, %406 : vector<2x32xf32>
    %408 = math.tanh %407 : vector<2x32xf32>
    %cst_142 = arith.constant 1.000000e+00 : f32
    %409 = vector.broadcast %cst_142 : f32 to vector<2x32xf32>
    %410 = arith.subf %409, %400 : vector<2x32xf32>
    %411 = arith.mulf %410, %408 : vector<2x32xf32>
    %412 = arith.mulf %400, %349 : vector<2x32xf32>
    %413 = arith.addf %411, %412 : vector<2x32xf32>
    %c12_143 = arith.constant 12 : index
    %c0_144 = arith.constant 0 : index
    %414 = vector.load %arg21[%c12_143, %c0_144] : memref<16x96xf32, #tpu.memory_space<vmem>>, vector<2x96xf32>
    %c2_145 = arith.constant 2 : index
    %c0_146 = arith.constant 0 : index
    %415 = vector.load %arg22[%c2_145, %c0_146] : memref<16x96xf32, #tpu.memory_space<vmem>>, vector<2x96xf32>
    %c0_147 = arith.constant 0 : index
    %c0_148 = arith.constant 0 : index
    %416 = vector.load %arg4[%c0_147, %c0_148] : memref<32x96xf32, #tpu.memory_space<vmem>>, vector<32x96xf32>
    %cst_149 = arith.constant dense<0.000000e+00> : vector<2x96xf32>
    %417 = tpu.matmul %382, %416, %cst_149 {dimension_numbers = #tpu.dot_dimension_numbers<[1], [0], [0], [1], [0, 0, 1, 1], [], []>} : vector<2x32xf32>, vector<32x96xf32>, vector<2x96xf32> -> vector<2x96xf32>
    %418 = vector.extract_strided_slice %414 {offsets = [0, 0], sizes = [2, 32], strides = [1, 1]} : vector<2x96xf32> to vector<2x32xf32>
    %419 = vector.extract_strided_slice %417 {offsets = [0, 0], sizes = [2, 32], strides = [1, 1]} : vector<2x96xf32> to vector<2x32xf32>
    %420 = arith.addf %418, %419 : vector<2x32xf32>
    %421 = arith.negf %420 : vector<2x32xf32>
    %422 = math.exp %421 : vector<2x32xf32>
    %cst_150 = arith.constant 1.000000e+00 : f32
    %423 = vector.broadcast %cst_150 : f32 to vector<2x32xf32>
    %424 = arith.addf %423, %422 : vector<2x32xf32>
    %425 = arith.divf %423, %424 : vector<2x32xf32>
    %426 = vector.extract_strided_slice %414 {offsets = [0, 32], sizes = [2, 32], strides = [1, 1]} : vector<2x96xf32> to vector<2x32xf32>
    %427 = vector.extract_strided_slice %417 {offsets = [0, 32], sizes = [2, 32], strides = [1, 1]} : vector<2x96xf32> to vector<2x32xf32>
    %428 = arith.addf %426, %427 : vector<2x32xf32>
    %429 = arith.negf %428 : vector<2x32xf32>
    %430 = math.exp %429 : vector<2x32xf32>
    %cst_151 = arith.constant 1.000000e+00 : f32
    %431 = vector.broadcast %cst_151 : f32 to vector<2x32xf32>
    %432 = arith.addf %431, %430 : vector<2x32xf32>
    %433 = arith.divf %431, %432 : vector<2x32xf32>
    %434 = vector.extract_strided_slice %414 {offsets = [0, 64], sizes = [2, 32], strides = [1, 1]} : vector<2x96xf32> to vector<2x32xf32>
    %435 = vector.extract_strided_slice %417 {offsets = [0, 64], sizes = [2, 32], strides = [1, 1]} : vector<2x96xf32> to vector<2x32xf32>
    %c0_152 = arith.constant 0 : index
    %c0_153 = arith.constant 0 : index
    %436 = vector.load %arg6[%c0_152, %c0_153] : memref<1x32xf32, #tpu.memory_space<vmem>>, vector<1x32xf32>
    %437 = vector.broadcast %436 : vector<1x32xf32> to vector<2x32xf32>
    %438 = arith.addf %435, %437 : vector<2x32xf32>
    %439 = arith.mulf %425, %438 : vector<2x32xf32>
    %440 = arith.addf %434, %439 : vector<2x32xf32>
    %441 = math.tanh %440 : vector<2x32xf32>
    %cst_154 = arith.constant 1.000000e+00 : f32
    %442 = vector.broadcast %cst_154 : f32 to vector<2x32xf32>
    %443 = arith.subf %442, %433 : vector<2x32xf32>
    %444 = arith.mulf %443, %441 : vector<2x32xf32>
    %445 = arith.mulf %433, %382 : vector<2x32xf32>
    %446 = arith.addf %444, %445 : vector<2x32xf32>
    %c0_155 = arith.constant 0 : index
    %c0_156 = arith.constant 0 : index
    %447 = vector.load %arg8[%c0_155, %c0_156] : memref<32x96xf32, #tpu.memory_space<vmem>>, vector<32x96xf32>
    %cst_157 = arith.constant dense<0.000000e+00> : vector<2x96xf32>
    %448 = tpu.matmul %413, %447, %cst_157 {dimension_numbers = #tpu.dot_dimension_numbers<[1], [0], [0], [1], [0, 0, 1, 1], [], []>} : vector<2x32xf32>, vector<32x96xf32>, vector<2x96xf32> -> vector<2x96xf32>
    %449 = vector.extract_strided_slice %415 {offsets = [0, 0], sizes = [2, 32], strides = [1, 1]} : vector<2x96xf32> to vector<2x32xf32>
    %450 = vector.extract_strided_slice %448 {offsets = [0, 0], sizes = [2, 32], strides = [1, 1]} : vector<2x96xf32> to vector<2x32xf32>
    %451 = arith.addf %449, %450 : vector<2x32xf32>
    %452 = arith.negf %451 : vector<2x32xf32>
    %453 = math.exp %452 : vector<2x32xf32>
    %cst_158 = arith.constant 1.000000e+00 : f32
    %454 = vector.broadcast %cst_158 : f32 to vector<2x32xf32>
    %455 = arith.addf %454, %453 : vector<2x32xf32>
    %456 = arith.divf %454, %455 : vector<2x32xf32>
    %457 = vector.extract_strided_slice %415 {offsets = [0, 32], sizes = [2, 32], strides = [1, 1]} : vector<2x96xf32> to vector<2x32xf32>
    %458 = vector.extract_strided_slice %448 {offsets = [0, 32], sizes = [2, 32], strides = [1, 1]} : vector<2x96xf32> to vector<2x32xf32>
    %459 = arith.addf %457, %458 : vector<2x32xf32>
    %460 = arith.negf %459 : vector<2x32xf32>
    %461 = math.exp %460 : vector<2x32xf32>
    %cst_159 = arith.constant 1.000000e+00 : f32
    %462 = vector.broadcast %cst_159 : f32 to vector<2x32xf32>
    %463 = arith.addf %462, %461 : vector<2x32xf32>
    %464 = arith.divf %462, %463 : vector<2x32xf32>
    %465 = vector.extract_strided_slice %415 {offsets = [0, 64], sizes = [2, 32], strides = [1, 1]} : vector<2x96xf32> to vector<2x32xf32>
    %466 = vector.extract_strided_slice %448 {offsets = [0, 64], sizes = [2, 32], strides = [1, 1]} : vector<2x96xf32> to vector<2x32xf32>
    %c0_160 = arith.constant 0 : index
    %c0_161 = arith.constant 0 : index
    %467 = vector.load %arg10[%c0_160, %c0_161] : memref<1x32xf32, #tpu.memory_space<vmem>>, vector<1x32xf32>
    %468 = vector.broadcast %467 : vector<1x32xf32> to vector<2x32xf32>
    %469 = arith.addf %466, %468 : vector<2x32xf32>
    %470 = arith.mulf %456, %469 : vector<2x32xf32>
    %471 = arith.addf %465, %470 : vector<2x32xf32>
    %472 = math.tanh %471 : vector<2x32xf32>
    %cst_162 = arith.constant 1.000000e+00 : f32
    %473 = vector.broadcast %cst_162 : f32 to vector<2x32xf32>
    %474 = arith.subf %473, %464 : vector<2x32xf32>
    %475 = arith.mulf %474, %472 : vector<2x32xf32>
    %476 = arith.mulf %464, %413 : vector<2x32xf32>
    %477 = arith.addf %475, %476 : vector<2x32xf32>
    %c14_163 = arith.constant 14 : index
    %c0_164 = arith.constant 0 : index
    %478 = vector.load %arg21[%c14_163, %c0_164] : memref<16x96xf32, #tpu.memory_space<vmem>>, vector<2x96xf32>
    %c0_165 = arith.constant 0 : index
    %c0_166 = arith.constant 0 : index
    %479 = vector.load %arg22[%c0_165, %c0_166] : memref<16x96xf32, #tpu.memory_space<vmem>>, vector<2x96xf32>
    %c0_167 = arith.constant 0 : index
    %c0_168 = arith.constant 0 : index
    %480 = vector.load %arg4[%c0_167, %c0_168] : memref<32x96xf32, #tpu.memory_space<vmem>>, vector<32x96xf32>
    %cst_169 = arith.constant dense<0.000000e+00> : vector<2x96xf32>
    %481 = tpu.matmul %446, %480, %cst_169 {dimension_numbers = #tpu.dot_dimension_numbers<[1], [0], [0], [1], [0, 0, 1, 1], [], []>} : vector<2x32xf32>, vector<32x96xf32>, vector<2x96xf32> -> vector<2x96xf32>
    %482 = vector.extract_strided_slice %478 {offsets = [0, 0], sizes = [2, 32], strides = [1, 1]} : vector<2x96xf32> to vector<2x32xf32>
    %483 = vector.extract_strided_slice %481 {offsets = [0, 0], sizes = [2, 32], strides = [1, 1]} : vector<2x96xf32> to vector<2x32xf32>
    %484 = arith.addf %482, %483 : vector<2x32xf32>
    %485 = arith.negf %484 : vector<2x32xf32>
    %486 = math.exp %485 : vector<2x32xf32>
    %cst_170 = arith.constant 1.000000e+00 : f32
    %487 = vector.broadcast %cst_170 : f32 to vector<2x32xf32>
    %488 = arith.addf %487, %486 : vector<2x32xf32>
    %489 = arith.divf %487, %488 : vector<2x32xf32>
    %490 = vector.extract_strided_slice %478 {offsets = [0, 32], sizes = [2, 32], strides = [1, 1]} : vector<2x96xf32> to vector<2x32xf32>
    %491 = vector.extract_strided_slice %481 {offsets = [0, 32], sizes = [2, 32], strides = [1, 1]} : vector<2x96xf32> to vector<2x32xf32>
    %492 = arith.addf %490, %491 : vector<2x32xf32>
    %493 = arith.negf %492 : vector<2x32xf32>
    %494 = math.exp %493 : vector<2x32xf32>
    %cst_171 = arith.constant 1.000000e+00 : f32
    %495 = vector.broadcast %cst_171 : f32 to vector<2x32xf32>
    %496 = arith.addf %495, %494 : vector<2x32xf32>
    %497 = arith.divf %495, %496 : vector<2x32xf32>
    %498 = vector.extract_strided_slice %478 {offsets = [0, 64], sizes = [2, 32], strides = [1, 1]} : vector<2x96xf32> to vector<2x32xf32>
    %499 = vector.extract_strided_slice %481 {offsets = [0, 64], sizes = [2, 32], strides = [1, 1]} : vector<2x96xf32> to vector<2x32xf32>
    %c0_172 = arith.constant 0 : index
    %c0_173 = arith.constant 0 : index
    %500 = vector.load %arg6[%c0_172, %c0_173] : memref<1x32xf32, #tpu.memory_space<vmem>>, vector<1x32xf32>
    %501 = vector.broadcast %500 : vector<1x32xf32> to vector<2x32xf32>
    %502 = arith.addf %499, %501 : vector<2x32xf32>
    %503 = arith.mulf %489, %502 : vector<2x32xf32>
    %504 = arith.addf %498, %503 : vector<2x32xf32>
    %505 = math.tanh %504 : vector<2x32xf32>
    %cst_174 = arith.constant 1.000000e+00 : f32
    %506 = vector.broadcast %cst_174 : f32 to vector<2x32xf32>
    %507 = arith.subf %506, %497 : vector<2x32xf32>
    %508 = arith.mulf %507, %505 : vector<2x32xf32>
    %509 = arith.mulf %497, %446 : vector<2x32xf32>
    %510 = arith.addf %508, %509 : vector<2x32xf32>
    %c0_175 = arith.constant 0 : index
    %c0_176 = arith.constant 0 : index
    %511 = vector.load %arg8[%c0_175, %c0_176] : memref<32x96xf32, #tpu.memory_space<vmem>>, vector<32x96xf32>
    %cst_177 = arith.constant dense<0.000000e+00> : vector<2x96xf32>
    %512 = tpu.matmul %477, %511, %cst_177 {dimension_numbers = #tpu.dot_dimension_numbers<[1], [0], [0], [1], [0, 0, 1, 1], [], []>} : vector<2x32xf32>, vector<32x96xf32>, vector<2x96xf32> -> vector<2x96xf32>
    %513 = vector.extract_strided_slice %479 {offsets = [0, 0], sizes = [2, 32], strides = [1, 1]} : vector<2x96xf32> to vector<2x32xf32>
    %514 = vector.extract_strided_slice %512 {offsets = [0, 0], sizes = [2, 32], strides = [1, 1]} : vector<2x96xf32> to vector<2x32xf32>
    %515 = arith.addf %513, %514 : vector<2x32xf32>
    %516 = arith.negf %515 : vector<2x32xf32>
    %517 = math.exp %516 : vector<2x32xf32>
    %cst_178 = arith.constant 1.000000e+00 : f32
    %518 = vector.broadcast %cst_178 : f32 to vector<2x32xf32>
    %519 = arith.addf %518, %517 : vector<2x32xf32>
    %520 = arith.divf %518, %519 : vector<2x32xf32>
    %521 = vector.extract_strided_slice %479 {offsets = [0, 32], sizes = [2, 32], strides = [1, 1]} : vector<2x96xf32> to vector<2x32xf32>
    %522 = vector.extract_strided_slice %512 {offsets = [0, 32], sizes = [2, 32], strides = [1, 1]} : vector<2x96xf32> to vector<2x32xf32>
    %523 = arith.addf %521, %522 : vector<2x32xf32>
    %524 = arith.negf %523 : vector<2x32xf32>
    %525 = math.exp %524 : vector<2x32xf32>
    %cst_179 = arith.constant 1.000000e+00 : f32
    %526 = vector.broadcast %cst_179 : f32 to vector<2x32xf32>
    %527 = arith.addf %526, %525 : vector<2x32xf32>
    %528 = arith.divf %526, %527 : vector<2x32xf32>
    %529 = vector.extract_strided_slice %479 {offsets = [0, 64], sizes = [2, 32], strides = [1, 1]} : vector<2x96xf32> to vector<2x32xf32>
    %530 = vector.extract_strided_slice %512 {offsets = [0, 64], sizes = [2, 32], strides = [1, 1]} : vector<2x96xf32> to vector<2x32xf32>
    %c0_180 = arith.constant 0 : index
    %c0_181 = arith.constant 0 : index
    %531 = vector.load %arg10[%c0_180, %c0_181] : memref<1x32xf32, #tpu.memory_space<vmem>>, vector<1x32xf32>
    %532 = vector.broadcast %531 : vector<1x32xf32> to vector<2x32xf32>
    %533 = arith.addf %530, %532 : vector<2x32xf32>
    %534 = arith.mulf %520, %533 : vector<2x32xf32>
    %535 = arith.addf %529, %534 : vector<2x32xf32>
    %536 = math.tanh %535 : vector<2x32xf32>
    %cst_182 = arith.constant 1.000000e+00 : f32
    %537 = vector.broadcast %cst_182 : f32 to vector<2x32xf32>
    %538 = arith.subf %537, %528 : vector<2x32xf32>
    %539 = arith.mulf %538, %536 : vector<2x32xf32>
    %540 = arith.mulf %528, %477 : vector<2x32xf32>
    %541 = arith.addf %539, %540 : vector<2x32xf32>
    %c0_183 = arith.constant 0 : index
    %c0_184 = arith.constant 0 : index
    %542 = vector.load %arg11[%c0_183, %c0_184] : memref<32x32xf32, #tpu.memory_space<vmem>>, vector<32x32xf32>
    %cst_185 = arith.constant dense<0.000000e+00> : vector<2x32xf32>
    %543 = tpu.matmul %510, %542, %cst_185 {dimension_numbers = #tpu.dot_dimension_numbers<[1], [0], [0], [1], [0, 0, 1, 1], [], []>} : vector<2x32xf32>, vector<32x32xf32>, vector<2x32xf32> -> vector<2x32xf32>
    %c0_186 = arith.constant 0 : index
    %c0_187 = arith.constant 0 : index
    %544 = vector.load %arg12[%c0_186, %c0_187] : memref<32x32xf32, #tpu.memory_space<vmem>>, vector<32x32xf32>
    %cst_188 = arith.constant dense<0.000000e+00> : vector<2x32xf32>
    %545 = tpu.matmul %541, %544, %cst_188 {dimension_numbers = #tpu.dot_dimension_numbers<[1], [0], [0], [1], [0, 0, 1, 1], [], []>} : vector<2x32xf32>, vector<32x32xf32>, vector<2x32xf32> -> vector<2x32xf32>
    %546 = arith.addf %543, %545 : vector<2x32xf32>
    %c0_189 = arith.constant 0 : index
    %c0_190 = arith.constant 0 : index
    %547 = vector.load %arg13[%c0_189, %c0_190] : memref<1x32xf32, #tpu.memory_space<vmem>>, vector<1x32xf32>
    %548 = vector.broadcast %547 : vector<1x32xf32> to vector<2x32xf32>
    %549 = arith.addf %546, %548 : vector<2x32xf32>
    %c0_191 = arith.constant 0 : index
    %c0_192 = arith.constant 0 : index
    %550 = vector.load %arg23[%c0_191, %c0_192] : memref<16x96xf32, #tpu.memory_space<vmem>>, vector<2x96xf32>
    %c0_193 = arith.constant 0 : index
    %c0_194 = arith.constant 0 : index
    %551 = vector.load %arg15[%c0_193, %c0_194] : memref<32x96xf32, #tpu.memory_space<vmem>>, vector<32x96xf32>
    %cst_195 = arith.constant dense<0.000000e+00> : vector<2x96xf32>
    %552 = tpu.matmul %549, %551, %cst_195 {dimension_numbers = #tpu.dot_dimension_numbers<[1], [0], [0], [1], [0, 0, 1, 1], [], []>} : vector<2x32xf32>, vector<32x96xf32>, vector<2x96xf32> -> vector<2x96xf32>
    %553 = vector.extract_strided_slice %550 {offsets = [0, 0], sizes = [2, 32], strides = [1, 1]} : vector<2x96xf32> to vector<2x32xf32>
    %554 = vector.extract_strided_slice %552 {offsets = [0, 0], sizes = [2, 32], strides = [1, 1]} : vector<2x96xf32> to vector<2x32xf32>
    %555 = arith.addf %553, %554 : vector<2x32xf32>
    %556 = arith.negf %555 : vector<2x32xf32>
    %557 = math.exp %556 : vector<2x32xf32>
    %cst_196 = arith.constant 1.000000e+00 : f32
    %558 = vector.broadcast %cst_196 : f32 to vector<2x32xf32>
    %559 = arith.addf %558, %557 : vector<2x32xf32>
    %560 = arith.divf %558, %559 : vector<2x32xf32>
    %561 = vector.extract_strided_slice %550 {offsets = [0, 32], sizes = [2, 32], strides = [1, 1]} : vector<2x96xf32> to vector<2x32xf32>
    %562 = vector.extract_strided_slice %552 {offsets = [0, 32], sizes = [2, 32], strides = [1, 1]} : vector<2x96xf32> to vector<2x32xf32>
    %563 = arith.addf %561, %562 : vector<2x32xf32>
    %564 = arith.negf %563 : vector<2x32xf32>
    %565 = math.exp %564 : vector<2x32xf32>
    %cst_197 = arith.constant 1.000000e+00 : f32
    %566 = vector.broadcast %cst_197 : f32 to vector<2x32xf32>
    %567 = arith.addf %566, %565 : vector<2x32xf32>
    %568 = arith.divf %566, %567 : vector<2x32xf32>
    %569 = vector.extract_strided_slice %550 {offsets = [0, 64], sizes = [2, 32], strides = [1, 1]} : vector<2x96xf32> to vector<2x32xf32>
    %570 = vector.extract_strided_slice %552 {offsets = [0, 64], sizes = [2, 32], strides = [1, 1]} : vector<2x96xf32> to vector<2x32xf32>
    %c0_198 = arith.constant 0 : index
    %c0_199 = arith.constant 0 : index
    %571 = vector.load %arg17[%c0_198, %c0_199] : memref<1x32xf32, #tpu.memory_space<vmem>>, vector<1x32xf32>
    %572 = vector.broadcast %571 : vector<1x32xf32> to vector<2x32xf32>
    %573 = arith.addf %570, %572 : vector<2x32xf32>
    %574 = arith.mulf %560, %573 : vector<2x32xf32>
    %575 = arith.addf %569, %574 : vector<2x32xf32>
    %576 = math.tanh %575 : vector<2x32xf32>
    %cst_200 = arith.constant 1.000000e+00 : f32
    %577 = vector.broadcast %cst_200 : f32 to vector<2x32xf32>
    %578 = arith.subf %577, %568 : vector<2x32xf32>
    %579 = arith.mulf %578, %576 : vector<2x32xf32>
    %580 = arith.mulf %568, %549 : vector<2x32xf32>
    %581 = arith.addf %579, %580 : vector<2x32xf32>
    %c0_201 = arith.constant 0 : index
    %c0_202 = arith.constant 0 : index
    %582 = vector.load %arg24[%c0_201, %c0_202] : memref<16x32xf32, #tpu.memory_space<vmem>>, vector<2x32xf32>
    tpu.vector_store %arg24[%c0_201, %c0_202], %581 {strides = array<i32>} : memref<16x32xf32, #tpu.memory_space<vmem>>, vector<2x32xf32>,
    %c2_203 = arith.constant 2 : index
    %c0_204 = arith.constant 0 : index
    %583 = vector.load %arg23[%c2_203, %c0_204] : memref<16x96xf32, #tpu.memory_space<vmem>>, vector<2x96xf32>
    %c0_205 = arith.constant 0 : index
    %c0_206 = arith.constant 0 : index
    %584 = vector.load %arg15[%c0_205, %c0_206] : memref<32x96xf32, #tpu.memory_space<vmem>>, vector<32x96xf32>
    %cst_207 = arith.constant dense<0.000000e+00> : vector<2x96xf32>
    %585 = tpu.matmul %581, %584, %cst_207 {dimension_numbers = #tpu.dot_dimension_numbers<[1], [0], [0], [1], [0, 0, 1, 1], [], []>} : vector<2x32xf32>, vector<32x96xf32>, vector<2x96xf32> -> vector<2x96xf32>
    %586 = vector.extract_strided_slice %583 {offsets = [0, 0], sizes = [2, 32], strides = [1, 1]} : vector<2x96xf32> to vector<2x32xf32>
    %587 = vector.extract_strided_slice %585 {offsets = [0, 0], sizes = [2, 32], strides = [1, 1]} : vector<2x96xf32> to vector<2x32xf32>
    %588 = arith.addf %586, %587 : vector<2x32xf32>
    %589 = arith.negf %588 : vector<2x32xf32>
    %590 = math.exp %589 : vector<2x32xf32>
    %cst_208 = arith.constant 1.000000e+00 : f32
    %591 = vector.broadcast %cst_208 : f32 to vector<2x32xf32>
    %592 = arith.addf %591, %590 : vector<2x32xf32>
    %593 = arith.divf %591, %592 : vector<2x32xf32>
    %594 = vector.extract_strided_slice %583 {offsets = [0, 32], sizes = [2, 32], strides = [1, 1]} : vector<2x96xf32> to vector<2x32xf32>
    %595 = vector.extract_strided_slice %585 {offsets = [0, 32], sizes = [2, 32], strides = [1, 1]} : vector<2x96xf32> to vector<2x32xf32>
    %596 = arith.addf %594, %595 : vector<2x32xf32>
    %597 = arith.negf %596 : vector<2x32xf32>
    %598 = math.exp %597 : vector<2x32xf32>
    %cst_209 = arith.constant 1.000000e+00 : f32
    %599 = vector.broadcast %cst_209 : f32 to vector<2x32xf32>
    %600 = arith.addf %599, %598 : vector<2x32xf32>
    %601 = arith.divf %599, %600 : vector<2x32xf32>
    %602 = vector.extract_strided_slice %583 {offsets = [0, 64], sizes = [2, 32], strides = [1, 1]} : vector<2x96xf32> to vector<2x32xf32>
    %603 = vector.extract_strided_slice %585 {offsets = [0, 64], sizes = [2, 32], strides = [1, 1]} : vector<2x96xf32> to vector<2x32xf32>
    %c0_210 = arith.constant 0 : index
    %c0_211 = arith.constant 0 : index
    %604 = vector.load %arg17[%c0_210, %c0_211] : memref<1x32xf32, #tpu.memory_space<vmem>>, vector<1x32xf32>
    %605 = vector.broadcast %604 : vector<1x32xf32> to vector<2x32xf32>
    %606 = arith.addf %603, %605 : vector<2x32xf32>
    %607 = arith.mulf %593, %606 : vector<2x32xf32>
    %608 = arith.addf %602, %607 : vector<2x32xf32>
    %609 = math.tanh %608 : vector<2x32xf32>
    %cst_212 = arith.constant 1.000000e+00 : f32
    %610 = vector.broadcast %cst_212 : f32 to vector<2x32xf32>
    %611 = arith.subf %610, %601 : vector<2x32xf32>
    %612 = arith.mulf %611, %609 : vector<2x32xf32>
    %613 = arith.mulf %601, %581 : vector<2x32xf32>
    %614 = arith.addf %612, %613 : vector<2x32xf32>
    %c2_213 = arith.constant 2 : index
    %c0_214 = arith.constant 0 : index
    %615 = vector.load %arg24[%c2_213, %c0_214] : memref<16x32xf32, #tpu.memory_space<vmem>>, vector<2x32xf32>
    tpu.vector_store %arg24[%c2_213, %c0_214], %614 {strides = array<i32>} : memref<16x32xf32, #tpu.memory_space<vmem>>, vector<2x32xf32>,
    %c4_215 = arith.constant 4 : index
    %c0_216 = arith.constant 0 : index
    %616 = vector.load %arg23[%c4_215, %c0_216] : memref<16x96xf32, #tpu.memory_space<vmem>>, vector<2x96xf32>
    %c0_217 = arith.constant 0 : index
    %c0_218 = arith.constant 0 : index
    %617 = vector.load %arg15[%c0_217, %c0_218] : memref<32x96xf32, #tpu.memory_space<vmem>>, vector<32x96xf32>
    %cst_219 = arith.constant dense<0.000000e+00> : vector<2x96xf32>
    %618 = tpu.matmul %614, %617, %cst_219 {dimension_numbers = #tpu.dot_dimension_numbers<[1], [0], [0], [1], [0, 0, 1, 1], [], []>} : vector<2x32xf32>, vector<32x96xf32>, vector<2x96xf32> -> vector<2x96xf32>
    %619 = vector.extract_strided_slice %616 {offsets = [0, 0], sizes = [2, 32], strides = [1, 1]} : vector<2x96xf32> to vector<2x32xf32>
    %620 = vector.extract_strided_slice %618 {offsets = [0, 0], sizes = [2, 32], strides = [1, 1]} : vector<2x96xf32> to vector<2x32xf32>
    %621 = arith.addf %619, %620 : vector<2x32xf32>
    %622 = arith.negf %621 : vector<2x32xf32>
    %623 = math.exp %622 : vector<2x32xf32>
    %cst_220 = arith.constant 1.000000e+00 : f32
    %624 = vector.broadcast %cst_220 : f32 to vector<2x32xf32>
    %625 = arith.addf %624, %623 : vector<2x32xf32>
    %626 = arith.divf %624, %625 : vector<2x32xf32>
    %627 = vector.extract_strided_slice %616 {offsets = [0, 32], sizes = [2, 32], strides = [1, 1]} : vector<2x96xf32> to vector<2x32xf32>
    %628 = vector.extract_strided_slice %618 {offsets = [0, 32], sizes = [2, 32], strides = [1, 1]} : vector<2x96xf32> to vector<2x32xf32>
    %629 = arith.addf %627, %628 : vector<2x32xf32>
    %630 = arith.negf %629 : vector<2x32xf32>
    %631 = math.exp %630 : vector<2x32xf32>
    %cst_221 = arith.constant 1.000000e+00 : f32
    %632 = vector.broadcast %cst_221 : f32 to vector<2x32xf32>
    %633 = arith.addf %632, %631 : vector<2x32xf32>
    %634 = arith.divf %632, %633 : vector<2x32xf32>
    %635 = vector.extract_strided_slice %616 {offsets = [0, 64], sizes = [2, 32], strides = [1, 1]} : vector<2x96xf32> to vector<2x32xf32>
    %636 = vector.extract_strided_slice %618 {offsets = [0, 64], sizes = [2, 32], strides = [1, 1]} : vector<2x96xf32> to vector<2x32xf32>
    %c0_222 = arith.constant 0 : index
    %c0_223 = arith.constant 0 : index
    %637 = vector.load %arg17[%c0_222, %c0_223] : memref<1x32xf32, #tpu.memory_space<vmem>>, vector<1x32xf32>
    %638 = vector.broadcast %637 : vector<1x32xf32> to vector<2x32xf32>
    %639 = arith.addf %636, %638 : vector<2x32xf32>
    %640 = arith.mulf %626, %639 : vector<2x32xf32>
    %641 = arith.addf %635, %640 : vector<2x32xf32>
    %642 = math.tanh %641 : vector<2x32xf32>
    %cst_224 = arith.constant 1.000000e+00 : f32
    %643 = vector.broadcast %cst_224 : f32 to vector<2x32xf32>
    %644 = arith.subf %643, %634 : vector<2x32xf32>
    %645 = arith.mulf %644, %642 : vector<2x32xf32>
    %646 = arith.mulf %634, %614 : vector<2x32xf32>
    %647 = arith.addf %645, %646 : vector<2x32xf32>
    %c4_225 = arith.constant 4 : index
    %c0_226 = arith.constant 0 : index
    %648 = vector.load %arg24[%c4_225, %c0_226] : memref<16x32xf32, #tpu.memory_space<vmem>>, vector<2x32xf32>
    tpu.vector_store %arg24[%c4_225, %c0_226], %647 {strides = array<i32>} : memref<16x32xf32, #tpu.memory_space<vmem>>, vector<2x32xf32>,
    %c6_227 = arith.constant 6 : index
    %c0_228 = arith.constant 0 : index
    %649 = vector.load %arg23[%c6_227, %c0_228] : memref<16x96xf32, #tpu.memory_space<vmem>>, vector<2x96xf32>
    %c0_229 = arith.constant 0 : index
    %c0_230 = arith.constant 0 : index
    %650 = vector.load %arg15[%c0_229, %c0_230] : memref<32x96xf32, #tpu.memory_space<vmem>>, vector<32x96xf32>
    %cst_231 = arith.constant dense<0.000000e+00> : vector<2x96xf32>
    %651 = tpu.matmul %647, %650, %cst_231 {dimension_numbers = #tpu.dot_dimension_numbers<[1], [0], [0], [1], [0, 0, 1, 1], [], []>} : vector<2x32xf32>, vector<32x96xf32>, vector<2x96xf32> -> vector<2x96xf32>
    %652 = vector.extract_strided_slice %649 {offsets = [0, 0], sizes = [2, 32], strides = [1, 1]} : vector<2x96xf32> to vector<2x32xf32>
    %653 = vector.extract_strided_slice %651 {offsets = [0, 0], sizes = [2, 32], strides = [1, 1]} : vector<2x96xf32> to vector<2x32xf32>
    %654 = arith.addf %652, %653 : vector<2x32xf32>
    %655 = arith.negf %654 : vector<2x32xf32>
    %656 = math.exp %655 : vector<2x32xf32>
    %cst_232 = arith.constant 1.000000e+00 : f32
    %657 = vector.broadcast %cst_232 : f32 to vector<2x32xf32>
    %658 = arith.addf %657, %656 : vector<2x32xf32>
    %659 = arith.divf %657, %658 : vector<2x32xf32>
    %660 = vector.extract_strided_slice %649 {offsets = [0, 32], sizes = [2, 32], strides = [1, 1]} : vector<2x96xf32> to vector<2x32xf32>
    %661 = vector.extract_strided_slice %651 {offsets = [0, 32], sizes = [2, 32], strides = [1, 1]} : vector<2x96xf32> to vector<2x32xf32>
    %662 = arith.addf %660, %661 : vector<2x32xf32>
    %663 = arith.negf %662 : vector<2x32xf32>
    %664 = math.exp %663 : vector<2x32xf32>
    %cst_233 = arith.constant 1.000000e+00 : f32
    %665 = vector.broadcast %cst_233 : f32 to vector<2x32xf32>
    %666 = arith.addf %665, %664 : vector<2x32xf32>
    %667 = arith.divf %665, %666 : vector<2x32xf32>
    %668 = vector.extract_strided_slice %649 {offsets = [0, 64], sizes = [2, 32], strides = [1, 1]} : vector<2x96xf32> to vector<2x32xf32>
    %669 = vector.extract_strided_slice %651 {offsets = [0, 64], sizes = [2, 32], strides = [1, 1]} : vector<2x96xf32> to vector<2x32xf32>
    %c0_234 = arith.constant 0 : index
    %c0_235 = arith.constant 0 : index
    %670 = vector.load %arg17[%c0_234, %c0_235] : memref<1x32xf32, #tpu.memory_space<vmem>>, vector<1x32xf32>
    %671 = vector.broadcast %670 : vector<1x32xf32> to vector<2x32xf32>
    %672 = arith.addf %669, %671 : vector<2x32xf32>
    %673 = arith.mulf %659, %672 : vector<2x32xf32>
    %674 = arith.addf %668, %673 : vector<2x32xf32>
    %675 = math.tanh %674 : vector<2x32xf32>
    %cst_236 = arith.constant 1.000000e+00 : f32
    %676 = vector.broadcast %cst_236 : f32 to vector<2x32xf32>
    %677 = arith.subf %676, %667 : vector<2x32xf32>
    %678 = arith.mulf %677, %675 : vector<2x32xf32>
    %679 = arith.mulf %667, %647 : vector<2x32xf32>
    %680 = arith.addf %678, %679 : vector<2x32xf32>
    %c6_237 = arith.constant 6 : index
    %c0_238 = arith.constant 0 : index
    %681 = vector.load %arg24[%c6_237, %c0_238] : memref<16x32xf32, #tpu.memory_space<vmem>>, vector<2x32xf32>
    tpu.vector_store %arg24[%c6_237, %c0_238], %680 {strides = array<i32>} : memref<16x32xf32, #tpu.memory_space<vmem>>, vector<2x32xf32>,
    %c8_239 = arith.constant 8 : index
    %c0_240 = arith.constant 0 : index
    %682 = vector.load %arg23[%c8_239, %c0_240] : memref<16x96xf32, #tpu.memory_space<vmem>>, vector<2x96xf32>
    %c0_241 = arith.constant 0 : index
    %c0_242 = arith.constant 0 : index
    %683 = vector.load %arg15[%c0_241, %c0_242] : memref<32x96xf32, #tpu.memory_space<vmem>>, vector<32x96xf32>
    %cst_243 = arith.constant dense<0.000000e+00> : vector<2x96xf32>
    %684 = tpu.matmul %680, %683, %cst_243 {dimension_numbers = #tpu.dot_dimension_numbers<[1], [0], [0], [1], [0, 0, 1, 1], [], []>} : vector<2x32xf32>, vector<32x96xf32>, vector<2x96xf32> -> vector<2x96xf32>
    %685 = vector.extract_strided_slice %682 {offsets = [0, 0], sizes = [2, 32], strides = [1, 1]} : vector<2x96xf32> to vector<2x32xf32>
    %686 = vector.extract_strided_slice %684 {offsets = [0, 0], sizes = [2, 32], strides = [1, 1]} : vector<2x96xf32> to vector<2x32xf32>
    %687 = arith.addf %685, %686 : vector<2x32xf32>
    %688 = arith.negf %687 : vector<2x32xf32>
    %689 = math.exp %688 : vector<2x32xf32>
    %cst_244 = arith.constant 1.000000e+00 : f32
    %690 = vector.broadcast %cst_244 : f32 to vector<2x32xf32>
    %691 = arith.addf %690, %689 : vector<2x32xf32>
    %692 = arith.divf %690, %691 : vector<2x32xf32>
    %693 = vector.extract_strided_slice %682 {offsets = [0, 32], sizes = [2, 32], strides = [1, 1]} : vector<2x96xf32> to vector<2x32xf32>
    %694 = vector.extract_strided_slice %684 {offsets = [0, 32], sizes = [2, 32], strides = [1, 1]} : vector<2x96xf32> to vector<2x32xf32>
    %695 = arith.addf %693, %694 : vector<2x32xf32>
    %696 = arith.negf %695 : vector<2x32xf32>
    %697 = math.exp %696 : vector<2x32xf32>
    %cst_245 = arith.constant 1.000000e+00 : f32
    %698 = vector.broadcast %cst_245 : f32 to vector<2x32xf32>
    %699 = arith.addf %698, %697 : vector<2x32xf32>
    %700 = arith.divf %698, %699 : vector<2x32xf32>
    %701 = vector.extract_strided_slice %682 {offsets = [0, 64], sizes = [2, 32], strides = [1, 1]} : vector<2x96xf32> to vector<2x32xf32>
    %702 = vector.extract_strided_slice %684 {offsets = [0, 64], sizes = [2, 32], strides = [1, 1]} : vector<2x96xf32> to vector<2x32xf32>
    %c0_246 = arith.constant 0 : index
    %c0_247 = arith.constant 0 : index
    %703 = vector.load %arg17[%c0_246, %c0_247] : memref<1x32xf32, #tpu.memory_space<vmem>>, vector<1x32xf32>
    %704 = vector.broadcast %703 : vector<1x32xf32> to vector<2x32xf32>
    %705 = arith.addf %702, %704 : vector<2x32xf32>
    %706 = arith.mulf %692, %705 : vector<2x32xf32>
    %707 = arith.addf %701, %706 : vector<2x32xf32>
    %708 = math.tanh %707 : vector<2x32xf32>
    %cst_248 = arith.constant 1.000000e+00 : f32
    %709 = vector.broadcast %cst_248 : f32 to vector<2x32xf32>
    %710 = arith.subf %709, %700 : vector<2x32xf32>
    %711 = arith.mulf %710, %708 : vector<2x32xf32>
    %712 = arith.mulf %700, %680 : vector<2x32xf32>
    %713 = arith.addf %711, %712 : vector<2x32xf32>
    %c8_249 = arith.constant 8 : index
    %c0_250 = arith.constant 0 : index
    %714 = vector.load %arg24[%c8_249, %c0_250] : memref<16x32xf32, #tpu.memory_space<vmem>>, vector<2x32xf32>
    tpu.vector_store %arg24[%c8_249, %c0_250], %713 {strides = array<i32>} : memref<16x32xf32, #tpu.memory_space<vmem>>, vector<2x32xf32>,
    %c10_251 = arith.constant 10 : index
    %c0_252 = arith.constant 0 : index
    %715 = vector.load %arg23[%c10_251, %c0_252] : memref<16x96xf32, #tpu.memory_space<vmem>>, vector<2x96xf32>
    %c0_253 = arith.constant 0 : index
    %c0_254 = arith.constant 0 : index
    %716 = vector.load %arg15[%c0_253, %c0_254] : memref<32x96xf32, #tpu.memory_space<vmem>>, vector<32x96xf32>
    %cst_255 = arith.constant dense<0.000000e+00> : vector<2x96xf32>
    %717 = tpu.matmul %713, %716, %cst_255 {dimension_numbers = #tpu.dot_dimension_numbers<[1], [0], [0], [1], [0, 0, 1, 1], [], []>} : vector<2x32xf32>, vector<32x96xf32>, vector<2x96xf32> -> vector<2x96xf32>
    %718 = vector.extract_strided_slice %715 {offsets = [0, 0], sizes = [2, 32], strides = [1, 1]} : vector<2x96xf32> to vector<2x32xf32>
    %719 = vector.extract_strided_slice %717 {offsets = [0, 0], sizes = [2, 32], strides = [1, 1]} : vector<2x96xf32> to vector<2x32xf32>
    %720 = arith.addf %718, %719 : vector<2x32xf32>
    %721 = arith.negf %720 : vector<2x32xf32>
    %722 = math.exp %721 : vector<2x32xf32>
    %cst_256 = arith.constant 1.000000e+00 : f32
    %723 = vector.broadcast %cst_256 : f32 to vector<2x32xf32>
    %724 = arith.addf %723, %722 : vector<2x32xf32>
    %725 = arith.divf %723, %724 : vector<2x32xf32>
    %726 = vector.extract_strided_slice %715 {offsets = [0, 32], sizes = [2, 32], strides = [1, 1]} : vector<2x96xf32> to vector<2x32xf32>
    %727 = vector.extract_strided_slice %717 {offsets = [0, 32], sizes = [2, 32], strides = [1, 1]} : vector<2x96xf32> to vector<2x32xf32>
    %728 = arith.addf %726, %727 : vector<2x32xf32>
    %729 = arith.negf %728 : vector<2x32xf32>
    %730 = math.exp %729 : vector<2x32xf32>
    %cst_257 = arith.constant 1.000000e+00 : f32
    %731 = vector.broadcast %cst_257 : f32 to vector<2x32xf32>
    %732 = arith.addf %731, %730 : vector<2x32xf32>
    %733 = arith.divf %731, %732 : vector<2x32xf32>
    %734 = vector.extract_strided_slice %715 {offsets = [0, 64], sizes = [2, 32], strides = [1, 1]} : vector<2x96xf32> to vector<2x32xf32>
    %735 = vector.extract_strided_slice %717 {offsets = [0, 64], sizes = [2, 32], strides = [1, 1]} : vector<2x96xf32> to vector<2x32xf32>
    %c0_258 = arith.constant 0 : index
    %c0_259 = arith.constant 0 : index
    %736 = vector.load %arg17[%c0_258, %c0_259] : memref<1x32xf32, #tpu.memory_space<vmem>>, vector<1x32xf32>
    %737 = vector.broadcast %736 : vector<1x32xf32> to vector<2x32xf32>
    %738 = arith.addf %735, %737 : vector<2x32xf32>
    %739 = arith.mulf %725, %738 : vector<2x32xf32>
    %740 = arith.addf %734, %739 : vector<2x32xf32>
    %741 = math.tanh %740 : vector<2x32xf32>
    %cst_260 = arith.constant 1.000000e+00 : f32
    %742 = vector.broadcast %cst_260 : f32 to vector<2x32xf32>
    %743 = arith.subf %742, %733 : vector<2x32xf32>
    %744 = arith.mulf %743, %741 : vector<2x32xf32>
    %745 = arith.mulf %733, %713 : vector<2x32xf32>
    %746 = arith.addf %744, %745 : vector<2x32xf32>
    %c10_261 = arith.constant 10 : index
    %c0_262 = arith.constant 0 : index
    %747 = vector.load %arg24[%c10_261, %c0_262] : memref<16x32xf32, #tpu.memory_space<vmem>>, vector<2x32xf32>
    tpu.vector_store %arg24[%c10_261, %c0_262], %746 {strides = array<i32>} : memref<16x32xf32, #tpu.memory_space<vmem>>, vector<2x32xf32>,
    %c12_263 = arith.constant 12 : index
    %c0_264 = arith.constant 0 : index
    %748 = vector.load %arg23[%c12_263, %c0_264] : memref<16x96xf32, #tpu.memory_space<vmem>>, vector<2x96xf32>
    %c0_265 = arith.constant 0 : index
    %c0_266 = arith.constant 0 : index
    %749 = vector.load %arg15[%c0_265, %c0_266] : memref<32x96xf32, #tpu.memory_space<vmem>>, vector<32x96xf32>
    %cst_267 = arith.constant dense<0.000000e+00> : vector<2x96xf32>
    %750 = tpu.matmul %746, %749, %cst_267 {dimension_numbers = #tpu.dot_dimension_numbers<[1], [0], [0], [1], [0, 0, 1, 1], [], []>} : vector<2x32xf32>, vector<32x96xf32>, vector<2x96xf32> -> vector<2x96xf32>
    %751 = vector.extract_strided_slice %748 {offsets = [0, 0], sizes = [2, 32], strides = [1, 1]} : vector<2x96xf32> to vector<2x32xf32>
    %752 = vector.extract_strided_slice %750 {offsets = [0, 0], sizes = [2, 32], strides = [1, 1]} : vector<2x96xf32> to vector<2x32xf32>
    %753 = arith.addf %751, %752 : vector<2x32xf32>
    %754 = arith.negf %753 : vector<2x32xf32>
    %755 = math.exp %754 : vector<2x32xf32>
    %cst_268 = arith.constant 1.000000e+00 : f32
    %756 = vector.broadcast %cst_268 : f32 to vector<2x32xf32>
    %757 = arith.addf %756, %755 : vector<2x32xf32>
    %758 = arith.divf %756, %757 : vector<2x32xf32>
    %759 = vector.extract_strided_slice %748 {offsets = [0, 32], sizes = [2, 32], strides = [1, 1]} : vector<2x96xf32> to vector<2x32xf32>
    %760 = vector.extract_strided_slice %750 {offsets = [0, 32], sizes = [2, 32], strides = [1, 1]} : vector<2x96xf32> to vector<2x32xf32>
    %761 = arith.addf %759, %760 : vector<2x32xf32>
    %762 = arith.negf %761 : vector<2x32xf32>
    %763 = math.exp %762 : vector<2x32xf32>
    %cst_269 = arith.constant 1.000000e+00 : f32
    %764 = vector.broadcast %cst_269 : f32 to vector<2x32xf32>
    %765 = arith.addf %764, %763 : vector<2x32xf32>
    %766 = arith.divf %764, %765 : vector<2x32xf32>
    %767 = vector.extract_strided_slice %748 {offsets = [0, 64], sizes = [2, 32], strides = [1, 1]} : vector<2x96xf32> to vector<2x32xf32>
    %768 = vector.extract_strided_slice %750 {offsets = [0, 64], sizes = [2, 32], strides = [1, 1]} : vector<2x96xf32> to vector<2x32xf32>
    %c0_270 = arith.constant 0 : index
    %c0_271 = arith.constant 0 : index
    %769 = vector.load %arg17[%c0_270, %c0_271] : memref<1x32xf32, #tpu.memory_space<vmem>>, vector<1x32xf32>
    %770 = vector.broadcast %769 : vector<1x32xf32> to vector<2x32xf32>
    %771 = arith.addf %768, %770 : vector<2x32xf32>
    %772 = arith.mulf %758, %771 : vector<2x32xf32>
    %773 = arith.addf %767, %772 : vector<2x32xf32>
    %774 = math.tanh %773 : vector<2x32xf32>
    %cst_272 = arith.constant 1.000000e+00 : f32
    %775 = vector.broadcast %cst_272 : f32 to vector<2x32xf32>
    %776 = arith.subf %775, %766 : vector<2x32xf32>
    %777 = arith.mulf %776, %774 : vector<2x32xf32>
    %778 = arith.mulf %766, %746 : vector<2x32xf32>
    %779 = arith.addf %777, %778 : vector<2x32xf32>
    %c12_273 = arith.constant 12 : index
    %c0_274 = arith.constant 0 : index
    %780 = vector.load %arg24[%c12_273, %c0_274] : memref<16x32xf32, #tpu.memory_space<vmem>>, vector<2x32xf32>
    tpu.vector_store %arg24[%c12_273, %c0_274], %779 {strides = array<i32>} : memref<16x32xf32, #tpu.memory_space<vmem>>, vector<2x32xf32>,
    %c14_275 = arith.constant 14 : index
    %c0_276 = arith.constant 0 : index
    %781 = vector.load %arg23[%c14_275, %c0_276] : memref<16x96xf32, #tpu.memory_space<vmem>>, vector<2x96xf32>
    %c0_277 = arith.constant 0 : index
    %c0_278 = arith.constant 0 : index
    %782 = vector.load %arg15[%c0_277, %c0_278] : memref<32x96xf32, #tpu.memory_space<vmem>>, vector<32x96xf32>
    %cst_279 = arith.constant dense<0.000000e+00> : vector<2x96xf32>
    %783 = tpu.matmul %779, %782, %cst_279 {dimension_numbers = #tpu.dot_dimension_numbers<[1], [0], [0], [1], [0, 0, 1, 1], [], []>} : vector<2x32xf32>, vector<32x96xf32>, vector<2x96xf32> -> vector<2x96xf32>
    %784 = vector.extract_strided_slice %781 {offsets = [0, 0], sizes = [2, 32], strides = [1, 1]} : vector<2x96xf32> to vector<2x32xf32>
    %785 = vector.extract_strided_slice %783 {offsets = [0, 0], sizes = [2, 32], strides = [1, 1]} : vector<2x96xf32> to vector<2x32xf32>
    %786 = arith.addf %784, %785 : vector<2x32xf32>
    %787 = arith.negf %786 : vector<2x32xf32>
    %788 = math.exp %787 : vector<2x32xf32>
    %cst_280 = arith.constant 1.000000e+00 : f32
    %789 = vector.broadcast %cst_280 : f32 to vector<2x32xf32>
    %790 = arith.addf %789, %788 : vector<2x32xf32>
    %791 = arith.divf %789, %790 : vector<2x32xf32>
    %792 = vector.extract_strided_slice %781 {offsets = [0, 32], sizes = [2, 32], strides = [1, 1]} : vector<2x96xf32> to vector<2x32xf32>
    %793 = vector.extract_strided_slice %783 {offsets = [0, 32], sizes = [2, 32], strides = [1, 1]} : vector<2x96xf32> to vector<2x32xf32>
    %794 = arith.addf %792, %793 : vector<2x32xf32>
    %795 = arith.negf %794 : vector<2x32xf32>
    %796 = math.exp %795 : vector<2x32xf32>
    %cst_281 = arith.constant 1.000000e+00 : f32
    %797 = vector.broadcast %cst_281 : f32 to vector<2x32xf32>
    %798 = arith.addf %797, %796 : vector<2x32xf32>
    %799 = arith.divf %797, %798 : vector<2x32xf32>
    %800 = vector.extract_strided_slice %781 {offsets = [0, 64], sizes = [2, 32], strides = [1, 1]} : vector<2x96xf32> to vector<2x32xf32>
    %801 = vector.extract_strided_slice %783 {offsets = [0, 64], sizes = [2, 32], strides = [1, 1]} : vector<2x96xf32> to vector<2x32xf32>
    %c0_282 = arith.constant 0 : index
    %c0_283 = arith.constant 0 : index
    %802 = vector.load %arg17[%c0_282, %c0_283] : memref<1x32xf32, #tpu.memory_space<vmem>>, vector<1x32xf32>
    %803 = vector.broadcast %802 : vector<1x32xf32> to vector<2x32xf32>
    %804 = arith.addf %801, %803 : vector<2x32xf32>
    %805 = arith.mulf %791, %804 : vector<2x32xf32>
    %806 = arith.addf %800, %805 : vector<2x32xf32>
    %807 = math.tanh %806 : vector<2x32xf32>
    %cst_284 = arith.constant 1.000000e+00 : f32
    %808 = vector.broadcast %cst_284 : f32 to vector<2x32xf32>
    %809 = arith.subf %808, %799 : vector<2x32xf32>
    %810 = arith.mulf %809, %807 : vector<2x32xf32>
    %811 = arith.mulf %799, %779 : vector<2x32xf32>
    %812 = arith.addf %810, %811 : vector<2x32xf32>
    %c14_285 = arith.constant 14 : index
    %c0_286 = arith.constant 0 : index
    %813 = vector.load %arg24[%c14_285, %c0_286] : memref<16x32xf32, #tpu.memory_space<vmem>>, vector<2x32xf32>
    tpu.vector_store %arg24[%c14_285, %c0_286], %812 {strides = array<i32>} : memref<16x32xf32, #tpu.memory_space<vmem>>, vector<2x32xf32>,
    %c0_287 = arith.constant 0 : index
    %c0_288 = arith.constant 0 : index
    %814 = vector.load %arg24[%c0_287, %c0_288] : memref<16x32xf32, #tpu.memory_space<vmem>>, vector<16x32xf32>
    %c0_289 = arith.constant 0 : index
    %c0_290 = arith.constant 0 : index
    %815 = vector.load %arg18[%c0_289, %c0_290] : memref<32x16xf32, #tpu.memory_space<vmem>>, vector<32x16xf32>
    %cst_291 = arith.constant dense<0.000000e+00> : vector<16x16xf32>
    %816 = tpu.matmul %814, %815, %cst_291 {dimension_numbers = #tpu.dot_dimension_numbers<[1], [0], [0], [1], [0, 0, 1, 1], [], []>} : vector<16x32xf32>, vector<32x16xf32>, vector<16x16xf32> -> vector<16x16xf32>
    %c0_292 = arith.constant 0 : index
    %c0_293 = arith.constant 0 : index
    %817 = vector.load %arg19[%c0_292, %c0_293] : memref<1x16xf32, #tpu.memory_space<vmem>>, vector<1x16xf32>
    %818 = vector.broadcast %817 : vector<1x16xf32> to vector<16x16xf32>
    %819 = arith.addf %816, %818 : vector<16x16xf32>
    %c0_294 = arith.constant 0 : index
    %c0_295 = arith.constant 0 : index
    %820 = vector.load %arg20[%c0_294, %c0_295] : memref<16x16xf32, #tpu.memory_space<vmem>>, vector<16x16xf32>
    tpu.vector_store %arg20[%c0_294, %c0_295], %819 {strides = array<i32>} : memref<16x16xf32, #tpu.memory_space<vmem>>, vector<16x16xf32>,
    return
  }
}

</mosaic_0001>

<llo_original>
// kernel: soweli_forward.1
$region0: #{soweli_forward.1}
  #allocation0 [shape = 'u32[]', space=smem, size = 0x4, offset = 0x4, fixed_abs, tag = 'smem constant byte address 0x4 - core index']
  #allocation1 [shape = 'u32[72,128]{1,0:T(1,128)}', space=vmem, size = 0x9000, scoped, tag = 'internal scratch']
  #allocation2 [shape = 'f32[16,96]{1,0:T(8,128)}', space=vmem, size = 0x2000, scoped, tag = 'scratch operand']
  #allocation3 [shape = 'f32[16,96]{1,0:T(8,128)}', space=vmem, size = 0x2000, scoped, tag = 'scratch operand']
  #allocation4 [shape = 'f32[16,96]{1,0:T(8,128)}', space=vmem, size = 0x2000, scoped, tag = 'scratch operand']
  #allocation5 [shape = 'f32[16,32]{1,0:T(8,128)}', space=vmem, size = 0x2000, scoped, tag = 'scratch operand']
  %s0 = inlined_call_operand.vmem [shape: s32[16,1], index: 0, kind: input, shape index: {}]
  %s1 = inlined_call_operand.hbm [shape: f32[16,32], index: 1, kind: input, shape index: {}]
  %s2 = inlined_call_operand.hbm [shape: f32[16,32], index: 2, kind: input, shape index: {}]
  %s3 = inlined_call_operand.vmem [shape: f32[32,96], index: 3, kind: input, shape index: {}]
  %s4 = inlined_call_operand.vmem [shape: f32[32,96], index: 4, kind: input, shape index: {}]
  %s5 = inlined_call_operand.vmem [shape: f32[1,96], index: 5, kind: input, shape index: {}]
  %s6 = inlined_call_operand.vmem [shape: f32[1,32], index: 6, kind: input, shape index: {}]
  %s7 = inlined_call_operand.hbm [shape: f32[32,96], index: 7, kind: input, shape index: {}]
  %s8 = inlined_call_operand.hbm [shape: f32[32,96], index: 8, kind: input, shape index: {}]
  %s9 = inlined_call_operand.vmem [shape: f32[1,96], index: 9, kind: input, shape index: {}]
  %s10 = inlined_call_operand.hbm [shape: f32[1,32], index: 10, kind: input, shape index: {}]
  %s11 = inlined_call_operand.hbm [shape: f32[32,32], index: 11, kind: input, shape index: {}]
  %s12 = inlined_call_operand.hbm [shape: f32[32,32], index: 12, kind: input, shape index: {}]
  %s13 = inlined_call_operand.vmem [shape: f32[1,32], index: 13, kind: input, shape index: {}]
  %s14 = inlined_call_operand.hbm [shape: f32[32,96], index: 14, kind: input, shape index: {}]
  %s15 = inlined_call_operand.hbm [shape: f32[32,96], index: 15, kind: input, shape index: {}]
  %s16 = inlined_call_operand.hbm [shape: f32[1,96], index: 16, kind: input, shape index: {}]
  %s17 = inlined_call_operand.hbm [shape: f32[1,32], index: 17, kind: input, shape index: {}]
  %s18 = inlined_call_operand.vmem [shape: f32[32,16], index: 18, kind: input, shape index: {}]
  %s19 = inlined_call_operand.vmem [shape: f32[1,16], index: 19, kind: input, shape index: {}]
  %s20 = inlined_call_operand.hbm [shape: f32[16,16], index: 20, kind: output, shape index: {}]
  %s21 = sld [smem:[#allocation0]]
  $region134: #{soweli_forward.1} parent=0
    _
  %s23 = ssub.s32 1, %s21
  %s24 = scalar_select 0, %s23, %s21
  $region1: #{soweli_forward.1} parent=0
    #allocation6 [shape = 'u8[8192]{0}', space=vmem, size = 0x2000, scoped, tag = 'input window, operand 1, single buffered']
    #allocation7 [shape = 's32[1]{0}', space=sflag, size = 0x4, scoped, tag = 'scoped memory for soweli_forward.1']
    #allocation8 [shape = 's32[1]{0}', space=sflag, size = 0x4, scoped, tag = 'scoped memory for soweli_forward.1']
    #allocation9 [shape = 'u8[8192]{0}', space=vmem, size = 0x2000, scoped, tag = 'input window, operand 2, single buffered']
    #allocation10 [shape = 's32[1]{0}', space=sflag, size = 0x4, scoped, tag = 'scoped memory for soweli_forward.1']
    #allocation11 [shape = 'u8[16384]{0}', space=vmem, size = 0x4000, scoped, tag = 'input window, operand 7, single buffered']
    #allocation12 [shape = 'u8[16384]{0}', space=vmem, size = 0x4000, scoped, tag = 'input window, operand 8, single buffered']
    #allocation13 [shape = 's32[1]{0}', space=sflag, size = 0x4, scoped, tag = 'scoped memory for soweli_forward.1']
    #allocation14 [shape = 'u8[512]{0}', space=vmem, size = 0x400, scoped, tag = 'input window, operand 10, single buffered']
    #allocation15 [shape = 'u8[16384]{0}', space=vmem, size = 0x4000, scoped, tag = 'input window, operand 11, single buffered']
    #allocation16 [shape = 's32[1]{0}', space=sflag, size = 0x4, scoped, tag = 'scoped memory for soweli_forward.1']
    #allocation17 [shape = 'u8[16384]{0}', space=vmem, size = 0x4000, scoped, tag = 'input window, operand 12, single buffered']
    #allocation18 [shape = 'u8[16384]{0}', space=vmem, size = 0x4000, scoped, tag = 'input window, operand 14, single buffered']
    #allocation19 [shape = 's32[1]{0}', space=sflag, size = 0x4, scoped, tag = 'scoped memory for soweli_forward.1']
    #allocation20 [shape = 'u8[16384]{0}', space=vmem, size = 0x4000, scoped, tag = 'input window, operand 15, single buffered']
    #allocation21 [shape = 'u8[512]{0}', space=vmem, size = 0x400, scoped, tag = 'input window, operand 16, single buffered']
    #allocation22 [shape = 's32[1]{0}', space=sflag, size = 0x4, scoped, tag = 'scoped memory for soweli_forward.1']
    #allocation23 [shape = 'u8[512]{0}', space=vmem, size = 0x400, scoped, tag = 'input window, operand 17, single buffered']
    #allocation24 [shape = 'u8[8192]{0}', space=vmem, size = 0x2000, scoped, tag = 'output window, operand 0, single buffered']
    %25 = vsyncpa [#allocation7], 0
    %26 = vsyncpa [#allocation10], 0
    %27 = vsyncpa [#allocation13], 0
    %28 = vsyncpa [#allocation16], 0
    %29 = vsyncpa [#allocation19], 0
    %30 = vsyncpa [#allocation22], 0
    %31 = vsyncpa [#allocation8], 0
    // Predicated region
    $region2: #{soweli_forward.1} parent=1 // pred_check
      _
    $region3: #{soweli_forward.1} parent=1 // pred_check_branch
      %33 = sbr.rel (0) target = $region5
    $region4: #{soweli_forward.1} parent=1 // pred_region
      _
    $region5: #{soweli_forward.1} parent=1 // pred_fallthru
      _
    // Predicated region
    $region6: #{soweli_forward.1} parent=1 // pred_check
      _
    $region7: #{soweli_forward.1} parent=1 // pred_check_branch
      %35 = sbr.rel (0) target = $region9
    $region8: #{soweli_forward.1} parent=1 // pred_region
      %37 = vsyncadd [#allocation7], 0
      %s38 = sshll.u32 %s1, 4
      %s39 = int_to_ptr.hbm [resolvable:$true] %s38
      %s40 = sshll.u32 [#allocation6], 4
      %s41 = int_to_ptr.vmem [resolvable:$true] %s40
      %46 = dma.hbm_to_vmem [thread:$0]  %s39, 256, %s41, [#allocation7], 128, 128, 8
    $region9: #{soweli_forward.1} parent=1 // pred_fallthru
      _
    // Predicated region
    $region10: #{soweli_forward.1} parent=1 // pred_check
      _
    $region11: #{soweli_forward.1} parent=1 // pred_check_branch
      %48 = sbr.rel (0) target = $region13
    $region12: #{soweli_forward.1} parent=1 // pred_region
      %50 = vsyncadd [#allocation10], 0
      %s51 = sshll.u32 %s2, 4
      %s52 = int_to_ptr.hbm [resolvable:$true] %s51
      %s53 = sshll.u32 [#allocation9], 4
      %s54 = int_to_ptr.vmem [resolvable:$true] %s53
      %59 = dma.hbm_to_vmem [thread:$0]  %s52, 256, %s54, [#allocation10], 128, 128, 8
    $region13: #{soweli_forward.1} parent=1 // pred_fallthru
      _
    // Predicated region
    $region14: #{soweli_forward.1} parent=1 // pred_check
      _
    $region15: #{soweli_forward.1} parent=1 // pred_check_branch
      %61 = sbr.rel (0) target = $region17
    $region16: #{soweli_forward.1} parent=1 // pred_region
      _
    $region17: #{soweli_forward.1} parent=1 // pred_fallthru
      _
    // Predicated region
    $region18: #{soweli_forward.1} parent=1 // pred_check
      _
    $region19: #{soweli_forward.1} parent=1 // pred_check_branch
      %63 = sbr.rel (0) target = $region21
    $region20: #{soweli_forward.1} parent=1 // pred_region
      _
    $region21: #{soweli_forward.1} parent=1 // pred_fallthru
      _
    // Predicated region
    $region22: #{soweli_forward.1} parent=1 // pred_check
      _
    $region23: #{soweli_forward.1} parent=1 // pred_check_branch
      %65 = sbr.rel (0) target = $region25
    $region24: #{soweli_forward.1} parent=1 // pred_region
      _
    $region25: #{soweli_forward.1} parent=1 // pred_fallthru
      _
    // Predicated region
    $region26: #{soweli_forward.1} parent=1 // pred_check
      _
    $region27: #{soweli_forward.1} parent=1 // pred_check_branch
      %67 = sbr.rel (0) target = $region29
    $region28: #{soweli_forward.1} parent=1 // pred_region
      _
    $region29: #{soweli_forward.1} parent=1 // pred_fallthru
      _
    // Predicated region
    $region30: #{soweli_forward.1} parent=1 // pred_check
      _
    $region31: #{soweli_forward.1} parent=1 // pred_check_branch
      %69 = sbr.rel (0) target = $region33
    $region32: #{soweli_forward.1} parent=1 // pred_region
      %71 = vsyncadd [#allocation10], 0
      %s72 = sshll.u32 %s7, 4
      %s73 = int_to_ptr.hbm [resolvable:$true] %s72
      %s74 = sshll.u32 [#allocation11], 4
      %s75 = int_to_ptr.vmem [resolvable:$true] %s74
      %80 = dma.hbm_to_vmem [thread:$0]  %s73, 512, %s75, [#allocation10], 128, 128, 8
    $region33: #{soweli_forward.1} parent=1 // pred_fallthru
      _
    // Predicated region
    $region34: #{soweli_forward.1} parent=1 // pred_check
      _
    $region35: #{soweli_forward.1} parent=1 // pred_check_branch
      %82 = sbr.rel (0) target = $region37
    $region36: #{soweli_forward.1} parent=1 // pred_region
      %84 = vsyncadd [#allocation13], 0
      %s85 = sshll.u32 %s8, 4
      %s86 = int_to_ptr.hbm [resolvable:$true] %s85
      %s87 = sshll.u32 [#allocation12], 4
      %s88 = int_to_ptr.vmem [resolvable:$true] %s87
      %93 = dma.hbm_to_vmem [thread:$0]  %s86, 512, %s88, [#allocation13], 128, 128, 8
    $region37: #{soweli_forward.1} parent=1 // pred_fallthru
      _
    // Predicated region
    $region38: #{soweli_forward.1} parent=1 // pred_check
      _
    $region39: #{soweli_forward.1} parent=1 // pred_check_branch
      %95 = sbr.rel (0) target = $region41
    $region40: #{soweli_forward.1} parent=1 // pred_region
      _
    $region41: #{soweli_forward.1} parent=1 // pred_fallthru
      _
    // Predicated region
    $region42: #{soweli_forward.1} parent=1 // pred_check
      _
    $region43: #{soweli_forward.1} parent=1 // pred_check_branch
      %97 = sbr.rel (0) target = $region45
    $region44: #{soweli_forward.1} parent=1 // pred_region
      %99 = vsyncadd [#allocation13], 0
      %s101 = sshll.u32 %s10, 4
      %s102 = int_to_ptr.hbm [resolvable:$true] %s101
      %s103 = sshll.u32 [#allocation14], 4
      %s104 = int_to_ptr.vmem [resolvable:$true] %s103
      %106 = dma.hbm_to_vmem [thread:$0]  %s102, 16, %s104, [#allocation13]
    $region45: #{soweli_forward.1} parent=1 // pred_fallthru
      _
    // Predicated region
    $region46: #{soweli_forward.1} parent=1 // pred_check
      _
    $region47: #{soweli_forward.1} parent=1 // pred_check_branch
      %108 = sbr.rel (0) target = $region49
    $region48: #{soweli_forward.1} parent=1 // pred_region
      %110 = vsyncadd [#allocation16], 0
      %s111 = sshll.u32 %s11, 4
      %s112 = int_to_ptr.hbm [resolvable:$true] %s111
      %s113 = sshll.u32 [#allocation15], 4
      %s114 = int_to_ptr.vmem [resolvable:$true] %s113
      %119 = dma.hbm_to_vmem [thread:$0]  %s112, 512, %s114, [#allocation16], 128, 128, 8
    $region49: #{soweli_forward.1} parent=1 // pred_fallthru
      _
    // Predicated region
    $region50: #{soweli_forward.1} parent=1 // pred_check
      _
    $region51: #{soweli_forward.1} parent=1 // pred_check_branch
      %121 = sbr.rel (0) target = $region53
    $region52: #{soweli_forward.1} parent=1 // pred_region
      %123 = vsyncadd [#allocation16], 0
      %s124 = sshll.u32 %s12, 4
      %s125 = int_to_ptr.hbm [resolvable:$true] %s124
      %s126 = sshll.u32 [#allocation17], 4
      %s127 = int_to_ptr.vmem [resolvable:$true] %s126
      %132 = dma.hbm_to_vmem [thread:$0]  %s125, 512, %s127, [#allocation16], 128, 128, 8
    $region53: #{soweli_forward.1} parent=1 // pred_fallthru
      _
    // Predicated region
    $region54: #{soweli_forward.1} parent=1 // pred_check
      _
    $region55: #{soweli_forward.1} parent=1 // pred_check_branch
      %134 = sbr.rel (0) target = $region57
    $region56: #{soweli_forward.1} parent=1 // pred_region
      _
    $region57: #{soweli_forward.1} parent=1 // pred_fallthru
      _
    // Predicated region
    $region58: #{soweli_forward.1} parent=1 // pred_check
      _
    $region59: #{soweli_forward.1} parent=1 // pred_check_branch
      %136 = sbr.rel (0) target = $region61
    $region60: #{soweli_forward.1} parent=1 // pred_region
      %138 = vsyncadd [#allocation19], 0
      %s139 = sshll.u32 %s14, 4
      %s140 = int_to_ptr.hbm [resolvable:$true] %s139
      %s141 = sshll.u32 [#allocation18], 4
      %s142 = int_to_ptr.vmem [resolvable:$true] %s141
      %147 = dma.hbm_to_vmem [thread:$0]  %s140, 512, %s142, [#allocation19], 128, 128, 8
    $region61: #{soweli_forward.1} parent=1 // pred_fallthru
      _
    // Predicated region
    $region62: #{soweli_forward.1} parent=1 // pred_check
      _
    $region63: #{soweli_forward.1} parent=1 // pred_check_branch
      %149 = sbr.rel (0) target = $region65
    $region64: #{soweli_forward.1} parent=1 // pred_region
      %151 = vsyncadd [#allocation19], 0
      %s152 = sshll.u32 %s15, 4
      %s153 = int_to_ptr.hbm [resolvable:$true] %s152
      %s154 = sshll.u32 [#allocation20], 4
      %s155 = int_to_ptr.vmem [resolvable:$true] %s154
      %160 = dma.hbm_to_vmem [thread:$0]  %s153, 512, %s155, [#allocation19], 128, 128, 8
    $region65: #{soweli_forward.1} parent=1 // pred_fallthru
      _
    // Predicated region
    $region66: #{soweli_forward.1} parent=1 // pred_check
      _
    $region67: #{soweli_forward.1} parent=1 // pred_check_branch
      %162 = sbr.rel (0) target = $region69
    $region68: #{soweli_forward.1} parent=1 // pred_region
      %164 = vsyncadd [#allocation22], 0
      %s166 = sshll.u32 %s16, 4
      %s167 = int_to_ptr.hbm [resolvable:$true] %s166
      %s168 = sshll.u32 [#allocation21], 4
      %s169 = int_to_ptr.vmem [resolvable:$true] %s168
      %171 = dma.hbm_to_vmem [thread:$0]  %s167, 16, %s169, [#allocation22]
    $region69: #{soweli_forward.1} parent=1 // pred_fallthru
      _
    // Predicated region
    $region70: #{soweli_forward.1} parent=1 // pred_check
      _
    $region71: #{soweli_forward.1} parent=1 // pred_check_branch
      %173 = sbr.rel (0) target = $region73
    $region72: #{soweli_forward.1} parent=1 // pred_region
      %175 = vsyncadd [#allocation22], 0
      %s177 = sshll.u32 %s17, 4
      %s178 = int_to_ptr.hbm [resolvable:$true] %s177
      %s179 = sshll.u32 [#allocation23], 4
      %s180 = int_to_ptr.vmem [resolvable:$true] %s179
      %182 = dma.hbm_to_vmem [thread:$0]  %s178, 16, %s180, [#allocation22]
    $region73: #{soweli_forward.1} parent=1 // pred_fallthru
      _
    // Predicated region
    $region74: #{soweli_forward.1} parent=1 // pred_check
      _
    $region75: #{soweli_forward.1} parent=1 // pred_check_branch
      %184 = sbr.rel (0) target = $region77
    $region76: #{soweli_forward.1} parent=1 // pred_region
      _
    $region77: #{soweli_forward.1} parent=1 // pred_fallthru
      _
    // Predicated region
    $region78: #{soweli_forward.1} parent=1 // pred_check
      _
    $region79: #{soweli_forward.1} parent=1 // pred_check_branch
      %186 = sbr.rel (0) target = $region81
    $region80: #{soweli_forward.1} parent=1 // pred_region
      _
    $region81: #{soweli_forward.1} parent=1 // pred_fallthru
      _
    // Predicated region
    $region82: #{soweli_forward.1} parent=1 // pred_check
      _
    $region83: #{soweli_forward.1} parent=1 // pred_check_branch
      %188 = sbr.rel (0) target = $region85
    $region84: #{soweli_forward.1} parent=1 // pred_region
      %190 = dma.done [#allocation7], 256
    $region85: #{soweli_forward.1} parent=1 // pred_fallthru
      _
    // Predicated region
    $region86: #{soweli_forward.1} parent=1 // pred_check
      _
    $region87: #{soweli_forward.1} parent=1 // pred_check_branch
      %192 = sbr.rel (0) target = $region89
    $region88: #{soweli_forward.1} parent=1 // pred_region
      %194 = dma.done [#allocation10], 256
    $region89: #{soweli_forward.1} parent=1 // pred_fallthru
      _
    // Predicated region
    $region90: #{soweli_forward.1} parent=1 // pred_check
      _
    $region91: #{soweli_forward.1} parent=1 // pred_check_branch
      %196 = sbr.rel (0) target = $region93
    $region92: #{soweli_forward.1} parent=1 // pred_region
      %198 = dma.done [#allocation10], 512
    $region93: #{soweli_forward.1} parent=1 // pred_fallthru
      _
    // Predicated region
    $region94: #{soweli_forward.1} parent=1 // pred_check
      _
    $region95: #{soweli_forward.1} parent=1 // pred_check_branch
      %200 = sbr.rel (0) target = $region97
    $region96: #{soweli_forward.1} parent=1 // pred_region
      %202 = dma.done [#allocation13], 512
    $region97: #{soweli_forward.1} parent=1 // pred_fallthru
      _
    // Predicated region
    $region98: #{soweli_forward.1} parent=1 // pred_check
      _
    $region99: #{soweli_forward.1} parent=1 // pred_check_branch
      %204 = sbr.rel (0) target = $region101
    $region100: #{soweli_forward.1} parent=1 // pred_region
      %206 = dma.done [#allocation13], 16
    $region101: #{soweli_forward.1} parent=1 // pred_fallthru
      _
    // Predicated region
    $region102: #{soweli_forward.1} parent=1 // pred_check
      _
    $region103: #{soweli_forward.1} parent=1 // pred_check_branch
      %208 = sbr.rel (0) target = $region105
    $region104: #{soweli_forward.1} parent=1 // pred_region
      %210 = dma.done [#allocation16], 512
    $region105: #{soweli_forward.1} parent=1 // pred_fallthru
      _
    // Predicated region
    $region106: #{soweli_forward.1} parent=1 // pred_check
      _
    $region107: #{soweli_forward.1} parent=1 // pred_check_branch
      %212 = sbr.rel (0) target = $region109
    $region108: #{soweli_forward.1} parent=1 // pred_region
      %214 = dma.done [#allocation16], 512
    $region109: #{soweli_forward.1} parent=1 // pred_fallthru
      _
    // Predicated region
    $region110: #{soweli_forward.1} parent=1 // pred_check
      _
    $region111: #{soweli_forward.1} parent=1 // pred_check_branch
      %216 = sbr.rel (0) target = $region113
    $region112: #{soweli_forward.1} parent=1 // pred_region
      %218 = dma.done [#allocation19], 512
    $region113: #{soweli_forward.1} parent=1 // pred_fallthru
      _
    // Predicated region
    $region114: #{soweli_forward.1} parent=1 // pred_check
      _
    $region115: #{soweli_forward.1} parent=1 // pred_check_branch
      %220 = sbr.rel (0) target = $region117
    $region116: #{soweli_forward.1} parent=1 // pred_region
      %222 = dma.done [#allocation19], 512
    $region117: #{soweli_forward.1} parent=1 // pred_fallthru
      _
    // Predicated region
    $region118: #{soweli_forward.1} parent=1 // pred_check
      _
    $region119: #{soweli_forward.1} parent=1 // pred_check_branch
      %224 = sbr.rel (0) target = $region121
    $region120: #{soweli_forward.1} parent=1 // pred_region
      %226 = dma.done [#allocation22], 16
    $region121: #{soweli_forward.1} parent=1 // pred_fallthru
      _
    // Predicated region
    $region122: #{soweli_forward.1} parent=1 // pred_check
      _
    $region123: #{soweli_forward.1} parent=1 // pred_check_branch
      %228 = sbr.rel (0) target = $region125
    $region124: #{soweli_forward.1} parent=1 // pred_region
      %230 = dma.done [#allocation22], 16
    $region125: #{soweli_forward.1} parent=1 // pred_fallthru
      _
    %v231 = vld [vmem:[%s0] sm:$0xff]
    %v232 = vld [vmem:[%s0 + $0x8] sm:$0xff]
    %v233 = vlaneseq
    %v234 = vand.u32 %v233, 127
    %235 = vset.pattern.permute.xlu0 0
    %236 = vperm.xlu0 %235, %v231
    %v237 = vpop.permute.xlu0 %236
    %238 = vset.pattern.permute.xlu0 0
    %239 = vperm.xlu0 %238, %v232
    %v240 = vpop.permute.xlu0 %239
    %vm241 = vcmp.eq.s32.totalorder %v237, %v234
    %vm242 = vcmp.eq.s32.totalorder %v240, %v234
    %v243 = vsel %vm241, 1.0, 0.0
    %v244 = vsel %vm242, 1.0, 0.0
    %v245 = vld [vmem:[#allocation6] sm:$0xff]
    %v246 = vld [vmem:[#allocation6 + $0x8] sm:$0xff]
    %vm247 = vcmask 130048
    %v249 = vsel %vm247, %v243, 0
    %v252 = vsel %vm247, %v244, 0
    %254 = vmatpush.msra.mxu0 0.0
    %255 = vmatpush.msra.mxu0 0.0
    %256 = vmatpush.msra.mxu0 0.0
    %257 = vmatpush.msra.mxu0 0.0
    %258 = vmatpush.msra.mxu0 0.0
    %259 = vmatpush.msra.mxu0 0.0
    %260 = vmatpush.msra.mxu0 0.0
    %261 = vmatpush.msra.mxu0 0.0
    %262 = vmatpush.msra.mxu0 0.0
    %263 = vmatpush.msra.mxu0 0.0
    %264 = vmatpush.msra.mxu0 0.0
    %265 = vmatpush.msra.mxu0 0.0
    %266 = vmatpush.msra.mxu0 0.0
    %267 = vmatpush.msra.mxu0 0.0
    %268 = vmatpush.msra.mxu0 %v246
    %269 = vmatpush.msra.mxu0 %v245
    %270 = vmatmul.f32.gmra.mxu0 %v249
    %v271 = vpop.f32.mrf.mxu0
    %v272 = vadd.f32 0.0, %v271
    %273 = vmatmul.f32.gmra.mxu0 %v252
    %v274 = vpop.f32.mrf.mxu0
    %v275 = vadd.f32 0.0, %v274
    %276 = vdwg.mxu0
    %v277 = vld [vmem:[#allocation9] sm:$0xff]
    %v278 = vld [vmem:[#allocation9 + $0x8] sm:$0xff]
    %279 = vmatpush.msra.mxu0 0.0
    %280 = vmatpush.msra.mxu0 0.0
    %281 = vmatpush.msra.mxu0 0.0
    %282 = vmatpush.msra.mxu0 0.0
    %283 = vmatpush.msra.mxu0 0.0
    %284 = vmatpush.msra.mxu0 0.0
    %285 = vmatpush.msra.mxu0 0.0
    %286 = vmatpush.msra.mxu0 0.0
    %287 = vmatpush.msra.mxu0 0.0
    %288 = vmatpush.msra.mxu0 0.0
    %289 = vmatpush.msra.mxu0 0.0
    %290 = vmatpush.msra.mxu0 0.0
    %291 = vmatpush.msra.mxu0 0.0
    %292 = vmatpush.msra.mxu0 0.0
    %293 = vmatpush.msra.mxu0 %v278
    %294 = vmatpush.msra.mxu0 %v277
    %295 = vmatmul.f32.gmra.mxu0 %v249
    %v296 = vpop.f32.mrf.mxu0
    %v297 = vadd.f32 0.0, %v296
    %298 = vmatmul.f32.gmra.mxu0 %v252
    %v299 = vpop.f32.mrf.mxu0
    %v300 = vadd.f32 0.0, %v299
    %301 = vdwg.mxu0
    %v302 = vld [vmem:[%s3] sm:$0xff]
    %v303 = vld [vmem:[%s3 + $0x8] sm:$0xff]
    %v304 = vld [vmem:[%s3 + $0x10] sm:$0xff]
    %v305 = vld [vmem:[%s3 + $0x18] sm:$0xff]
    %v306 = vld [vmem:[%s5] sm:$0x1]
    %v308 = vperm.slane %v306, 0
    %vm310 = vcmask 261120
    %v312 = vsel %vm310, %v272, 0
    %v315 = vsel %vm310, %v275, 0
    %317 = vmatpush.msra.mxu0 0.0
    %318 = vmatpush.msra.mxu0 0.0
    %319 = vmatpush.msra.mxu0 0.0
    %320 = vmatpush.msra.mxu0 0.0
    %321 = vmatpush.msra.mxu0 0.0
    %322 = vmatpush.msra.mxu0 0.0
    %323 = vmatpush.msra.mxu0 0.0
    %324 = vmatpush.msra.mxu0 0.0
    %325 = vmatpush.msra.mxu0 0.0
    %326 = vmatpush.msra.mxu0 0.0
    %327 = vmatpush.msra.mxu0 0.0
    %328 = vmatpush.msra.mxu0 0.0
    %329 = vmatpush.msra.mxu0 %v305
    %330 = vmatpush.msra.mxu0 %v304
    %331 = vmatpush.msra.mxu0 %v303
    %332 = vmatpush.msra.mxu0 %v302
    %333 = vmatmul.f32.gmra.mxu0 %v312
    %v334 = vpop.f32.mrf.mxu0
    %v335 = vadd.f32 %v308, %v334
    %336 = vmatmul.f32.gmra.mxu0 %v315
    %v337 = vpop.f32.mrf.mxu0
    %v338 = vadd.f32 %v308, %v337
    %339 = vdwg.mxu0
    %vm340 = vcmask 785408
    %341 = vst.msk [vmem:[#allocation2] sm:$0xff] %vm340, %v335
    %342 = vst.msk [vmem:[#allocation2 + $0x8] sm:$0xff] %vm340, %v338
    %v343 = vld [vmem:[#allocation11] sm:$0xff]
    %v344 = vld [vmem:[#allocation11 + $0x8] sm:$0xff]
    %v345 = vld [vmem:[#allocation11 + $0x10] sm:$0xff]
    %v346 = vld [vmem:[#allocation11 + $0x18] sm:$0xff]
    %v347 = vld [vmem:[%s9] sm:$0x1]
    %v349 = vperm.slane %v347, 0
    %351 = vmatpush.msra.mxu0 0.0
    %352 = vmatpush.msra.mxu0 0.0
    %353 = vmatpush.msra.mxu0 0.0
    %354 = vmatpush.msra.mxu0 0.0
    %355 = vmatpush.msra.mxu0 0.0
    %356 = vmatpush.msra.mxu0 0.0
    %357 = vmatpush.msra.mxu0 0.0
    %358 = vmatpush.msra.mxu0 0.0
    %359 = vmatpush.msra.mxu0 0.0
    %360 = vmatpush.msra.mxu0 0.0
    %361 = vmatpush.msra.mxu0 0.0
    %362 = vmatpush.msra.mxu0 0.0
    %363 = vmatpush.msra.mxu0 %v346
    %364 = vmatpush.msra.mxu0 %v345
    %365 = vmatpush.msra.mxu0 %v344
    %366 = vmatpush.msra.mxu0 %v343
    %367 = vmatmul.f32.gmra.mxu0 %v312
    %v368 = vpop.f32.mrf.mxu0
    %v369 = vadd.f32 %v349, %v368
    %370 = vmatmul.f32.gmra.mxu0 %v315
    %v371 = vpop.f32.mrf.mxu0
    %v372 = vadd.f32 %v349, %v371
    %373 = vdwg.mxu0
    %374 = vst.msk [vmem:[#allocation3] sm:$0xff] %vm340, %v369
    %375 = vst.msk [vmem:[#allocation3 + $0x8] sm:$0xff] %vm340, %v372
    %v376 = vld [vmem:[#allocation18] sm:$0xff]
    %v377 = vld [vmem:[#allocation18 + $0x8] sm:$0xff]
    %v378 = vld [vmem:[#allocation18 + $0x10] sm:$0xff]
    %v379 = vld [vmem:[#allocation18 + $0x18] sm:$0xff]
    %v380 = vld [vmem:[#allocation21] sm:$0x1]
    %v382 = vperm.slane %v380, 0
    %v385 = vsel %vm310, %v297, 0
    %v388 = vsel %vm310, %v300, 0
    %390 = vmatpush.msra.mxu0 0.0
    %391 = vmatpush.msra.mxu0 0.0
    %392 = vmatpush.msra.mxu0 0.0
    %393 = vmatpush.msra.mxu0 0.0
    %394 = vmatpush.msra.mxu0 0.0
    %395 = vmatpush.msra.mxu0 0.0
    %396 = vmatpush.msra.mxu0 0.0
    %397 = vmatpush.msra.mxu0 0.0
    %398 = vmatpush.msra.mxu0 0.0
    %399 = vmatpush.msra.mxu0 0.0
    %400 = vmatpush.msra.mxu0 0.0
    %401 = vmatpush.msra.mxu0 0.0
    %402 = vmatpush.msra.mxu0 %v379
    %403 = vmatpush.msra.mxu0 %v378
    %404 = vmatpush.msra.mxu0 %v377
    %405 = vmatpush.msra.mxu0 %v376
    %406 = vmatmul.f32.gmra.mxu0 %v385
    %v407 = vpop.f32.mrf.mxu0
    %v408 = vadd.f32 %v382, %v407
    %409 = vmatmul.f32.gmra.mxu0 %v388
    %v410 = vpop.f32.mrf.mxu0
    %v411 = vadd.f32 %v382, %v410
    %412 = vdwg.mxu0
    %413 = vst.msk [vmem:[#allocation4] sm:$0xff] %vm340, %v408
    %414 = vst.msk [vmem:[#allocation4 + $0x8] sm:$0xff] %vm340, %v411
    %v415 = vld [vmem:[#allocation2] sm:$0x3]
    %v416 = vld [vmem:[#allocation3 + $0xe] sm:$0x3]
    %v417 = vld [vmem:[%s4] sm:$0xff]
    %v418 = vld [vmem:[%s4 + $0x8] sm:$0xff]
    %v419 = vld [vmem:[%s4 + $0x10] sm:$0xff]
    %v420 = vld [vmem:[%s4 + $0x18] sm:$0xff]
    %v422 = vsel %vm310, 0.0, 0
    %424 = vmatpush.msra.mxu0 0.0
    %425 = vmatpush.msra.mxu0 0.0
    %426 = vmatpush.msra.mxu0 0.0
    %427 = vmatpush.msra.mxu0 0.0
    %428 = vmatpush.msra.mxu0 0.0
    %429 = vmatpush.msra.mxu0 0.0
    %430 = vmatpush.msra.mxu0 0.0
    %431 = vmatpush.msra.mxu0 0.0
    %432 = vmatpush.msra.mxu0 0.0
    %433 = vmatpush.msra.mxu0 0.0
    %434 = vmatpush.msra.mxu0 0.0
    %435 = vmatpush.msra.mxu0 0.0
    %436 = vmatpush.msra.mxu0 %v420
    %437 = vmatpush.msra.mxu0 %v419
    %438 = vmatpush.msra.mxu0 %v418
    %439 = vmatpush.msra.mxu0 %v417
    %440 = vmatmul.f32.gmra.mxu0 %v422
    %v441 = vpop.f32.mrf.mxu0
    %v442 = vadd.f32 0.0, %v441
    %443 = vdwg.mxu0
    %v444 = vadd.f32 %v415, %v442
    %v445 = vxor.u32 %v444, 2147483648
    %v446 = vmul.f32 %v445, 1.442695
    %v447 = vpow.pop %v446
    %v448 = vadd.f32 %v447, 1.0
    %v449 = vrcp.pop %v448
    %v450 = vmul.f32 %v448, %v449
    %v451 = vsub.f32 1.0, %v450
    %v452 = vmul.f32 %v449, %v451
    %v453 = vadd.f32 %v449, %v452
    %vm454 = vweird.f32 %v448
    %vm455 = vweird.f32 %v449
    %vm456 = vmor %vm454, %vm455
    %v457 = vsel %vm456, %v449, %v453
    %v458 = vand.u32 2147483647, %v448
    %vm459 = vcmp.eq.f32.partialorder %v458, 8.507059e+37
    %v460 = vand.u32 %v448, 2147483648
    %v461 = vor.u32 1.1754944e-38, %v460
    %v462 = vsel %vm459, %v461, %v457
    %v463 = vmul.f32 1.0, %v462
    %v464 = vld [vmem:[%s6] sm:$0x1]
    %v466 = vperm.slane %v464, 0
    %467 = vrot.lane.b32.xlu0 %v466, 64
    %v468 = vpop.permute.xlu0 %467
    %v470 = vadd.f32 %v442, %v468
    %472 = vrot.lane.b32.xlu0 %v470, 64
    %v473 = vpop.permute.xlu0 %472
    %v475 = vmul.f32 %v463, %v473
    %477 = vrot.lane.b32.xlu0 %v475, 64
    %v478 = vpop.permute.xlu0 %477
    %v480 = vadd.f32 %v415, %v478
    %v481 = vtanh.pop %v480
    %v482 = vsub.f32 1.0, %v463
    %484 = vrot.lane.b32.xlu0 %v481, 96
    %v485 = vpop.permute.xlu0 %484
    %v487 = vmul.f32 %v482, %v485
    %v488 = vmul.f32 %v463, 0.0
    %v489 = vadd.f32 %v487, %v488
    %v490 = vld [vmem:[#allocation12] sm:$0xff]
    %v491 = vld [vmem:[#allocation12 + $0x8] sm:$0xff]
    %v492 = vld [vmem:[#allocation12 + $0x10] sm:$0xff]
    %v493 = vld [vmem:[#allocation12 + $0x18] sm:$0xff]
    %494 = vmatpush.msra.mxu0 0.0
    %495 = vmatpush.msra.mxu0 0.0
    %496 = vmatpush.msra.mxu0 0.0
    %497 = vmatpush.msra.mxu0 0.0
    %498 = vmatpush.msra.mxu0 0.0
    %499 = vmatpush.msra.mxu0 0.0
    %500 = vmatpush.msra.mxu0 0.0
    %501 = vmatpush.msra.mxu0 0.0
    %502 = vmatpush.msra.mxu0 0.0
    %503 = vmatpush.msra.mxu0 0.0
    %504 = vmatpush.msra.mxu0 0.0
    %505 = vmatpush.msra.mxu0 0.0
    %506 = vmatpush.msra.mxu0 %v493
    %507 = vmatpush.msra.mxu0 %v492
    %508 = vmatpush.msra.mxu0 %v491
    %509 = vmatpush.msra.mxu0 %v490
    %510 = vmatmul.f32.gmra.mxu0 %v422
    %v511 = vpop.f32.mrf.mxu0
    %v512 = vadd.f32 0.0, %v511
    %513 = vdwg.mxu0
    %v514 = vadd.f32 %v416, %v512
    %v515 = vxor.u32 %v514, 2147483648
    %v516 = vmul.f32 %v515, 1.442695
    %v517 = vpow.pop %v516
    %v518 = vadd.f32 %v517, 1.0
    %v519 = vrcp.pop %v518
    %v520 = vmul.f32 %v518, %v519
    %v521 = vsub.f32 1.0, %v520
    %v522 = vmul.f32 %v519, %v521
    %v523 = vadd.f32 %v519, %v522
    %vm524 = vweird.f32 %v518
    %vm525 = vweird.f32 %v519
    %vm526 = vmor %vm524, %vm525
    %v527 = vsel %vm526, %v519, %v523
    %v528 = vand.u32 2147483647, %v518
    %vm529 = vcmp.eq.f32.partialorder %v528, 8.507059e+37
    %v530 = vand.u32 %v518, 2147483648
    %v531 = vor.u32 1.1754944e-38, %v530
    %v532 = vsel %vm529, %v531, %v527
    %v533 = vmul.f32 1.0, %v532
    %v534 = vld [vmem:[#allocation14] sm:$0x1]
    %v536 = vperm.slane %v534, 0
    %537 = vrot.lane.b32.xlu0 %v536, 64
    %v538 = vpop.permute.xlu0 %537
    %v540 = vadd.f32 %v512, %v538
    %542 = vrot.lane.b32.xlu0 %v540, 64
    %v543 = vpop.permute.xlu0 %542
    %v545 = vmul.f32 %v533, %v543
    %547 = vrot.lane.b32.xlu0 %v545, 64
    %v548 = vpop.permute.xlu0 %547
    %v550 = vadd.f32 %v416, %v548
    %v551 = vtanh.pop %v550
    %v552 = vsub.f32 1.0, %v533
    %554 = vrot.lane.b32.xlu0 %v551, 96
    %v555 = vpop.permute.xlu0 %554
    %v557 = vmul.f32 %v552, %v555
    %v558 = vmul.f32 %v533, 0.0
    %v559 = vadd.f32 %v557, %v558
    %v560 = vld [vmem:[#allocation2 + $0x2] sm:$0x3]
    %v561 = vld [vmem:[#allocation3 + $0xc] sm:$0x3]
    %563 = vrot.lane.b32.xlu0 %v489, 96
    %v564 = vpop.permute.xlu0 %563
    %v565 = vsel %vm310, %v564, 0
    %567 = vmatpush.msra.mxu0 0.0
    %568 = vmatpush.msra.mxu0 0.0
    %569 = vmatpush.msra.mxu0 0.0
    %570 = vmatpush.msra.mxu0 0.0
    %571 = vmatpush.msra.mxu0 0.0
    %572 = vmatpush.msra.mxu0 0.0
    %573 = vmatpush.msra.mxu0 0.0
    %574 = vmatpush.msra.mxu0 0.0
    %575 = vmatpush.msra.mxu0 0.0
    %576 = vmatpush.msra.mxu0 0.0
    %577 = vmatpush.msra.mxu0 0.0
    %578 = vmatpush.msra.mxu0 0.0
    %579 = vmatpush.msra.mxu0 %v420
    %580 = vmatpush.msra.mxu0 %v419
    %581 = vmatpush.msra.mxu0 %v418
    %582 = vmatpush.msra.mxu0 %v417
    %583 = vmatmul.f32.gmra.mxu0 %v565
    %v584 = vpop.f32.mrf.mxu0
    %v585 = vadd.f32 0.0, %v584
    %586 = vdwg.mxu0
    %v587 = vadd.f32 %v560, %v585
    %v588 = vxor.u32 %v587, 2147483648
    %v589 = vmul.f32 %v588, 1.442695
    %v590 = vpow.pop %v589
    %v591 = vadd.f32 %v590, 1.0
    %v592 = vrcp.pop %v591
    %v593 = vmul.f32 %v591, %v592
    %v594 = vsub.f32 1.0, %v593
    %v595 = vmul.f32 %v592, %v594
    %v596 = vadd.f32 %v592, %v595
    %vm597 = vweird.f32 %v591
    %vm598 = vweird.f32 %v592
    %vm599 = vmor %vm597, %vm598
    %v600 = vsel %vm599, %v592, %v596
    %v601 = vand.u32 2147483647, %v591
    %vm602 = vcmp.eq.f32.partialorder %v601, 8.507059e+37
    %v603 = vand.u32 %v591, 2147483648
    %v604 = vor.u32 1.1754944e-38, %v603
    %v605 = vsel %vm602, %v604, %v600
    %v606 = vmul.f32 1.0, %v605
    %v607 = vadd.f32 %v585, %v468
    %609 = vrot.lane.b32.xlu0 %v607, 64
    %v610 = vpop.permute.xlu0 %609
    %v612 = vmul.f32 %v606, %v610
    %614 = vrot.lane.b32.xlu0 %v612, 64
    %v615 = vpop.permute.xlu0 %614
    %v617 = vadd.f32 %v560, %v615
    %v618 = vtanh.pop %v617
    %v619 = vsub.f32 1.0, %v606
    %621 = vrot.lane.b32.xlu0 %v618, 96
    %v622 = vpop.permute.xlu0 %621
    %v624 = vmul.f32 %v619, %v622
    %v625 = vmul.f32 %v606, %v489
    %v626 = vadd.f32 %v624, %v625
    %628 = vrot.lane.b32.xlu0 %v559, 96
    %v629 = vpop.permute.xlu0 %628
    %v630 = vsel %vm310, %v629, 0
    %632 = vmatpush.msra.mxu0 0.0
    %633 = vmatpush.msra.mxu0 0.0
    %634 = vmatpush.msra.mxu0 0.0
    %635 = vmatpush.msra.mxu0 0.0
    %636 = vmatpush.msra.mxu0 0.0
    %637 = vmatpush.msra.mxu0 0.0
    %638 = vmatpush.msra.mxu0 0.0
    %639 = vmatpush.msra.mxu0 0.0
    %640 = vmatpush.msra.mxu0 0.0
    %641 = vmatpush.msra.mxu0 0.0
    %642 = vmatpush.msra.mxu0 0.0
    %643 = vmatpush.msra.mxu0 0.0
    %644 = vmatpush.msra.mxu0 %v493
    %645 = vmatpush.msra.mxu0 %v492
    %646 = vmatpush.msra.mxu0 %v491
    %647 = vmatpush.msra.mxu0 %v490
    %648 = vmatmul.f32.gmra.mxu0 %v630
    %v649 = vpop.f32.mrf.mxu0
    %v650 = vadd.f32 0.0, %v649
    %651 = vdwg.mxu0
    %v652 = vadd.f32 %v561, %v650
    %v653 = vxor.u32 %v652, 2147483648
    %v654 = vmul.f32 %v653, 1.442695
    %v655 = vpow.pop %v654
    %v656 = vadd.f32 %v655, 1.0
    %v657 = vrcp.pop %v656
    %v658 = vmul.f32 %v656, %v657
    %v659 = vsub.f32 1.0, %v658
    %v660 = vmul.f32 %v657, %v659
    %v661 = vadd.f32 %v657, %v660
    %vm662 = vweird.f32 %v656
    %vm663 = vweird.f32 %v657
    %vm664 = vmor %vm662, %vm663
    %v665 = vsel %vm664, %v657, %v661
    %v666 = vand.u32 2147483647, %v656
    %vm667 = vcmp.eq.f32.partialorder %v666, 8.507059e+37
    %v668 = vand.u32 %v656, 2147483648
    %v669 = vor.u32 1.1754944e-38, %v668
    %v670 = vsel %vm667, %v669, %v665
    %v671 = vmul.f32 1.0, %v670
    %v672 = vadd.f32 %v650, %v538
    %674 = vrot.lane.b32.xlu0 %v672, 64
    %v675 = vpop.permute.xlu0 %674
    %v677 = vmul.f32 %v671, %v675
    %679 = vrot.lane.b32.xlu0 %v677, 64
    %v680 = vpop.permute.xlu0 %679
    %v682 = vadd.f32 %v561, %v680
    %v683 = vtanh.pop %v682
    %v684 = vsub.f32 1.0, %v671
    %686 = vrot.lane.b32.xlu0 %v683, 96
    %v687 = vpop.permute.xlu0 %686
    %v689 = vmul.f32 %v684, %v687
    %v690 = vmul.f32 %v671, %v559
    %v691 = vadd.f32 %v689, %v690
    %v692 = vld [vmem:[#allocation2 + $0x4] sm:$0x3]
    %v693 = vld [vmem:[#allocation3 + $0xa] sm:$0x3]
    %695 = vrot.lane.b32.xlu0 %v626, 96
    %v696 = vpop.permute.xlu0 %695
    %v697 = vsel %vm310, %v696, 0
    %699 = vmatpush.msra.mxu0 0.0
    %700 = vmatpush.msra.mxu0 0.0
    %701 = vmatpush.msra.mxu0 0.0
    %702 = vmatpush.msra.mxu0 0.0
    %703 = vmatpush.msra.mxu0 0.0
    %704 = vmatpush.msra.mxu0 0.0
    %705 = vmatpush.msra.mxu0 0.0
    %706 = vmatpush.msra.mxu0 0.0
    %707 = vmatpush.msra.mxu0 0.0
    %708 = vmatpush.msra.mxu0 0.0
    %709 = vmatpush.msra.mxu0 0.0
    %710 = vmatpush.msra.mxu0 0.0
    %711 = vmatpush.msra.mxu0 %v420
    %712 = vmatpush.msra.mxu0 %v419
    %713 = vmatpush.msra.mxu0 %v418
    %714 = vmatpush.msra.mxu0 %v417
    %715 = vmatmul.f32.gmra.mxu0 %v697
    %v716 = vpop.f32.mrf.mxu0
    %v717 = vadd.f32 0.0, %v716
    %718 = vdwg.mxu0
    %v719 = vadd.f32 %v692, %v717
    %v720 = vxor.u32 %v719, 2147483648
    %v721 = vmul.f32 %v720, 1.442695
    %v722 = vpow.pop %v721
    %v723 = vadd.f32 %v722, 1.0
    %v724 = vrcp.pop %v723
    %v725 = vmul.f32 %v723, %v724
    %v726 = vsub.f32 1.0, %v725
    %v727 = vmul.f32 %v724, %v726
    %v728 = vadd.f32 %v724, %v727
    %vm729 = vweird.f32 %v723
    %vm730 = vweird.f32 %v724
    %vm731 = vmor %vm729, %vm730
    %v732 = vsel %vm731, %v724, %v728
    %v733 = vand.u32 2147483647, %v723
    %vm734 = vcmp.eq.f32.partialorder %v733, 8.507059e+37
    %v735 = vand.u32 %v723, 2147483648
    %v736 = vor.u32 1.1754944e-38, %v735
    %v737 = vsel %vm734, %v736, %v732
    %v738 = vmul.f32 1.0, %v737
    %v739 = vadd.f32 %v717, %v468
    %741 = vrot.lane.b32.xlu0 %v739, 64
    %v742 = vpop.permute.xlu0 %741
    %v744 = vmul.f32 %v738, %v742
    %746 = vrot.lane.b32.xlu0 %v744, 64
    %v747 = vpop.permute.xlu0 %746
    %v749 = vadd.f32 %v692, %v747
    %v750 = vtanh.pop %v749
    %v751 = vsub.f32 1.0, %v738
    %753 = vrot.lane.b32.xlu0 %v750, 96
    %v754 = vpop.permute.xlu0 %753
    %v756 = vmul.f32 %v751, %v754
    %v757 = vmul.f32 %v738, %v626
    %v758 = vadd.f32 %v756, %v757
    %760 = vrot.lane.b32.xlu0 %v691, 96
    %v761 = vpop.permute.xlu0 %760
    %v762 = vsel %vm310, %v761, 0
    %764 = vmatpush.msra.mxu0 0.0
    %765 = vmatpush.msra.mxu0 0.0
    %766 = vmatpush.msra.mxu0 0.0
    %767 = vmatpush.msra.mxu0 0.0
    %768 = vmatpush.msra.mxu0 0.0
    %769 = vmatpush.msra.mxu0 0.0
    %770 = vmatpush.msra.mxu0 0.0
    %771 = vmatpush.msra.mxu0 0.0
    %772 = vmatpush.msra.mxu0 0.0
    %773 = vmatpush.msra.mxu0 0.0
    %774 = vmatpush.msra.mxu0 0.0
    %775 = vmatpush.msra.mxu0 0.0
    %776 = vmatpush.msra.mxu0 %v493
    %777 = vmatpush.msra.mxu0 %v492
    %778 = vmatpush.msra.mxu0 %v491
    %779 = vmatpush.msra.mxu0 %v490
    %780 = vmatmul.f32.gmra.mxu0 %v762
    %v781 = vpop.f32.mrf.mxu0
    %v782 = vadd.f32 0.0, %v781
    %783 = vdwg.mxu0
    %v784 = vadd.f32 %v693, %v782
    %v785 = vxor.u32 %v784, 2147483648
    %v786 = vmul.f32 %v785, 1.442695
    %v787 = vpow.pop %v786
    %v788 = vadd.f32 %v787, 1.0
    %v789 = vrcp.pop %v788
    %v790 = vmul.f32 %v788, %v789
    %v791 = vsub.f32 1.0, %v790
    %v792 = vmul.f32 %v789, %v791
    %v793 = vadd.f32 %v789, %v792
    %vm794 = vweird.f32 %v788
    %vm795 = vweird.f32 %v789
    %vm796 = vmor %vm794, %vm795
    %v797 = vsel %vm796, %v789, %v793
    %v798 = vand.u32 2147483647, %v788
    %vm799 = vcmp.eq.f32.partialorder %v798, 8.507059e+37
    %v800 = vand.u32 %v788, 2147483648
    %v801 = vor.u32 1.1754944e-38, %v800
    %v802 = vsel %vm799, %v801, %v797
    %v803 = vmul.f32 1.0, %v802
    %v804 = vadd.f32 %v782, %v538
    %806 = vrot.lane.b32.xlu0 %v804, 64
    %v807 = vpop.permute.xlu0 %806
    %v809 = vmul.f32 %v803, %v807
    %811 = vrot.lane.b32.xlu0 %v809, 64
    %v812 = vpop.permute.xlu0 %811
    %v814 = vadd.f32 %v693, %v812
    %v815 = vtanh.pop %v814
    %v816 = vsub.f32 1.0, %v803
    %818 = vrot.lane.b32.xlu0 %v815, 96
    %v819 = vpop.permute.xlu0 %818
    %v821 = vmul.f32 %v816, %v819
    %v822 = vmul.f32 %v803, %v691
    %v823 = vadd.f32 %v821, %v822
    %v824 = vld [vmem:[#allocation2 + $0x6] sm:$0x3]
    %v825 = vld [vmem:[#allocation3 + $0x8] sm:$0x3]
    %827 = vrot.lane.b32.xlu0 %v758, 96
    %v828 = vpop.permute.xlu0 %827
    %v829 = vsel %vm310, %v828, 0
    %831 = vmatpush.msra.mxu0 0.0
    %832 = vmatpush.msra.mxu0 0.0
    %833 = vmatpush.msra.mxu0 0.0
    %834 = vmatpush.msra.mxu0 0.0
    %835 = vmatpush.msra.mxu0 0.0
    %836 = vmatpush.msra.mxu0 0.0
    %837 = vmatpush.msra.mxu0 0.0
    %838 = vmatpush.msra.mxu0 0.0
    %839 = vmatpush.msra.mxu0 0.0
    %840 = vmatpush.msra.mxu0 0.0
    %841 = vmatpush.msra.mxu0 0.0
    %842 = vmatpush.msra.mxu0 0.0
    %843 = vmatpush.msra.mxu0 %v420
    %844 = vmatpush.msra.mxu0 %v419
    %845 = vmatpush.msra.mxu0 %v418
    %846 = vmatpush.msra.mxu0 %v417
    %847 = vmatmul.f32.gmra.mxu0 %v829
    %v848 = vpop.f32.mrf.mxu0
    %v849 = vadd.f32 0.0, %v848
    %850 = vdwg.mxu0
    %v851 = vadd.f32 %v824, %v849
    %v852 = vxor.u32 %v851, 2147483648
    %v853 = vmul.f32 %v852, 1.442695
    %v854 = vpow.pop %v853
    %v855 = vadd.f32 %v854, 1.0
    %v856 = vrcp.pop %v855
    %v857 = vmul.f32 %v855, %v856
    %v858 = vsub.f32 1.0, %v857
    %v859 = vmul.f32 %v856, %v858
    %v860 = vadd.f32 %v856, %v859
    %vm861 = vweird.f32 %v855
    %vm862 = vweird.f32 %v856
    %vm863 = vmor %vm861, %vm862
    %v864 = vsel %vm863, %v856, %v860
    %v865 = vand.u32 2147483647, %v855
    %vm866 = vcmp.eq.f32.partialorder %v865, 8.507059e+37
    %v867 = vand.u32 %v855, 2147483648
    %v868 = vor.u32 1.1754944e-38, %v867
    %v869 = vsel %vm866, %v868, %v864
    %v870 = vmul.f32 1.0, %v869
    %v871 = vadd.f32 %v849, %v468
    %873 = vrot.lane.b32.xlu0 %v871, 64
    %v874 = vpop.permute.xlu0 %873
    %v876 = vmul.f32 %v870, %v874
    %878 = vrot.lane.b32.xlu0 %v876, 64
    %v879 = vpop.permute.xlu0 %878
    %v881 = vadd.f32 %v824, %v879
    %v882 = vtanh.pop %v881
    %v883 = vsub.f32 1.0, %v870
    %885 = vrot.lane.b32.xlu0 %v882, 96
    %v886 = vpop.permute.xlu0 %885
    %v888 = vmul.f32 %v883, %v886
    %v889 = vmul.f32 %v870, %v758
    %v890 = vadd.f32 %v888, %v889
    %892 = vrot.lane.b32.xlu0 %v823, 96
    %v893 = vpop.permute.xlu0 %892
    %v894 = vsel %vm310, %v893, 0
    %896 = vmatpush.msra.mxu0 0.0
    %897 = vmatpush.msra.mxu0 0.0
    %898 = vmatpush.msra.mxu0 0.0
    %899 = vmatpush.msra.mxu0 0.0
    %900 = vmatpush.msra.mxu0 0.0
    %901 = vmatpush.msra.mxu0 0.0
    %902 = vmatpush.msra.mxu0 0.0
    %903 = vmatpush.msra.mxu0 0.0
    %904 = vmatpush.msra.mxu0 0.0
    %905 = vmatpush.msra.mxu0 0.0
    %906 = vmatpush.msra.mxu0 0.0
    %907 = vmatpush.msra.mxu0 0.0
    %908 = vmatpush.msra.mxu0 %v493
    %909 = vmatpush.msra.mxu0 %v492
    %910 = vmatpush.msra.mxu0 %v491
    %911 = vmatpush.msra.mxu0 %v490
    %912 = vmatmul.f32.gmra.mxu0 %v894
    %v913 = vpop.f32.mrf.mxu0
    %v914 = vadd.f32 0.0, %v913
    %915 = vdwg.mxu0
    %v916 = vadd.f32 %v825, %v914
    %v917 = vxor.u32 %v916, 2147483648
    %v918 = vmul.f32 %v917, 1.442695
    %v919 = vpow.pop %v918
    %v920 = vadd.f32 %v919, 1.0
    %v921 = vrcp.pop %v920
    %v922 = vmul.f32 %v920, %v921
    %v923 = vsub.f32 1.0, %v922
    %v924 = vmul.f32 %v921, %v923
    %v925 = vadd.f32 %v921, %v924
    %vm926 = vweird.f32 %v920
    %vm927 = vweird.f32 %v921
    %vm928 = vmor %vm926, %vm927
    %v929 = vsel %vm928, %v921, %v925
    %v930 = vand.u32 2147483647, %v920
    %vm931 = vcmp.eq.f32.partialorder %v930, 8.507059e+37
    %v932 = vand.u32 %v920, 2147483648
    %v933 = vor.u32 1.1754944e-38, %v932
    %v934 = vsel %vm931, %v933, %v929
    %v935 = vmul.f32 1.0, %v934
    %v936 = vadd.f32 %v914, %v538
    %938 = vrot.lane.b32.xlu0 %v936, 64
    %v939 = vpop.permute.xlu0 %938
    %v941 = vmul.f32 %v935, %v939
    %943 = vrot.lane.b32.xlu0 %v941, 64
    %v944 = vpop.permute.xlu0 %943
    %v946 = vadd.f32 %v825, %v944
    %v947 = vtanh.pop %v946
    %v948 = vsub.f32 1.0, %v935
    %950 = vrot.lane.b32.xlu0 %v947, 96
    %v951 = vpop.permute.xlu0 %950
    %v953 = vmul.f32 %v948, %v951
    %v954 = vmul.f32 %v935, %v823
    %v955 = vadd.f32 %v953, %v954
    %v956 = vld [vmem:[#allocation2 + $0x8] sm:$0x3]
    %v957 = vld [vmem:[#allocation3 + $0x6] sm:$0x3]
    %959 = vrot.lane.b32.xlu0 %v890, 96
    %v960 = vpop.permute.xlu0 %959
    %v961 = vsel %vm310, %v960, 0
    %963 = vmatpush.msra.mxu0 0.0
    %964 = vmatpush.msra.mxu0 0.0
    %965 = vmatpush.msra.mxu0 0.0
    %966 = vmatpush.msra.mxu0 0.0
    %967 = vmatpush.msra.mxu0 0.0
    %968 = vmatpush.msra.mxu0 0.0
    %969 = vmatpush.msra.mxu0 0.0
    %970 = vmatpush.msra.mxu0 0.0
    %971 = vmatpush.msra.mxu0 0.0
    %972 = vmatpush.msra.mxu0 0.0
    %973 = vmatpush.msra.mxu0 0.0
    %974 = vmatpush.msra.mxu0 0.0
    %975 = vmatpush.msra.mxu0 %v420
    %976 = vmatpush.msra.mxu0 %v419
    %977 = vmatpush.msra.mxu0 %v418
    %978 = vmatpush.msra.mxu0 %v417
    %979 = vmatmul.f32.gmra.mxu0 %v961
    %v980 = vpop.f32.mrf.mxu0
    %v981 = vadd.f32 0.0, %v980
    %982 = vdwg.mxu0
    %v983 = vadd.f32 %v956, %v981
    %v984 = vxor.u32 %v983, 2147483648
    %v985 = vmul.f32 %v984, 1.442695
    %v986 = vpow.pop %v985
    %v987 = vadd.f32 %v986, 1.0
    %v988 = vrcp.pop %v987
    %v989 = vmul.f32 %v987, %v988
    %v990 = vsub.f32 1.0, %v989
    %v991 = vmul.f32 %v988, %v990
    %v992 = vadd.f32 %v988, %v991
    %vm993 = vweird.f32 %v987
    %vm994 = vweird.f32 %v988
    %vm995 = vmor %vm993, %vm994
    %v996 = vsel %vm995, %v988, %v992
    %v997 = vand.u32 2147483647, %v987
    %vm998 = vcmp.eq.f32.partialorder %v997, 8.507059e+37
    %v999 = vand.u32 %v987, 2147483648
    %v1000 = vor.u32 1.1754944e-38, %v999
    %v1001 = vsel %vm998, %v1000, %v996
    %v1002 = vmul.f32 1.0, %v1001
    %v1003 = vadd.f32 %v981, %v468
    %1005 = vrot.lane.b32.xlu0 %v1003, 64
    %v1006 = vpop.permute.xlu0 %1005
    %v1008 = vmul.f32 %v1002, %v1006
    %1010 = vrot.lane.b32.xlu0 %v1008, 64
    %v1011 = vpop.permute.xlu0 %1010
    %v1013 = vadd.f32 %v956, %v1011
    %v1014 = vtanh.pop %v1013
    %v1015 = vsub.f32 1.0, %v1002
    %1017 = vrot.lane.b32.xlu0 %v1014, 96
    %v1018 = vpop.permute.xlu0 %1017
    %v1020 = vmul.f32 %v1015, %v1018
    %v1021 = vmul.f32 %v1002, %v890
    %v1022 = vadd.f32 %v1020, %v1021
    %1024 = vrot.lane.b32.xlu0 %v955, 96
    %v1025 = vpop.permute.xlu0 %1024
    %v1026 = vsel %vm310, %v1025, 0
    %1028 = vmatpush.msra.mxu0 0.0
    %1029 = vmatpush.msra.mxu0 0.0
    %1030 = vmatpush.msra.mxu0 0.0
    %1031 = vmatpush.msra.mxu0 0.0
    %1032 = vmatpush.msra.mxu0 0.0
    %1033 = vmatpush.msra.mxu0 0.0
    %1034 = vmatpush.msra.mxu0 0.0
    %1035 = vmatpush.msra.mxu0 0.0
    %1036 = vmatpush.msra.mxu0 0.0
    %1037 = vmatpush.msra.mxu0 0.0
    %1038 = vmatpush.msra.mxu0 0.0
    %1039 = vmatpush.msra.mxu0 0.0
    %1040 = vmatpush.msra.mxu0 %v493
    %1041 = vmatpush.msra.mxu0 %v492
    %1042 = vmatpush.msra.mxu0 %v491
    %1043 = vmatpush.msra.mxu0 %v490
    %1044 = vmatmul.f32.gmra.mxu0 %v1026
    %v1045 = vpop.f32.mrf.mxu0
    %v1046 = vadd.f32 0.0, %v1045
    %1047 = vdwg.mxu0
    %v1048 = vadd.f32 %v957, %v1046
    %v1049 = vxor.u32 %v1048, 2147483648
    %v1050 = vmul.f32 %v1049, 1.442695
    %v1051 = vpow.pop %v1050
    %v1052 = vadd.f32 %v1051, 1.0
    %v1053 = vrcp.pop %v1052
    %v1054 = vmul.f32 %v1052, %v1053
    %v1055 = vsub.f32 1.0, %v1054
    %v1056 = vmul.f32 %v1053, %v1055
    %v1057 = vadd.f32 %v1053, %v1056
    %vm1058 = vweird.f32 %v1052
    %vm1059 = vweird.f32 %v1053
    %vm1060 = vmor %vm1058, %vm1059
    %v1061 = vsel %vm1060, %v1053, %v1057
    %v1062 = vand.u32 2147483647, %v1052
    %vm1063 = vcmp.eq.f32.partialorder %v1062, 8.507059e+37
    %v1064 = vand.u32 %v1052, 2147483648
    %v1065 = vor.u32 1.1754944e-38, %v1064
    %v1066 = vsel %vm1063, %v1065, %v1061
    %v1067 = vmul.f32 1.0, %v1066
    %v1068 = vadd.f32 %v1046, %v538
    %1070 = vrot.lane.b32.xlu0 %v1068, 64
    %v1071 = vpop.permute.xlu0 %1070
    %v1073 = vmul.f32 %v1067, %v1071
    %1075 = vrot.lane.b32.xlu0 %v1073, 64
    %v1076 = vpop.permute.xlu0 %1075
    %v1078 = vadd.f32 %v957, %v1076
    %v1079 = vtanh.pop %v1078
    %v1080 = vsub.f32 1.0, %v1067
    %1082 = vrot.lane.b32.xlu0 %v1079, 96
    %v1083 = vpop.permute.xlu0 %1082
    %v1085 = vmul.f32 %v1080, %v1083
    %v1086 = vmul.f32 %v1067, %v955
    %v1087 = vadd.f32 %v1085, %v1086
    %v1088 = vld [vmem:[#allocation2 + $0xa] sm:$0x3]
    %v1089 = vld [vmem:[#allocation3 + $0x4] sm:$0x3]
    %1091 = vrot.lane.b32.xlu0 %v1022, 96
    %v1092 = vpop.permute.xlu0 %1091
    %v1093 = vsel %vm310, %v1092, 0
    %1095 = vmatpush.msra.mxu0 0.0
    %1096 = vmatpush.msra.mxu0 0.0
    %1097 = vmatpush.msra.mxu0 0.0
    %1098 = vmatpush.msra.mxu0 0.0
    %1099 = vmatpush.msra.mxu0 0.0
    %1100 = vmatpush.msra.mxu0 0.0
    %1101 = vmatpush.msra.mxu0 0.0
    %1102 = vmatpush.msra.mxu0 0.0
    %1103 = vmatpush.msra.mxu0 0.0
    %1104 = vmatpush.msra.mxu0 0.0
    %1105 = vmatpush.msra.mxu0 0.0
    %1106 = vmatpush.msra.mxu0 0.0
    %1107 = vmatpush.msra.mxu0 %v420
    %1108 = vmatpush.msra.mxu0 %v419
    %1109 = vmatpush.msra.mxu0 %v418
    %1110 = vmatpush.msra.mxu0 %v417
    %1111 = vmatmul.f32.gmra.mxu0 %v1093
    %v1112 = vpop.f32.mrf.mxu0
    %v1113 = vadd.f32 0.0, %v1112
    %1114 = vdwg.mxu0
    %v1115 = vadd.f32 %v1088, %v1113
    %v1116 = vxor.u32 %v1115, 2147483648
    %v1117 = vmul.f32 %v1116, 1.442695
    %v1118 = vpow.pop %v1117
    %v1119 = vadd.f32 %v1118, 1.0
    %v1120 = vrcp.pop %v1119
    %v1121 = vmul.f32 %v1119, %v1120
    %v1122 = vsub.f32 1.0, %v1121
    %v1123 = vmul.f32 %v1120, %v1122
    %v1124 = vadd.f32 %v1120, %v1123
    %vm1125 = vweird.f32 %v1119
    %vm1126 = vweird.f32 %v1120
    %vm1127 = vmor %vm1125, %vm1126
    %v1128 = vsel %vm1127, %v1120, %v1124
    %v1129 = vand.u32 2147483647, %v1119
    %vm1130 = vcmp.eq.f32.partialorder %v1129, 8.507059e+37
    %v1131 = vand.u32 %v1119, 2147483648
    %v1132 = vor.u32 1.1754944e-38, %v1131
    %v1133 = vsel %vm1130, %v1132, %v1128
    %v1134 = vmul.f32 1.0, %v1133
    %v1135 = vadd.f32 %v1113, %v468
    %1137 = vrot.lane.b32.xlu0 %v1135, 64
    %v1138 = vpop.permute.xlu0 %1137
    %v1140 = vmul.f32 %v1134, %v1138
    %1142 = vrot.lane.b32.xlu0 %v1140, 64
    %v1143 = vpop.permute.xlu0 %1142
    %v1145 = vadd.f32 %v1088, %v1143
    %v1146 = vtanh.pop %v1145
    %v1147 = vsub.f32 1.0, %v1134
    %1149 = vrot.lane.b32.xlu0 %v1146, 96
    %v1150 = vpop.permute.xlu0 %1149
    %v1152 = vmul.f32 %v1147, %v1150
    %v1153 = vmul.f32 %v1134, %v1022
    %v1154 = vadd.f32 %v1152, %v1153
    %1156 = vrot.lane.b32.xlu0 %v1087, 96
    %v1157 = vpop.permute.xlu0 %1156
    %v1158 = vsel %vm310, %v1157, 0
    %1160 = vmatpush.msra.mxu0 0.0
    %1161 = vmatpush.msra.mxu0 0.0
    %1162 = vmatpush.msra.mxu0 0.0
    %1163 = vmatpush.msra.mxu0 0.0
    %1164 = vmatpush.msra.mxu0 0.0
    %1165 = vmatpush.msra.mxu0 0.0
    %1166 = vmatpush.msra.mxu0 0.0
    %1167 = vmatpush.msra.mxu0 0.0
    %1168 = vmatpush.msra.mxu0 0.0
    %1169 = vmatpush.msra.mxu0 0.0
    %1170 = vmatpush.msra.mxu0 0.0
    %1171 = vmatpush.msra.mxu0 0.0
    %1172 = vmatpush.msra.mxu0 %v493
    %1173 = vmatpush.msra.mxu0 %v492
    %1174 = vmatpush.msra.mxu0 %v491
    %1175 = vmatpush.msra.mxu0 %v490
    %1176 = vmatmul.f32.gmra.mxu0 %v1158
    %v1177 = vpop.f32.mrf.mxu0
    %v1178 = vadd.f32 0.0, %v1177
    %1179 = vdwg.mxu0
    %v1180 = vadd.f32 %v1089, %v1178
    %v1181 = vxor.u32 %v1180, 2147483648
    %v1182 = vmul.f32 %v1181, 1.442695
    %v1183 = vpow.pop %v1182
    %v1184 = vadd.f32 %v1183, 1.0
    %v1185 = vrcp.pop %v1184
    %v1186 = vmul.f32 %v1184, %v1185
    %v1187 = vsub.f32 1.0, %v1186
    %v1188 = vmul.f32 %v1185, %v1187
    %v1189 = vadd.f32 %v1185, %v1188
    %vm1190 = vweird.f32 %v1184
    %vm1191 = vweird.f32 %v1185
    %vm1192 = vmor %vm1190, %vm1191
    %v1193 = vsel %vm1192, %v1185, %v1189
    %v1194 = vand.u32 2147483647, %v1184
    %vm1195 = vcmp.eq.f32.partialorder %v1194, 8.507059e+37
    %v1196 = vand.u32 %v1184, 2147483648
    %v1197 = vor.u32 1.1754944e-38, %v1196
    %v1198 = vsel %vm1195, %v1197, %v1193
    %v1199 = vmul.f32 1.0, %v1198
    %v1200 = vadd.f32 %v1178, %v538
    %1202 = vrot.lane.b32.xlu0 %v1200, 64
    %v1203 = vpop.permute.xlu0 %1202
    %v1205 = vmul.f32 %v1199, %v1203
    %1207 = vrot.lane.b32.xlu0 %v1205, 64
    %v1208 = vpop.permute.xlu0 %1207
    %v1210 = vadd.f32 %v1089, %v1208
    %v1211 = vtanh.pop %v1210
    %v1212 = vsub.f32 1.0, %v1199
    %1214 = vrot.lane.b32.xlu0 %v1211, 96
    %v1215 = vpop.permute.xlu0 %1214
    %v1217 = vmul.f32 %v1212, %v1215
    %v1218 = vmul.f32 %v1199, %v1087
    %v1219 = vadd.f32 %v1217, %v1218
    %v1220 = vld [vmem:[#allocation2 + $0xc] sm:$0x3]
    %v1221 = vld [vmem:[#allocation3 + $0x2] sm:$0x3]
    %1223 = vrot.lane.b32.xlu0 %v1154, 96
    %v1224 = vpop.permute.xlu0 %1223
    %v1225 = vsel %vm310, %v1224, 0
    %1227 = vmatpush.msra.mxu0 0.0
    %1228 = vmatpush.msra.mxu0 0.0
    %1229 = vmatpush.msra.mxu0 0.0
    %1230 = vmatpush.msra.mxu0 0.0
    %1231 = vmatpush.msra.mxu0 0.0
    %1232 = vmatpush.msra.mxu0 0.0
    %1233 = vmatpush.msra.mxu0 0.0
    %1234 = vmatpush.msra.mxu0 0.0
    %1235 = vmatpush.msra.mxu0 0.0
    %1236 = vmatpush.msra.mxu0 0.0
    %1237 = vmatpush.msra.mxu0 0.0
    %1238 = vmatpush.msra.mxu0 0.0
    %1239 = vmatpush.msra.mxu0 %v420
    %1240 = vmatpush.msra.mxu0 %v419
    %1241 = vmatpush.msra.mxu0 %v418
    %1242 = vmatpush.msra.mxu0 %v417
    %1243 = vmatmul.f32.gmra.mxu0 %v1225
    %v1244 = vpop.f32.mrf.mxu0
    %v1245 = vadd.f32 0.0, %v1244
    %1246 = vdwg.mxu0
    %v1247 = vadd.f32 %v1220, %v1245
    %v1248 = vxor.u32 %v1247, 2147483648
    %v1249 = vmul.f32 %v1248, 1.442695
    %v1250 = vpow.pop %v1249
    %v1251 = vadd.f32 %v1250, 1.0
    %v1252 = vrcp.pop %v1251
    %v1253 = vmul.f32 %v1251, %v1252
    %v1254 = vsub.f32 1.0, %v1253
    %v1255 = vmul.f32 %v1252, %v1254
    %v1256 = vadd.f32 %v1252, %v1255
    %vm1257 = vweird.f32 %v1251
    %vm1258 = vweird.f32 %v1252
    %vm1259 = vmor %vm1257, %vm1258
    %v1260 = vsel %vm1259, %v1252, %v1256
    %v1261 = vand.u32 2147483647, %v1251
    %vm1262 = vcmp.eq.f32.partialorder %v1261, 8.507059e+37
    %v1263 = vand.u32 %v1251, 2147483648
    %v1264 = vor.u32 1.1754944e-38, %v1263
    %v1265 = vsel %vm1262, %v1264, %v1260
    %v1266 = vmul.f32 1.0, %v1265
    %v1267 = vadd.f32 %v1245, %v468
    %1269 = vrot.lane.b32.xlu0 %v1267, 64
    %v1270 = vpop.permute.xlu0 %1269
    %v1272 = vmul.f32 %v1266, %v1270
    %1274 = vrot.lane.b32.xlu0 %v1272, 64
    %v1275 = vpop.permute.xlu0 %1274
    %v1277 = vadd.f32 %v1220, %v1275
    %v1278 = vtanh.pop %v1277
    %v1279 = vsub.f32 1.0, %v1266
    %1281 = vrot.lane.b32.xlu0 %v1278, 96
    %v1282 = vpop.permute.xlu0 %1281
    %v1284 = vmul.f32 %v1279, %v1282
    %v1285 = vmul.f32 %v1266, %v1154
    %v1286 = vadd.f32 %v1284, %v1285
    %1288 = vrot.lane.b32.xlu0 %v1219, 96
    %v1289 = vpop.permute.xlu0 %1288
    %v1290 = vsel %vm310, %v1289, 0
    %1292 = vmatpush.msra.mxu0 0.0
    %1293 = vmatpush.msra.mxu0 0.0
    %1294 = vmatpush.msra.mxu0 0.0
    %1295 = vmatpush.msra.mxu0 0.0
    %1296 = vmatpush.msra.mxu0 0.0
    %1297 = vmatpush.msra.mxu0 0.0
    %1298 = vmatpush.msra.mxu0 0.0
    %1299 = vmatpush.msra.mxu0 0.0
    %1300 = vmatpush.msra.mxu0 0.0
    %1301 = vmatpush.msra.mxu0 0.0
    %1302 = vmatpush.msra.mxu0 0.0
    %1303 = vmatpush.msra.mxu0 0.0
    %1304 = vmatpush.msra.mxu0 %v493
    %1305 = vmatpush.msra.mxu0 %v492
    %1306 = vmatpush.msra.mxu0 %v491
    %1307 = vmatpush.msra.mxu0 %v490
    %1308 = vmatmul.f32.gmra.mxu0 %v1290
    %v1309 = vpop.f32.mrf.mxu0
    %v1310 = vadd.f32 0.0, %v1309
    %1311 = vdwg.mxu0
    %v1312 = vadd.f32 %v1221, %v1310
    %v1313 = vxor.u32 %v1312, 2147483648
    %v1314 = vmul.f32 %v1313, 1.442695
    %v1315 = vpow.pop %v1314
    %v1316 = vadd.f32 %v1315, 1.0
    %v1317 = vrcp.pop %v1316
    %v1318 = vmul.f32 %v1316, %v1317
    %v1319 = vsub.f32 1.0, %v1318
    %v1320 = vmul.f32 %v1317, %v1319
    %v1321 = vadd.f32 %v1317, %v1320
    %vm1322 = vweird.f32 %v1316
    %vm1323 = vweird.f32 %v1317
    %vm1324 = vmor %vm1322, %vm1323
    %v1325 = vsel %vm1324, %v1317, %v1321
    %v1326 = vand.u32 2147483647, %v1316
    %vm1327 = vcmp.eq.f32.partialorder %v1326, 8.507059e+37
    %v1328 = vand.u32 %v1316, 2147483648
    %v1329 = vor.u32 1.1754944e-38, %v1328
    %v1330 = vsel %vm1327, %v1329, %v1325
    %v1331 = vmul.f32 1.0, %v1330
    %v1332 = vadd.f32 %v1310, %v538
    %1334 = vrot.lane.b32.xlu0 %v1332, 64
    %v1335 = vpop.permute.xlu0 %1334
    %v1337 = vmul.f32 %v1331, %v1335
    %1339 = vrot.lane.b32.xlu0 %v1337, 64
    %v1340 = vpop.permute.xlu0 %1339
    %v1342 = vadd.f32 %v1221, %v1340
    %v1343 = vtanh.pop %v1342
    %v1344 = vsub.f32 1.0, %v1331
    %1346 = vrot.lane.b32.xlu0 %v1343, 96
    %v1347 = vpop.permute.xlu0 %1346
    %v1349 = vmul.f32 %v1344, %v1347
    %v1350 = vmul.f32 %v1331, %v1219
    %v1351 = vadd.f32 %v1349, %v1350
    %v1352 = vld [vmem:[#allocation2 + $0xe] sm:$0x3]
    %v1353 = vld [vmem:[#allocation3] sm:$0x3]
    %1355 = vrot.lane.b32.xlu0 %v1286, 96
    %v1356 = vpop.permute.xlu0 %1355
    %v1357 = vsel %vm310, %v1356, 0
    %1359 = vmatpush.msra.mxu0 0.0
    %1360 = vmatpush.msra.mxu0 0.0
    %1361 = vmatpush.msra.mxu0 0.0
    %1362 = vmatpush.msra.mxu0 0.0
    %1363 = vmatpush.msra.mxu0 0.0
    %1364 = vmatpush.msra.mxu0 0.0
    %1365 = vmatpush.msra.mxu0 0.0
    %1366 = vmatpush.msra.mxu0 0.0
    %1367 = vmatpush.msra.mxu0 0.0
    %1368 = vmatpush.msra.mxu0 0.0
    %1369 = vmatpush.msra.mxu0 0.0
    %1370 = vmatpush.msra.mxu0 0.0
    %1371 = vmatpush.msra.mxu0 %v420
    %1372 = vmatpush.msra.mxu0 %v419
    %1373 = vmatpush.msra.mxu0 %v418
    %1374 = vmatpush.msra.mxu0 %v417
    %1375 = vmatmul.f32.gmra.mxu0 %v1357
    %v1376 = vpop.f32.mrf.mxu0
    %v1377 = vadd.f32 0.0, %v1376
    %1378 = vdwg.mxu0
    %v1379 = vadd.f32 %v1352, %v1377
    %v1380 = vxor.u32 %v1379, 2147483648
    %v1381 = vmul.f32 %v1380, 1.442695
    %v1382 = vpow.pop %v1381
    %v1383 = vadd.f32 %v1382, 1.0
    %v1384 = vrcp.pop %v1383
    %v1385 = vmul.f32 %v1383, %v1384
    %v1386 = vsub.f32 1.0, %v1385
    %v1387 = vmul.f32 %v1384, %v1386
    %v1388 = vadd.f32 %v1384, %v1387
    %vm1389 = vweird.f32 %v1383
    %vm1390 = vweird.f32 %v1384
    %vm1391 = vmor %vm1389, %vm1390
    %v1392 = vsel %vm1391, %v1384, %v1388
    %v1393 = vand.u32 2147483647, %v1383
    %vm1394 = vcmp.eq.f32.partialorder %v1393, 8.507059e+37
    %v1395 = vand.u32 %v1383, 2147483648
    %v1396 = vor.u32 1.1754944e-38, %v1395
    %v1397 = vsel %vm1394, %v1396, %v1392
    %v1398 = vmul.f32 1.0, %v1397
    %v1399 = vadd.f32 %v1377, %v468
    %1401 = vrot.lane.b32.xlu0 %v1399, 64
    %v1402 = vpop.permute.xlu0 %1401
    %v1404 = vmul.f32 %v1398, %v1402
    %1406 = vrot.lane.b32.xlu0 %v1404, 64
    %v1407 = vpop.permute.xlu0 %1406
    %v1409 = vadd.f32 %v1352, %v1407
    %v1410 = vtanh.pop %v1409
    %v1411 = vsub.f32 1.0, %v1398
    %1413 = vrot.lane.b32.xlu0 %v1410, 96
    %v1414 = vpop.permute.xlu0 %1413
    %v1416 = vmul.f32 %v1411, %v1414
    %v1417 = vmul.f32 %v1398, %v1286
    %v1418 = vadd.f32 %v1416, %v1417
    %1420 = vrot.lane.b32.xlu0 %v1351, 96
    %v1421 = vpop.permute.xlu0 %1420
    %v1422 = vsel %vm310, %v1421, 0
    %1424 = vmatpush.msra.mxu0 0.0
    %1425 = vmatpush.msra.mxu0 0.0
    %1426 = vmatpush.msra.mxu0 0.0
    %1427 = vmatpush.msra.mxu0 0.0
    %1428 = vmatpush.msra.mxu0 0.0
    %1429 = vmatpush.msra.mxu0 0.0
    %1430 = vmatpush.msra.mxu0 0.0
    %1431 = vmatpush.msra.mxu0 0.0
    %1432 = vmatpush.msra.mxu0 0.0
    %1433 = vmatpush.msra.mxu0 0.0
    %1434 = vmatpush.msra.mxu0 0.0
    %1435 = vmatpush.msra.mxu0 0.0
    %1436 = vmatpush.msra.mxu0 %v493
    %1437 = vmatpush.msra.mxu0 %v492
    %1438 = vmatpush.msra.mxu0 %v491
    %1439 = vmatpush.msra.mxu0 %v490
    %1440 = vmatmul.f32.gmra.mxu0 %v1422
    %v1441 = vpop.f32.mrf.mxu0
    %v1442 = vadd.f32 0.0, %v1441
    %1443 = vdwg.mxu0
    %v1444 = vadd.f32 %v1353, %v1442
    %v1445 = vxor.u32 %v1444, 2147483648
    %v1446 = vmul.f32 %v1445, 1.442695
    %v1447 = vpow.pop %v1446
    %v1448 = vadd.f32 %v1447, 1.0
    %v1449 = vrcp.pop %v1448
    %v1450 = vmul.f32 %v1448, %v1449
    %v1451 = vsub.f32 1.0, %v1450
    %v1452 = vmul.f32 %v1449, %v1451
    %v1453 = vadd.f32 %v1449, %v1452
    %vm1454 = vweird.f32 %v1448
    %vm1455 = vweird.f32 %v1449
    %vm1456 = vmor %vm1454, %vm1455
    %v1457 = vsel %vm1456, %v1449, %v1453
    %v1458 = vand.u32 2147483647, %v1448
    %vm1459 = vcmp.eq.f32.partialorder %v1458, 8.507059e+37
    %v1460 = vand.u32 %v1448, 2147483648
    %v1461 = vor.u32 1.1754944e-38, %v1460
    %v1462 = vsel %vm1459, %v1461, %v1457
    %v1463 = vmul.f32 1.0, %v1462
    %v1464 = vadd.f32 %v1442, %v538
    %1466 = vrot.lane.b32.xlu0 %v1464, 64
    %v1467 = vpop.permute.xlu0 %1466
    %v1469 = vmul.f32 %v1463, %v1467
    %1471 = vrot.lane.b32.xlu0 %v1469, 64
    %v1472 = vpop.permute.xlu0 %1471
    %v1474 = vadd.f32 %v1353, %v1472
    %v1475 = vtanh.pop %v1474
    %v1476 = vsub.f32 1.0, %v1463
    %1478 = vrot.lane.b32.xlu0 %v1475, 96
    %v1479 = vpop.permute.xlu0 %1478
    %v1481 = vmul.f32 %v1476, %v1479
    %v1482 = vmul.f32 %v1463, %v1351
    %v1483 = vadd.f32 %v1481, %v1482
    %v1484 = vld [vmem:[#allocation15] sm:$0xff]
    %v1485 = vld [vmem:[#allocation15 + $0x8] sm:$0xff]
    %v1486 = vld [vmem:[#allocation15 + $0x10] sm:$0xff]
    %v1487 = vld [vmem:[#allocation15 + $0x18] sm:$0xff]
    %v1488 = vld [vmem:[#allocation17] sm:$0xff]
    %v1489 = vld [vmem:[#allocation17 + $0x8] sm:$0xff]
    %v1490 = vld [vmem:[#allocation17 + $0x10] sm:$0xff]
    %v1491 = vld [vmem:[#allocation17 + $0x18] sm:$0xff]
    %1493 = vrot.lane.b32.xlu0 %v1483, 96
    %v1494 = vpop.permute.xlu0 %1493
    %v1495 = vsel %vm310, %v1494, 0
    %1497 = vmatpush.msra.mxu0 0.0
    %1498 = vmatpush.msra.mxu0 0.0
    %1499 = vmatpush.msra.mxu0 0.0
    %1500 = vmatpush.msra.mxu0 0.0
    %1501 = vmatpush.msra.mxu0 0.0
    %1502 = vmatpush.msra.mxu0 0.0
    %1503 = vmatpush.msra.mxu0 0.0
    %1504 = vmatpush.msra.mxu0 0.0
    %1505 = vmatpush.msra.mxu0 0.0
    %1506 = vmatpush.msra.mxu0 0.0
    %1507 = vmatpush.msra.mxu0 0.0
    %1508 = vmatpush.msra.mxu0 0.0
    %1509 = vmatpush.msra.mxu0 %v1491
    %1510 = vmatpush.msra.mxu0 %v1490
    %1511 = vmatpush.msra.mxu0 %v1489
    %1512 = vmatpush.msra.mxu0 %v1488
    %1513 = vmatmul.f32.gmra.mxu0 %v1495
    %v1514 = vpop.f32.mrf.mxu0
    %v1515 = vadd.f32 0.0, %v1514
    %1516 = vdwg.mxu0
    %1518 = vrot.lane.b32.xlu0 %v1418, 96
    %v1519 = vpop.permute.xlu0 %1518
    %v1520 = vsel %vm310, %v1519, 0
    %1522 = vmatpush.msra.mxu0 0.0
    %1523 = vmatpush.msra.mxu0 0.0
    %1524 = vmatpush.msra.mxu0 0.0
    %1525 = vmatpush.msra.mxu0 0.0
    %1526 = vmatpush.msra.mxu0 0.0
    %1527 = vmatpush.msra.mxu0 0.0
    %1528 = vmatpush.msra.mxu0 0.0
    %1529 = vmatpush.msra.mxu0 0.0
    %1530 = vmatpush.msra.mxu0 0.0
    %1531 = vmatpush.msra.mxu0 0.0
    %1532 = vmatpush.msra.mxu0 0.0
    %1533 = vmatpush.msra.mxu0 0.0
    %1534 = vmatpush.msra.mxu0 %v1487
    %1535 = vmatpush.msra.mxu0 %v1486
    %1536 = vmatpush.msra.mxu0 %v1485
    %1537 = vmatpush.msra.mxu0 %v1484
    %1538 = vmatmul.f32.gmra.mxu0 %v1520
    %v1539 = vpop.f32.mrf.mxu0
    %v1540 = vadd.f32 %v1515, %v1539
    %1541 = vdwg.mxu0
    %v1542 = vld [vmem:[%s13] sm:$0x1]
    %v1544 = vperm.slane %v1542, 0
    %v1546 = vadd.f32 %v1540, %v1544
    %v1547 = vld [vmem:[#allocation4] sm:$0x3]
    %v1548 = vld [vmem:[#allocation20] sm:$0xff]
    %v1549 = vld [vmem:[#allocation20 + $0x8] sm:$0xff]
    %v1550 = vld [vmem:[#allocation20 + $0x10] sm:$0xff]
    %v1551 = vld [vmem:[#allocation20 + $0x18] sm:$0xff]
    %v1553 = vsel %vm310, %v1546, 0
    %1555 = vmatpush.msra.mxu0 0.0
    %1556 = vmatpush.msra.mxu0 0.0
    %1557 = vmatpush.msra.mxu0 0.0
    %1558 = vmatpush.msra.mxu0 0.0
    %1559 = vmatpush.msra.mxu0 0.0
    %1560 = vmatpush.msra.mxu0 0.0
    %1561 = vmatpush.msra.mxu0 0.0
    %1562 = vmatpush.msra.mxu0 0.0
    %1563 = vmatpush.msra.mxu0 0.0
    %1564 = vmatpush.msra.mxu0 0.0
    %1565 = vmatpush.msra.mxu0 0.0
    %1566 = vmatpush.msra.mxu0 0.0
    %1567 = vmatpush.msra.mxu0 %v1551
    %1568 = vmatpush.msra.mxu0 %v1550
    %1569 = vmatpush.msra.mxu0 %v1549
    %1570 = vmatpush.msra.mxu0 %v1548
    %1571 = vmatmul.f32.gmra.mxu0 %v1553
    %v1572 = vpop.f32.mrf.mxu0
    %v1573 = vadd.f32 0.0, %v1572
    %1574 = vdwg.mxu0
    %v1575 = vadd.f32 %v1547, %v1573
    %v1576 = vxor.u32 %v1575, 2147483648
    %v1577 = vmul.f32 %v1576, 1.442695
    %v1578 = vpow.pop %v1577
    %v1579 = vadd.f32 %v1578, 1.0
    %v1580 = vrcp.pop %v1579
    %v1581 = vmul.f32 %v1579, %v1580
    %v1582 = vsub.f32 1.0, %v1581
    %v1583 = vmul.f32 %v1580, %v1582
    %v1584 = vadd.f32 %v1580, %v1583
    %vm1585 = vweird.f32 %v1579
    %vm1586 = vweird.f32 %v1580
    %vm1587 = vmor %vm1585, %vm1586
    %v1588 = vsel %vm1587, %v1580, %v1584
    %v1589 = vand.u32 2147483647, %v1579
    %vm1590 = vcmp.eq.f32.partialorder %v1589, 8.507059e+37
    %v1591 = vand.u32 %v1579, 2147483648
    %v1592 = vor.u32 1.1754944e-38, %v1591
    %v1593 = vsel %vm1590, %v1592, %v1588
    %v1594 = vmul.f32 1.0, %v1593
    %v1595 = vld [vmem:[#allocation23] sm:$0x1]
    %v1597 = vperm.slane %v1595, 0
    %1598 = vrot.lane.b32.xlu0 %v1597, 64
    %v1599 = vpop.permute.xlu0 %1598
    %v1601 = vadd.f32 %v1573, %v1599
    %1603 = vrot.lane.b32.xlu0 %v1601, 64
    %v1604 = vpop.permute.xlu0 %1603
    %v1606 = vmul.f32 %v1594, %v1604
    %1608 = vrot.lane.b32.xlu0 %v1606, 64
    %v1609 = vpop.permute.xlu0 %1608
    %v1611 = vadd.f32 %v1547, %v1609
    %v1612 = vtanh.pop %v1611
    %v1613 = vsub.f32 1.0, %v1594
    %1615 = vrot.lane.b32.xlu0 %v1612, 96
    %v1616 = vpop.permute.xlu0 %1615
    %v1618 = vmul.f32 %v1613, %v1616
    %1619 = vrot.lane.b32.xlu0 %v1546, 32
    %v1620 = vpop.permute.xlu0 %1619
    %v1622 = vmul.f32 %v1594, %v1620
    %v1623 = vadd.f32 %v1618, %v1622
    %1625 = vrot.lane.b32.xlu0 %v1623, 96
    %v1626 = vpop.permute.xlu0 %1625
    %vm1628 = vcmask 254976
    %1629 = vst.msk [vmem:[#allocation5] sm:$0x3] %vm1628, %v1626
    %v1630 = vld [vmem:[#allocation4 + $0x2] sm:$0x3]
    %v1631 = vld [vmem:[#allocation20] sm:$0xff]
    %v1632 = vld [vmem:[#allocation20 + $0x8] sm:$0xff]
    %v1633 = vld [vmem:[#allocation20 + $0x10] sm:$0xff]
    %v1634 = vld [vmem:[#allocation20 + $0x18] sm:$0xff]
    %v1635 = vsel %vm310, %v1626, 0
    %1637 = vmatpush.msra.mxu0 0.0
    %1638 = vmatpush.msra.mxu0 0.0
    %1639 = vmatpush.msra.mxu0 0.0
    %1640 = vmatpush.msra.mxu0 0.0
    %1641 = vmatpush.msra.mxu0 0.0
    %1642 = vmatpush.msra.mxu0 0.0
    %1643 = vmatpush.msra.mxu0 0.0
    %1644 = vmatpush.msra.mxu0 0.0
    %1645 = vmatpush.msra.mxu0 0.0
    %1646 = vmatpush.msra.mxu0 0.0
    %1647 = vmatpush.msra.mxu0 0.0
    %1648 = vmatpush.msra.mxu0 0.0
    %1649 = vmatpush.msra.mxu0 %v1634
    %1650 = vmatpush.msra.mxu0 %v1633
    %1651 = vmatpush.msra.mxu0 %v1632
    %1652 = vmatpush.msra.mxu0 %v1631
    %1653 = vmatmul.f32.gmra.mxu0 %v1635
    %v1654 = vpop.f32.mrf.mxu0
    %v1655 = vadd.f32 0.0, %v1654
    %1656 = vdwg.mxu0
    %v1657 = vadd.f32 %v1630, %v1655
    %v1658 = vxor.u32 %v1657, 2147483648
    %v1659 = vmul.f32 %v1658, 1.442695
    %v1660 = vpow.pop %v1659
    %v1661 = vadd.f32 %v1660, 1.0
    %v1662 = vrcp.pop %v1661
    %v1663 = vmul.f32 %v1661, %v1662
    %v1664 = vsub.f32 1.0, %v1663
    %v1665 = vmul.f32 %v1662, %v1664
    %v1666 = vadd.f32 %v1662, %v1665
    %vm1667 = vweird.f32 %v1661
    %vm1668 = vweird.f32 %v1662
    %vm1669 = vmor %vm1667, %vm1668
    %v1670 = vsel %vm1669, %v1662, %v1666
    %v1671 = vand.u32 2147483647, %v1661
    %vm1672 = vcmp.eq.f32.partialorder %v1671, 8.507059e+37
    %v1673 = vand.u32 %v1661, 2147483648
    %v1674 = vor.u32 1.1754944e-38, %v1673
    %v1675 = vsel %vm1672, %v1674, %v1670
    %v1676 = vmul.f32 1.0, %v1675
    %v1677 = vld [vmem:[#allocation23] sm:$0x1]
    %v1679 = vperm.slane %v1677, 0
    %1680 = vrot.lane.b32.xlu0 %v1679, 64
    %v1681 = vpop.permute.xlu0 %1680
    %v1683 = vadd.f32 %v1655, %v1681
    %1685 = vrot.lane.b32.xlu0 %v1683, 64
    %v1686 = vpop.permute.xlu0 %1685
    %v1688 = vmul.f32 %v1676, %v1686
    %1690 = vrot.lane.b32.xlu0 %v1688, 64
    %v1691 = vpop.permute.xlu0 %1690
    %v1693 = vadd.f32 %v1630, %v1691
    %v1694 = vtanh.pop %v1693
    %v1695 = vsub.f32 1.0, %v1676
    %1697 = vrot.lane.b32.xlu0 %v1694, 96
    %v1698 = vpop.permute.xlu0 %1697
    %v1700 = vmul.f32 %v1695, %v1698
    %v1701 = vmul.f32 %v1676, %v1623
    %v1702 = vadd.f32 %v1700, %v1701
    %1704 = vrot.lane.b32.xlu0 %v1702, 96
    %v1705 = vpop.permute.xlu0 %1704
    %1707 = vst.msk [vmem:[#allocation5 + $0x2] sm:$0x3] %vm1628, %v1705
    %v1708 = vld [vmem:[#allocation4 + $0x4] sm:$0x3]
    %v1709 = vld [vmem:[#allocation20] sm:$0xff]
    %v1710 = vld [vmem:[#allocation20 + $0x8] sm:$0xff]
    %v1711 = vld [vmem:[#allocation20 + $0x10] sm:$0xff]
    %v1712 = vld [vmem:[#allocation20 + $0x18] sm:$0xff]
    %v1713 = vsel %vm310, %v1705, 0
    %1715 = vmatpush.msra.mxu0 0.0
    %1716 = vmatpush.msra.mxu0 0.0
    %1717 = vmatpush.msra.mxu0 0.0
    %1718 = vmatpush.msra.mxu0 0.0
    %1719 = vmatpush.msra.mxu0 0.0
    %1720 = vmatpush.msra.mxu0 0.0
    %1721 = vmatpush.msra.mxu0 0.0
    %1722 = vmatpush.msra.mxu0 0.0
    %1723 = vmatpush.msra.mxu0 0.0
    %1724 = vmatpush.msra.mxu0 0.0
    %1725 = vmatpush.msra.mxu0 0.0
    %1726 = vmatpush.msra.mxu0 0.0
    %1727 = vmatpush.msra.mxu0 %v1712
    %1728 = vmatpush.msra.mxu0 %v1711
    %1729 = vmatpush.msra.mxu0 %v1710
    %1730 = vmatpush.msra.mxu0 %v1709
    %1731 = vmatmul.f32.gmra.mxu0 %v1713
    %v1732 = vpop.f32.mrf.mxu0
    %v1733 = vadd.f32 0.0, %v1732
    %1734 = vdwg.mxu0
    %v1735 = vadd.f32 %v1708, %v1733
    %v1736 = vxor.u32 %v1735, 2147483648
    %v1737 = vmul.f32 %v1736, 1.442695
    %v1738 = vpow.pop %v1737
    %v1739 = vadd.f32 %v1738, 1.0
    %v1740 = vrcp.pop %v1739
    %v1741 = vmul.f32 %v1739, %v1740
    %v1742 = vsub.f32 1.0, %v1741
    %v1743 = vmul.f32 %v1740, %v1742
    %v1744 = vadd.f32 %v1740, %v1743
    %vm1745 = vweird.f32 %v1739
    %vm1746 = vweird.f32 %v1740
    %vm1747 = vmor %vm1745, %vm1746
    %v1748 = vsel %vm1747, %v1740, %v1744
    %v1749 = vand.u32 2147483647, %v1739
    %vm1750 = vcmp.eq.f32.partialorder %v1749, 8.507059e+37
    %v1751 = vand.u32 %v1739, 2147483648
    %v1752 = vor.u32 1.1754944e-38, %v1751
    %v1753 = vsel %vm1750, %v1752, %v1748
    %v1754 = vmul.f32 1.0, %v1753
    %v1755 = vld [vmem:[#allocation23] sm:$0x1]
    %v1757 = vperm.slane %v1755, 0
    %1758 = vrot.lane.b32.xlu0 %v1757, 64
    %v1759 = vpop.permute.xlu0 %1758
    %v1761 = vadd.f32 %v1733, %v1759
    %1763 = vrot.lane.b32.xlu0 %v1761, 64
    %v1764 = vpop.permute.xlu0 %1763
    %v1766 = vmul.f32 %v1754, %v1764
    %1768 = vrot.lane.b32.xlu0 %v1766, 64
    %v1769 = vpop.permute.xlu0 %1768
    %v1771 = vadd.f32 %v1708, %v1769
    %v1772 = vtanh.pop %v1771
    %v1773 = vsub.f32 1.0, %v1754
    %1775 = vrot.lane.b32.xlu0 %v1772, 96
    %v1776 = vpop.permute.xlu0 %1775
    %v1778 = vmul.f32 %v1773, %v1776
    %v1779 = vmul.f32 %v1754, %v1702
    %v1780 = vadd.f32 %v1778, %v1779
    %1782 = vrot.lane.b32.xlu0 %v1780, 96
    %v1783 = vpop.permute.xlu0 %1782
    %1785 = vst.msk [vmem:[#allocation5 + $0x4] sm:$0x3] %vm1628, %v1783
    %v1786 = vld [vmem:[#allocation4 + $0x6] sm:$0x3]
    %v1787 = vld [vmem:[#allocation20] sm:$0xff]
    %v1788 = vld [vmem:[#allocation20 + $0x8] sm:$0xff]
    %v1789 = vld [vmem:[#allocation20 + $0x10] sm:$0xff]
    %v1790 = vld [vmem:[#allocation20 + $0x18] sm:$0xff]
    %v1791 = vsel %vm310, %v1783, 0
    %1793 = vmatpush.msra.mxu0 0.0
    %1794 = vmatpush.msra.mxu0 0.0
    %1795 = vmatpush.msra.mxu0 0.0
    %1796 = vmatpush.msra.mxu0 0.0
    %1797 = vmatpush.msra.mxu0 0.0
    %1798 = vmatpush.msra.mxu0 0.0
    %1799 = vmatpush.msra.mxu0 0.0
    %1800 = vmatpush.msra.mxu0 0.0
    %1801 = vmatpush.msra.mxu0 0.0
    %1802 = vmatpush.msra.mxu0 0.0
    %1803 = vmatpush.msra.mxu0 0.0
    %1804 = vmatpush.msra.mxu0 0.0
    %1805 = vmatpush.msra.mxu0 %v1790
    %1806 = vmatpush.msra.mxu0 %v1789
    %1807 = vmatpush.msra.mxu0 %v1788
    %1808 = vmatpush.msra.mxu0 %v1787
    %1809 = vmatmul.f32.gmra.mxu0 %v1791
    %v1810 = vpop.f32.mrf.mxu0
    %v1811 = vadd.f32 0.0, %v1810
    %1812 = vdwg.mxu0
    %v1813 = vadd.f32 %v1786, %v1811
    %v1814 = vxor.u32 %v1813, 2147483648
    %v1815 = vmul.f32 %v1814, 1.442695
    %v1816 = vpow.pop %v1815
    %v1817 = vadd.f32 %v1816, 1.0
    %v1818 = vrcp.pop %v1817
    %v1819 = vmul.f32 %v1817, %v1818
    %v1820 = vsub.f32 1.0, %v1819
    %v1821 = vmul.f32 %v1818, %v1820
    %v1822 = vadd.f32 %v1818, %v1821
    %vm1823 = vweird.f32 %v1817
    %vm1824 = vweird.f32 %v1818
    %vm1825 = vmor %vm1823, %vm1824
    %v1826 = vsel %vm1825, %v1818, %v1822
    %v1827 = vand.u32 2147483647, %v1817
    %vm1828 = vcmp.eq.f32.partialorder %v1827, 8.507059e+37
    %v1829 = vand.u32 %v1817, 2147483648
    %v1830 = vor.u32 1.1754944e-38, %v1829
    %v1831 = vsel %vm1828, %v1830, %v1826
    %v1832 = vmul.f32 1.0, %v1831
    %v1833 = vld [vmem:[#allocation23] sm:$0x1]
    %v1835 = vperm.slane %v1833, 0
    %1836 = vrot.lane.b32.xlu0 %v1835, 64
    %v1837 = vpop.permute.xlu0 %1836
    %v1839 = vadd.f32 %v1811, %v1837
    %1841 = vrot.lane.b32.xlu0 %v1839, 64
    %v1842 = vpop.permute.xlu0 %1841
    %v1844 = vmul.f32 %v1832, %v1842
    %1846 = vrot.lane.b32.xlu0 %v1844, 64
    %v1847 = vpop.permute.xlu0 %1846
    %v1849 = vadd.f32 %v1786, %v1847
    %v1850 = vtanh.pop %v1849
    %v1851 = vsub.f32 1.0, %v1832
    %1853 = vrot.lane.b32.xlu0 %v1850, 96
    %v1854 = vpop.permute.xlu0 %1853
    %v1856 = vmul.f32 %v1851, %v1854
    %v1857 = vmul.f32 %v1832, %v1780
    %v1858 = vadd.f32 %v1856, %v1857
    %1860 = vrot.lane.b32.xlu0 %v1858, 96
    %v1861 = vpop.permute.xlu0 %1860
    %1863 = vst.msk [vmem:[#allocation5 + $0x6] sm:$0x3] %vm1628, %v1861
    %v1864 = vld [vmem:[#allocation4 + $0x8] sm:$0x3]
    %v1865 = vld [vmem:[#allocation20] sm:$0xff]
    %v1866 = vld [vmem:[#allocation20 + $0x8] sm:$0xff]
    %v1867 = vld [vmem:[#allocation20 + $0x10] sm:$0xff]
    %v1868 = vld [vmem:[#allocation20 + $0x18] sm:$0xff]
    %v1869 = vsel %vm310, %v1861, 0
    %1871 = vmatpush.msra.mxu0 0.0
    %1872 = vmatpush.msra.mxu0 0.0
    %1873 = vmatpush.msra.mxu0 0.0
    %1874 = vmatpush.msra.mxu0 0.0
    %1875 = vmatpush.msra.mxu0 0.0
    %1876 = vmatpush.msra.mxu0 0.0
    %1877 = vmatpush.msra.mxu0 0.0
    %1878 = vmatpush.msra.mxu0 0.0
    %1879 = vmatpush.msra.mxu0 0.0
    %1880 = vmatpush.msra.mxu0 0.0
    %1881 = vmatpush.msra.mxu0 0.0
    %1882 = vmatpush.msra.mxu0 0.0
    %1883 = vmatpush.msra.mxu0 %v1868
    %1884 = vmatpush.msra.mxu0 %v1867
    %1885 = vmatpush.msra.mxu0 %v1866
    %1886 = vmatpush.msra.mxu0 %v1865
    %1887 = vmatmul.f32.gmra.mxu0 %v1869
    %v1888 = vpop.f32.mrf.mxu0
    %v1889 = vadd.f32 0.0, %v1888
    %1890 = vdwg.mxu0
    %v1891 = vadd.f32 %v1864, %v1889
    %v1892 = vxor.u32 %v1891, 2147483648
    %v1893 = vmul.f32 %v1892, 1.442695
    %v1894 = vpow.pop %v1893
    %v1895 = vadd.f32 %v1894, 1.0
    %v1896 = vrcp.pop %v1895
    %v1897 = vmul.f32 %v1895, %v1896
    %v1898 = vsub.f32 1.0, %v1897
    %v1899 = vmul.f32 %v1896, %v1898
    %v1900 = vadd.f32 %v1896, %v1899
    %vm1901 = vweird.f32 %v1895
    %vm1902 = vweird.f32 %v1896
    %vm1903 = vmor %vm1901, %vm1902
    %v1904 = vsel %vm1903, %v1896, %v1900
    %v1905 = vand.u32 2147483647, %v1895
    %vm1906 = vcmp.eq.f32.partialorder %v1905, 8.507059e+37
    %v1907 = vand.u32 %v1895, 2147483648
    %v1908 = vor.u32 1.1754944e-38, %v1907
    %v1909 = vsel %vm1906, %v1908, %v1904
    %v1910 = vmul.f32 1.0, %v1909
    %v1911 = vld [vmem:[#allocation23] sm:$0x1]
    %v1913 = vperm.slane %v1911, 0
    %1914 = vrot.lane.b32.xlu0 %v1913, 64
    %v1915 = vpop.permute.xlu0 %1914
    %v1917 = vadd.f32 %v1889, %v1915
    %1919 = vrot.lane.b32.xlu0 %v1917, 64
    %v1920 = vpop.permute.xlu0 %1919
    %v1922 = vmul.f32 %v1910, %v1920
    %1924 = vrot.lane.b32.xlu0 %v1922, 64
    %v1925 = vpop.permute.xlu0 %1924
    %v1927 = vadd.f32 %v1864, %v1925
    %v1928 = vtanh.pop %v1927
    %v1929 = vsub.f32 1.0, %v1910
    %1931 = vrot.lane.b32.xlu0 %v1928, 96
    %v1932 = vpop.permute.xlu0 %1931
    %v1934 = vmul.f32 %v1929, %v1932
    %v1935 = vmul.f32 %v1910, %v1858
    %v1936 = vadd.f32 %v1934, %v1935
    %1938 = vrot.lane.b32.xlu0 %v1936, 96
    %v1939 = vpop.permute.xlu0 %1938
    %1941 = vst.msk [vmem:[#allocation5 + $0x8] sm:$0x3] %vm1628, %v1939
    %v1942 = vld [vmem:[#allocation4 + $0xa] sm:$0x3]
    %v1943 = vld [vmem:[#allocation20] sm:$0xff]
    %v1944 = vld [vmem:[#allocation20 + $0x8] sm:$0xff]
    %v1945 = vld [vmem:[#allocation20 + $0x10] sm:$0xff]
    %v1946 = vld [vmem:[#allocation20 + $0x18] sm:$0xff]
    %v1947 = vsel %vm310, %v1939, 0
    %1949 = vmatpush.msra.mxu0 0.0
    %1950 = vmatpush.msra.mxu0 0.0
    %1951 = vmatpush.msra.mxu0 0.0
    %1952 = vmatpush.msra.mxu0 0.0
    %1953 = vmatpush.msra.mxu0 0.0
    %1954 = vmatpush.msra.mxu0 0.0
    %1955 = vmatpush.msra.mxu0 0.0
    %1956 = vmatpush.msra.mxu0 0.0
    %1957 = vmatpush.msra.mxu0 0.0
    %1958 = vmatpush.msra.mxu0 0.0
    %1959 = vmatpush.msra.mxu0 0.0
    %1960 = vmatpush.msra.mxu0 0.0
    %1961 = vmatpush.msra.mxu0 %v1946
    %1962 = vmatpush.msra.mxu0 %v1945
    %1963 = vmatpush.msra.mxu0 %v1944
    %1964 = vmatpush.msra.mxu0 %v1943
    %1965 = vmatmul.f32.gmra.mxu0 %v1947
    %v1966 = vpop.f32.mrf.mxu0
    %v1967 = vadd.f32 0.0, %v1966
    %1968 = vdwg.mxu0
    %v1969 = vadd.f32 %v1942, %v1967
    %v1970 = vxor.u32 %v1969, 2147483648
    %v1971 = vmul.f32 %v1970, 1.442695
    %v1972 = vpow.pop %v1971
    %v1973 = vadd.f32 %v1972, 1.0
    %v1974 = vrcp.pop %v1973
    %v1975 = vmul.f32 %v1973, %v1974
    %v1976 = vsub.f32 1.0, %v1975
    %v1977 = vmul.f32 %v1974, %v1976
    %v1978 = vadd.f32 %v1974, %v1977
    %vm1979 = vweird.f32 %v1973
    %vm1980 = vweird.f32 %v1974
    %vm1981 = vmor %vm1979, %vm1980
    %v1982 = vsel %vm1981, %v1974, %v1978
    %v1983 = vand.u32 2147483647, %v1973
    %vm1984 = vcmp.eq.f32.partialorder %v1983, 8.507059e+37
    %v1985 = vand.u32 %v1973, 2147483648
    %v1986 = vor.u32 1.1754944e-38, %v1985
    %v1987 = vsel %vm1984, %v1986, %v1982
    %v1988 = vmul.f32 1.0, %v1987
    %v1989 = vld [vmem:[#allocation23] sm:$0x1]
    %v1991 = vperm.slane %v1989, 0
    %1992 = vrot.lane.b32.xlu0 %v1991, 64
    %v1993 = vpop.permute.xlu0 %1992
    %v1995 = vadd.f32 %v1967, %v1993
    %1997 = vrot.lane.b32.xlu0 %v1995, 64
    %v1998 = vpop.permute.xlu0 %1997
    %v2000 = vmul.f32 %v1988, %v1998
    %2002 = vrot.lane.b32.xlu0 %v2000, 64
    %v2003 = vpop.permute.xlu0 %2002
    %v2005 = vadd.f32 %v1942, %v2003
    %v2006 = vtanh.pop %v2005
    %v2007 = vsub.f32 1.0, %v1988
    %2009 = vrot.lane.b32.xlu0 %v2006, 96
    %v2010 = vpop.permute.xlu0 %2009
    %v2012 = vmul.f32 %v2007, %v2010
    %v2013 = vmul.f32 %v1988, %v1936
    %v2014 = vadd.f32 %v2012, %v2013
    %2016 = vrot.lane.b32.xlu0 %v2014, 96
    %v2017 = vpop.permute.xlu0 %2016
    %2019 = vst.msk [vmem:[#allocation5 + $0xa] sm:$0x3] %vm1628, %v2017
    %v2020 = vld [vmem:[#allocation4 + $0xc] sm:$0x3]
    %v2021 = vld [vmem:[#allocation20] sm:$0xff]
    %v2022 = vld [vmem:[#allocation20 + $0x8] sm:$0xff]
    %v2023 = vld [vmem:[#allocation20 + $0x10] sm:$0xff]
    %v2024 = vld [vmem:[#allocation20 + $0x18] sm:$0xff]
    %v2025 = vsel %vm310, %v2017, 0
    %2027 = vmatpush.msra.mxu0 0.0
    %2028 = vmatpush.msra.mxu0 0.0
    %2029 = vmatpush.msra.mxu0 0.0
    %2030 = vmatpush.msra.mxu0 0.0
    %2031 = vmatpush.msra.mxu0 0.0
    %2032 = vmatpush.msra.mxu0 0.0
    %2033 = vmatpush.msra.mxu0 0.0
    %2034 = vmatpush.msra.mxu0 0.0
    %2035 = vmatpush.msra.mxu0 0.0
    %2036 = vmatpush.msra.mxu0 0.0
    %2037 = vmatpush.msra.mxu0 0.0
    %2038 = vmatpush.msra.mxu0 0.0
    %2039 = vmatpush.msra.mxu0 %v2024
    %2040 = vmatpush.msra.mxu0 %v2023
    %2041 = vmatpush.msra.mxu0 %v2022
    %2042 = vmatpush.msra.mxu0 %v2021
    %2043 = vmatmul.f32.gmra.mxu0 %v2025
    %v2044 = vpop.f32.mrf.mxu0
    %v2045 = vadd.f32 0.0, %v2044
    %2046 = vdwg.mxu0
    %v2047 = vadd.f32 %v2020, %v2045
    %v2048 = vxor.u32 %v2047, 2147483648
    %v2049 = vmul.f32 %v2048, 1.442695
    %v2050 = vpow.pop %v2049
    %v2051 = vadd.f32 %v2050, 1.0
    %v2052 = vrcp.pop %v2051
    %v2053 = vmul.f32 %v2051, %v2052
    %v2054 = vsub.f32 1.0, %v2053
    %v2055 = vmul.f32 %v2052, %v2054
    %v2056 = vadd.f32 %v2052, %v2055
    %vm2057 = vweird.f32 %v2051
    %vm2058 = vweird.f32 %v2052
    %vm2059 = vmor %vm2057, %vm2058
    %v2060 = vsel %vm2059, %v2052, %v2056
    %v2061 = vand.u32 2147483647, %v2051
    %vm2062 = vcmp.eq.f32.partialorder %v2061, 8.507059e+37
    %v2063 = vand.u32 %v2051, 2147483648
    %v2064 = vor.u32 1.1754944e-38, %v2063
    %v2065 = vsel %vm2062, %v2064, %v2060
    %v2066 = vmul.f32 1.0, %v2065
    %v2067 = vld [vmem:[#allocation23] sm:$0x1]
    %v2069 = vperm.slane %v2067, 0
    %2070 = vrot.lane.b32.xlu0 %v2069, 64
    %v2071 = vpop.permute.xlu0 %2070
    %v2073 = vadd.f32 %v2045, %v2071
    %2075 = vrot.lane.b32.xlu0 %v2073, 64
    %v2076 = vpop.permute.xlu0 %2075
    %v2078 = vmul.f32 %v2066, %v2076
    %2080 = vrot.lane.b32.xlu0 %v2078, 64
    %v2081 = vpop.permute.xlu0 %2080
    %v2083 = vadd.f32 %v2020, %v2081
    %v2084 = vtanh.pop %v2083
    %v2085 = vsub.f32 1.0, %v2066
    %2087 = vrot.lane.b32.xlu0 %v2084, 96
    %v2088 = vpop.permute.xlu0 %2087
    %v2090 = vmul.f32 %v2085, %v2088
    %v2091 = vmul.f32 %v2066, %v2014
    %v2092 = vadd.f32 %v2090, %v2091
    %2094 = vrot.lane.b32.xlu0 %v2092, 96
    %v2095 = vpop.permute.xlu0 %2094
    %2097 = vst.msk [vmem:[#allocation5 + $0xc] sm:$0x3] %vm1628, %v2095
    %v2098 = vld [vmem:[#allocation4 + $0xe] sm:$0x3]
    %v2099 = vld [vmem:[#allocation20] sm:$0xff]
    %v2100 = vld [vmem:[#allocation20 + $0x8] sm:$0xff]
    %v2101 = vld [vmem:[#allocation20 + $0x10] sm:$0xff]
    %v2102 = vld [vmem:[#allocation20 + $0x18] sm:$0xff]
    %v2103 = vsel %vm310, %v2095, 0
    %2105 = vmatpush.msra.mxu0 0.0
    %2106 = vmatpush.msra.mxu0 0.0
    %2107 = vmatpush.msra.mxu0 0.0
    %2108 = vmatpush.msra.mxu0 0.0
    %2109 = vmatpush.msra.mxu0 0.0
    %2110 = vmatpush.msra.mxu0 0.0
    %2111 = vmatpush.msra.mxu0 0.0
    %2112 = vmatpush.msra.mxu0 0.0
    %2113 = vmatpush.msra.mxu0 0.0
    %2114 = vmatpush.msra.mxu0 0.0
    %2115 = vmatpush.msra.mxu0 0.0
    %2116 = vmatpush.msra.mxu0 0.0
    %2117 = vmatpush.msra.mxu0 %v2102
    %2118 = vmatpush.msra.mxu0 %v2101
    %2119 = vmatpush.msra.mxu0 %v2100
    %2120 = vmatpush.msra.mxu0 %v2099
    %2121 = vmatmul.f32.gmra.mxu0 %v2103
    %v2122 = vpop.f32.mrf.mxu0
    %v2123 = vadd.f32 0.0, %v2122
    %2124 = vdwg.mxu0
    %v2125 = vadd.f32 %v2098, %v2123
    %v2126 = vxor.u32 %v2125, 2147483648
    %v2127 = vmul.f32 %v2126, 1.442695
    %v2128 = vpow.pop %v2127
    %v2129 = vadd.f32 %v2128, 1.0
    %v2130 = vrcp.pop %v2129
    %v2131 = vmul.f32 %v2129, %v2130
    %v2132 = vsub.f32 1.0, %v2131
    %v2133 = vmul.f32 %v2130, %v2132
    %v2134 = vadd.f32 %v2130, %v2133
    %vm2135 = vweird.f32 %v2129
    %vm2136 = vweird.f32 %v2130
    %vm2137 = vmor %vm2135, %vm2136
    %v2138 = vsel %vm2137, %v2130, %v2134
    %v2139 = vand.u32 2147483647, %v2129
    %vm2140 = vcmp.eq.f32.partialorder %v2139, 8.507059e+37
    %v2141 = vand.u32 %v2129, 2147483648
    %v2142 = vor.u32 1.1754944e-38, %v2141
    %v2143 = vsel %vm2140, %v2142, %v2138
    %v2144 = vmul.f32 1.0, %v2143
    %v2145 = vld [vmem:[#allocation23] sm:$0x1]
    %v2147 = vperm.slane %v2145, 0
    %2148 = vrot.lane.b32.xlu0 %v2147, 64
    %v2149 = vpop.permute.xlu0 %2148
    %v2151 = vadd.f32 %v2123, %v2149
    %2153 = vrot.lane.b32.xlu0 %v2151, 64
    %v2154 = vpop.permute.xlu0 %2153
    %v2156 = vmul.f32 %v2144, %v2154
    %2158 = vrot.lane.b32.xlu0 %v2156, 64
    %v2159 = vpop.permute.xlu0 %2158
    %v2161 = vadd.f32 %v2098, %v2159
    %v2162 = vtanh.pop %v2161
    %v2163 = vsub.f32 1.0, %v2144
    %2165 = vrot.lane.b32.xlu0 %v2162, 96
    %v2166 = vpop.permute.xlu0 %2165
    %v2168 = vmul.f32 %v2163, %v2166
    %v2169 = vmul.f32 %v2144, %v2092
    %v2170 = vadd.f32 %v2168, %v2169
    %2172 = vrot.lane.b32.xlu0 %v2170, 96
    %v2173 = vpop.permute.xlu0 %2172
    %2175 = vst.msk [vmem:[#allocation5 + $0xe] sm:$0x3] %vm1628, %v2173
    %v2176 = vld [vmem:[#allocation5] sm:$0xff]
    %v2177 = vld [vmem:[#allocation5 + $0x8] sm:$0xff]
    %v2178 = vld [vmem:[%s18] sm:$0xff]
    %v2179 = vld [vmem:[%s18 + $0x8] sm:$0xff]
    %v2180 = vld [vmem:[%s18 + $0x10] sm:$0xff]
    %v2181 = vld [vmem:[%s18 + $0x18] sm:$0xff]
    %v2182 = vld [vmem:[%s19] sm:$0x1]
    %v2184 = vperm.slane %v2182, 0
    %v2187 = vsel %vm310, %v2176, 0
    %v2190 = vsel %vm310, %v2177, 0
    %2192 = vmatpush.msra.mxu0 0.0
    %2193 = vmatpush.msra.mxu0 0.0
    %2194 = vmatpush.msra.mxu0 0.0
    %2195 = vmatpush.msra.mxu0 0.0
    %2196 = vmatpush.msra.mxu0 0.0
    %2197 = vmatpush.msra.mxu0 0.0
    %2198 = vmatpush.msra.mxu0 0.0
    %2199 = vmatpush.msra.mxu0 0.0
    %2200 = vmatpush.msra.mxu0 0.0
    %2201 = vmatpush.msra.mxu0 0.0
    %2202 = vmatpush.msra.mxu0 0.0
    %2203 = vmatpush.msra.mxu0 0.0
    %2204 = vmatpush.msra.mxu0 %v2181
    %2205 = vmatpush.msra.mxu0 %v2180
    %2206 = vmatpush.msra.mxu0 %v2179
    %2207 = vmatpush.msra.mxu0 %v2178
    %2208 = vmatmul.f32.gmra.mxu0 %v2187
    %v2209 = vpop.f32.mrf.mxu0
    %v2210 = vadd.f32 %v2184, %v2209
    %2211 = vmatmul.f32.gmra.mxu0 %v2190
    %v2212 = vpop.f32.mrf.mxu0
    %v2213 = vadd.f32 %v2184, %v2212
    %2214 = vdwg.mxu0
    %2215 = vst.msk [vmem:[#allocation24] sm:$0xff] %vm247, %v2210
    %2216 = vst.msk [vmem:[#allocation24 + $0x8] sm:$0xff] %vm247, %v2213
    // Predicated region
    $region126: #{soweli_forward.1} parent=1 // pred_check
      _
    $region127: #{soweli_forward.1} parent=1 // pred_check_branch
      %2218 = sbr.rel (0) target = $region129
    $region128: #{soweli_forward.1} parent=1 // pred_region
      %2220 = vsyncadd [#allocation8], 0
      %s2221 = sshll.u32 [#allocation24], 4
      %s2222 = int_to_ptr.vmem [resolvable:$true] %s2221
      %s2223 = sshll.u32 %s20, 4
      %s2224 = int_to_ptr.hbm [resolvable:$true] %s2223
      %2229 = dma.vmem_to_hbm [thread:$0]  %s2222, 256, %s2224, [#allocation8], 128, 128, 8
    $region129: #{soweli_forward.1} parent=1 // pred_fallthru
      _
    // Predicated region
    $region130: #{soweli_forward.1} parent=1 // pred_check
      _
    $region131: #{soweli_forward.1} parent=1 // pred_check_branch
      %2231 = sbr.rel (0) target = $region133
    $region132: #{soweli_forward.1} parent=1 // pred_region
      %2233 = dma.done [#allocation8], 256
    $region133: #{soweli_forward.1} parent=1 // pred_fallthru
      _
    %2234 = vsyncpa [#allocation7], 1
    %2235 = vsyncpa [#allocation10], 1
    %2236 = vsyncpa [#allocation13], 1
    %2237 = vsyncpa [#allocation16], 1
    %2238 = vsyncpa [#allocation19], 1
    %2239 = vsyncpa [#allocation22], 1
    %2240 = vsyncpa [#allocation8], 1

</llo_original>
